<compile_context>
chip_gen: v7x
topology: tpu7x:2x2x1
jax: 0.10.0
libtpu: 0.0.40
codegen_flags: <defaults>
</compile_context>

<pallas_src>
import functools
import math

import jax
import jax.numpy as jnp
from jax.experimental import pallas as pl
from jax.experimental.pallas import tpu as pltpu


_BN_EPS = 1e-5
# Eval-mode BatchNorm1d with fresh running stats (mean=0, var=1, identity
# affine) collapses to a single scalar scale.
_BN_SCALE = 1.0 / math.sqrt(1.0 + _BN_EPS)


# ---------------------------------------------------------------------------
# Generation-aware hardware queries (all defensive; fall back to safe values).
# ---------------------------------------------------------------------------


@functools.lru_cache(maxsize=None)
def _tpu_info():
    try:
        return pltpu.get_tpu_info()
    except Exception:
        return None


@functools.lru_cache(maxsize=None)
def _vmem_capacity_bytes():
    info = _tpu_info()
    cap = getattr(info, "vmem_capacity_bytes", None) if info is not None else None
    if not isinstance(cap, int) or cap <= 0:
        cap = 64 * 1024 * 1024          # conservative: v7x per-TensorCore VMEM
    return cap


@functools.lru_cache(maxsize=None)
def _num_tensorcores():
    """TensorCores per chip (2 only on v7x).  Decides whether halving the row
    tile so the 'parallel' grid axis has >= 2 steps is worth anything."""
    info = _tpu_info()
    if info is not None:
        for attr in ("num_cores", "core_count", "tensorcores_per_chip",
                     "num_tensor_cores"):
            v = getattr(info, attr, None)
            if isinstance(v, int) and 0 < v <= 16:
                return v
    try:
        if "v7" in jax.devices()[0].device_kind.lower():
            return 2
    except Exception:
        pass
    return 1


def _vmem_budget_bytes():
    # ~1/3 of physical VMEM for the tiled working set:
    # ~21 MiB on v7x (64 MiB/TC), ~42 MiB on v5e/v6e (128 MiB).
    return int(min(max(_vmem_capacity_bytes() // 3, 16 * 1024 * 1024),
                   48 * 1024 * 1024))


# ---------------------------------------------------------------------------
# Tiling helpers
# ---------------------------------------------------------------------------


def _round_up(x, m):
    return ((x + m - 1) // m) * m


def _pick_tile(dim, target, align):
    """Largest tile <= target that divides `dim` and is a multiple of `align`;
    falls back to the full dimension (a full-dim block is always layout-legal)."""
    if dim <= target:
        return dim
    t = (target // align) * align
    while t >= align:
        if dim % t == 0:
            return t
        t -= align
    return dim


def _select_tiles(M, K, N, in_itemsize, tm, tk):
    """Pick (tm, tk) and an optional scoped-VMEM limit for an (M,K)@(K,N)."""
    tm = _pick_tile(M, tm, 8)
    tk = _pick_tile(K, tk, 128)

    # Only split the parallel (row) axis when there are >= 2 TensorCores to
    # shard it over (v7x); on v5e/v6e halving just doubles grid overhead.
    if _num_tensorcores() >= 2 and M // tm < 2:
        tm_half = _pick_tile(M, max(8, tm // 2), 8)
        if tm_half < tm:
            tm = tm_half

    budget = _vmem_budget_bytes()

    def est(tm_, tk_):
        # double-buffered input tiles + (conservatively) 2x the f32 output tile
        return 2 * (tm_ * tk_ + tk_ * N) * in_itemsize + 2 * tm_ * N * 4

    # Shrink order: tk down to 256 (extra K steps cost a full output-tile RMW
    # and tk < 256 under-fills the 256-deep MXU), then tm, then tk < 256 only
    # as a last resort.
    while est(tm, tk) > budget and tk > 256:
        nxt = _pick_tile(K, max(256, tk // 2), 128)
        if nxt >= tk:
            break
        tk = nxt
    while est(tm, tk) > budget and tm > 8:
        nxt = _pick_tile(M, max(8, tm // 2), 8)
        if nxt >= tm:
            break
        tm = nxt
    while est(tm, tk) > budget and tk > 128:
        nxt = _pick_tile(K, max(128, tk // 2), 128)
        if nxt >= tk:
            break
        tk = nxt

    vmem_limit = None
    if est(tm, tk) > 12 * 1024 * 1024:
        # Raise the scoped-VMEM cap explicitly (v5e defaults to only 16 MiB),
        # staying inside ~60% of the chip's physical VMEM (v7x: <= ~38 MiB).
        vmem_limit = int(min(max(2 * est(tm, tk), 32 * 1024 * 1024),
                             int(0.6 * _vmem_capacity_bytes())))
    return tm, tk, vmem_limit


# ---------------------------------------------------------------------------
# Pallas kernel bodies (structurally specialized on the number of K steps).
# ---------------------------------------------------------------------------


def _make_mm_kernel(n_k, has_bias, bn_relu):
    """out = a @ b (+ bias) [optionally *bn_scale, relu], f32 accumulation.

    The per-step MXU result is computed into vregs; on the first K step it is
    stored (with the bias folded in), on later steps it is accumulated.  With
    a single K step (the common case here) there is exactly one store pass
    over the output tile and no zero-init / read-modify-write.
    """

    def kernel(*refs):
        if has_bias:
            a_ref, b_ref, bias_ref, o_ref = refs
        else:
            a_ref, b_ref, o_ref = refs
            bias_ref = None

        acc = jnp.dot(a_ref[...], b_ref[...],
                      preferred_element_type=jnp.float32)

        if n_k == 1:
            val = acc if bias_ref is None else acc + bias_ref[...]
            if bn_relu:
                val = jnp.maximum(val * _BN_SCALE, 0.0)
            o_ref[...] = val
        else:
            k = pl.program_id(1)

            @pl.when(k == 0)
            def _():
                o_ref[...] = acc if bias_ref is None else acc + bias_ref[...]

            @pl.when(k > 0)
            def _():
                o_ref[...] += acc

            if bn_relu:
                @pl.when(k == n_k - 1)
                def _():
                    o_ref[...] = jnp.maximum(o_ref[...] * _BN_SCALE, 0.0)

    return kernel


def _make_gram_kernel(n_k):
    """adjacency_e = exp(-max(||fi||^2 + ||fj||^2 - 2 <fi,fj>, 0) / 9),
    with the Gram matmul on the MXU and the distance/exp epilogue fused
    (exp runs on the EUP slot, essentially free next to the MXU work)."""

    def kernel(a_ref, b_ref, sqr_ref, sqc_ref, o_ref):
        acc = jnp.dot(a_ref[...], b_ref[...],
                      preferred_element_type=jnp.float32)

        def finish(gram):
            d2 = jnp.maximum(sqr_ref[...] + sqc_ref[...] - 2.0 * gram, 0.0)
            return jnp.exp(d2 * (-1.0 / 9.0))

        if n_k == 1:
            o_ref[...] = finish(acc)
        else:
            k = pl.program_id(1)

            @pl.when(k == 0)
            def _():
                o_ref[...] = acc

            @pl.when(k > 0)
            def _():
                o_ref[...] += acc

            @pl.when(k == n_k - 1)
            def _():
                o_ref[...] = finish(o_ref[...])

    return kernel


# ---------------------------------------------------------------------------
# Pallas wrappers
# ---------------------------------------------------------------------------


def pallas_matmul(a, b, bias=None, *, compute_dtype=None, bn_relu=False,
                  tm=512, tk=1024):
    """out = a @ b (+ bias) [optionally relu(bn_eval(.))]; f32 output."""
    M, K = a.shape
    K2, N = b.shape
    assert K == K2, "inner dimensions must match"
    if bias is not None:
        bias = jnp.asarray(bias, jnp.float32).reshape(1, N)

    # Optional low-precision inputs (halves HBM/VMEM traffic, native bf16 MXU
    # rate); accumulation stays f32 inside the kernel.
    if compute_dtype is not None:
        a = a.astype(compute_dtype)
        b = b.astype(compute_dtype)

    tm, tk, vmem_limit = _select_tiles(M, K, N, a.dtype.itemsize, tm, tk)
    assert M % tm == 0 and K % tk == 0
    grid = (M // tm, K // tk)
    n_k = grid[1]

    in_specs = [
        pl.BlockSpec((tm, tk), lambda i, k: (i, k)),   # a tile
        pl.BlockSpec((tk, N), lambda i, k: (k, 0)),    # b slab (full width)
    ]
    args = [a, b]
    if bias is not None:                               # only DMA a bias if real
        in_specs.append(pl.BlockSpec((1, N), lambda i, k: (0, 0)))
        args.append(bias)

    return pl.pallas_call(
        _make_mm_kernel(n_k, bias is not None, bn_relu),
        out_shape=jax.ShapeDtypeStruct((M, N), jnp.float32),
        grid_spec=pltpu.PrefetchScalarGridSpec(
            num_scalar_prefetch=0,
            grid=grid,
            in_specs=in_specs,
            out_specs=pl.BlockSpec((tm, N), lambda i, k: (i, 0)),
        ),
        compiler_params=pltpu.CompilerParams(
            dimension_semantics=("parallel", "arbitrary"),
            vmem_limit_bytes=vmem_limit,
        ),
    )(*args)


def pallas_gram_exp(features, *, tm=512, tk=1024):
    """Fused Gram + pairwise-distance + exp: returns exp(-||fi-fj||^2 / 9).

    Kept in f32 so the downstream top-k neighbour selection matches the f32
    reference (bf16 could flip ties)."""
    n, d = features.shape
    features = features.astype(jnp.float32)
    sq = jnp.sum(features * features, axis=1, dtype=jnp.float32)
    sq_row = sq.reshape(n, 1)
    sq_col = sq.reshape(1, n)
    ft = features.T

    tm, tk, vmem_limit = _select_tiles(n, d, n, 4, tm, tk)
    assert n % tm == 0 and d % tk == 0
    grid = (n // tm, d // tk)
    n_k = grid[1]

    return pl.pallas_call(
        _make_gram_kernel(n_k),
        out_shape=jax.ShapeDtypeStruct((n, n), jnp.float32),
        grid_spec=pltpu.PrefetchScalarGridSpec(
            num_scalar_prefetch=0,
            grid=grid,
            in_specs=[
                pl.BlockSpec((tm, tk), lambda i, k: (i, k)),   # features tile
                pl.BlockSpec((tk, n), lambda i, k: (k, 0)),    # features.T slab
                pl.BlockSpec((tm, 1), lambda i, k: (i, 0)),    # ||fi||^2 (rows)
                pl.BlockSpec((1, n), lambda i, k: (0, 0)),     # ||fj||^2 (cols)
            ],
            out_specs=pl.BlockSpec((tm, n), lambda i, k: (i, 0)),
        ),
        compiler_params=pltpu.CompilerParams(
            dimension_semantics=("parallel", "arbitrary"),
            vmem_limit_bytes=vmem_limit,
        ),
    )(features, ft, sq_row, sq_col)


def pallas_gcn_block(x, w, bias, a, *, compute_dtype=None, tm=256):
    """relu(bn2_eval(a @ (x @ w) + bias)) in ONE pallas_call.

    `support = x @ w` is computed on-chip (no HBM round trip of the ~1 MiB
    intermediate) and the propagation runs over row tiles of `a`.  The hidden
    width is padded to a multiple of 128 so output stores are lane-dense; the
    padded columns (zero weight, zero bias) are sliced off afterwards.
    """
    n, d = x.shape
    d2_, hidden = w.shape
    assert d == d2_
    assert a.shape == (n, n)
    bias = jnp.asarray(bias, jnp.float32).reshape(1, hidden)

    hp = _round_up(hidden, 128)
    if hp != hidden:
        w = jnp.pad(w, ((0, 0), (0, hp - hidden)))
        bias = jnp.pad(bias, ((0, 0), (0, hp - hidden)))

    cd = compute_dtype if compute_dtype is not None else jnp.float32
    xc = x.astype(cd)
    wc = w.astype(cd)
    ac = a.astype(cd)
    cdsize = jnp.dtype(cd).itemsize

    tm = _pick_tile(n, tm, 8)
    if _num_tensorcores() >= 2 and n // tm < 2:
        tm_half = _pick_tile(n, max(8, tm // 2), 8)
        if tm_half < tm:
            tm = tm_half

    est = (2 * n * d * cdsize + 2 * d * hp * cdsize + 2 * tm * n * cdsize
           + 2 * tm * hp * 4 + hp * 4
           + n * hp * (4 + cdsize))          # on-chip support (f32 + cd copy)
    if est > _vmem_budget_bytes():
        # Fall back to two pallas_calls if the fused working set doesn't fit.
        support = pallas_matmul(x, w, compute_dtype=compute_dtype)
        out = pallas_matmul(a, support, bias=bias.reshape(-1),
                            compute_dtype=compute_dtype, bn_relu=True)
        return out[:, :hidden] if hp != hidden else out

    grid = (n // tm,)

    def kernel(x_ref, w_ref, a_ref, bias_ref, o_ref):
        # support is recomputed per row-tile step (cheap) so the grid axis can
        # stay "parallel" (both v7x TensorCores) without cross-step state.
        support = jnp.dot(x_ref[...], w_ref[...],
                          preferred_element_type=jnp.float32).astype(cd)
        acc = jnp.dot(a_ref[...], support,
                      preferred_element_type=jnp.float32)
        o_ref[...] = jnp.maximum((acc + bias_ref[...]) * _BN_SCALE, 0.0)

    out = pl.pallas_call(
        kernel,
        out_shape=jax.ShapeDtypeStruct((n, hp), jnp.float32),
        grid_spec=pltpu.PrefetchScalarGridSpec(
            num_scalar_prefetch=0,
            grid=grid,
            in_specs=[
                pl.BlockSpec((n, d), lambda i: (0, 0)),     # X (full)
                pl.BlockSpec((d, hp), lambda i: (0, 0)),    # W (full, padded)
                pl.BlockSpec((tm, n), lambda i: (i, 0)),    # A row tile
                pl.BlockSpec((1, hp), lambda i: (0, 0)),    # bias (padded)
            ],
            out_specs=pl.BlockSpec((tm, hp), lambda i: (i, 0)),
        ),
        compiler_params=pltpu.CompilerParams(
            dimension_semantics=("parallel",),
        ),
    )(xc, wc, ac, bias)
    return out[:, :hidden] if hp != hidden else out


# ---------------------------------------------------------------------------
# ProtoIGCN forward (inference mode).  The matmul/epilogue backend is
# pluggable so the exact same forward runs with Pallas or plain-jnp math.
# ---------------------------------------------------------------------------


def _adjacency_from_e(adjacency_e, n_way):
    """Top-k neighbour selection, scatter and symmetric degree normalization.

    TODO(synk): per-row top-k + scatter has no clean Pallas equivalent
    (sort/scatter); it stays in plain JAX (XLA).
    """
    n = adjacency_e.shape[0]
    k = int(round(n / n_way))
    _, position = jax.lax.top_k(adjacency_e, k)
    rows = jnp.arange(n)[:, None]
    adjacency0 = jnp.zeros((n, n), jnp.float32).at[rows, position].set(1.0)
    adjacency0 = adjacency0 * (1.0 - jnp.eye(n, dtype=jnp.float32))  # no self-loop
    adjacency = jnp.eye(n, dtype=jnp.float32) + adjacency0 * adjacency_e
    d = jnp.sum(adjacency, axis=1) + 1.0
    inv_sqrt_d = 1.0 / jnp.sqrt(d)
    return adjacency * inv_sqrt_d[:, None] * inv_sqrt_d[None, :]


class PallasOps:
    """Pallas backend.  Propagation matmuls use bf16 inputs / f32 accumulation;
    the Gram matmul feeding top-k stays f32."""

    def __init__(self, prop_dtype=jnp.bfloat16):
        self.prop_dtype = prop_dtype

    def gram_exp(self, f):
        return pallas_gram_exp(f)

    def mm(self, a, b):
        return pallas_matmul(a, b, compute_dtype=self.prop_dtype)

    def ax_bn_relu(self, a, x):                       # relu(bn1(A @ X)), fused
        return pallas_matmul(a, x, compute_dtype=self.prop_dtype, bn_relu=True)

    def gcn_bn_relu(self, x, w, bias, a):             # relu(bn2(A@(XW)+b)), fused
        return pallas_gcn_block(x, w, bias, a, compute_dtype=self.prop_dtype)


class RefOps:
    """Plain-jnp backend mirroring the Pallas rounding (inputs rounded to the
    propagation dtype, accumulation in f32)."""

    def __init__(self, prop_dtype=jnp.bfloat16):
        self.prop_dtype = prop_dtype

    def _mm(self, a, b, cd):
        if cd is not None:
            a = a.astype(cd)
            b = b.astype(cd)
        return jnp.matmul(a.astype(jnp.float32), b.astype(jnp.float32))

    def gram_exp(self, f):
        f = f.astype(jnp.float32)
        sq = jnp.sum(f * f, axis=1)
        g = self._mm(f, f.T, None)
        d2 = jnp.maximum(sq[:, None] + sq[None, :] - 2.0 * g, 0.0)
        return jnp.exp(-d2 / 9.0)

    def mm(self, a, b):
        return self._mm(a, b, self.prop_dtype)

    def ax_bn_relu(self, a, x):
        return jnp.maximum(self._mm(a, x, self.prop_dtype) * _BN_SCALE, 0.0)

    def gcn_bn_relu(self, x, w, bias, a):
        support = self._mm(x, w, self.prop_dtype)
        out = self._mm(a, support, self.prop_dtype) + jnp.asarray(bias, jnp.float32)
        return jnp.maximum(out * _BN_SCALE, 0.0)


def proto_igcn_forward(features, gcn_weight, gcn_bias, *, n_way, ops):
    """Port of ProtoIGCN.forward (inference mode)."""
    # A = MultiAdjacencyCompute(features)
    e = ops.gram_exp(features)
    adj = _adjacency_from_e(e, n_way)
    a = ops.mm(adj, adj)                         # A @ A
    # x = relu(bn1(A @ features))
    x = ops.ax_bn_relu(a, features)
    # A = MultiAdjacencyCompute(x)
    e = ops.gram_exp(x)
    adj = _adjacency_from_e(e, n_way)
    a = ops.mm(adj, adj)
    # x = relu(bn2(gcn(A, x)))
    x = ops.gcn_bn_relu(x, gcn_weight, gcn_bias, a)
    # TODO(synk): BatchNorm1d uses fresh inference statistics (mean=0, var=1,
    # identity affine) and dropout(p=0.6) is the identity in eval mode.
    return x


# ---------------------------------------------------------------------------


if __name__ == "__main__":
    # Small episode: 256 nodes, 128-d input features, 5-way.  The
    # GraphConvolution output width (1000) is hard-coded in the PyTorch module.
    N_NODES = 256
    INPUT_DIM = 128
    HIDDEN = 1000
    N_WAY = 5

    key = jax.random.PRNGKey(0)
    k_feat, k_w, k_a, k_b, k_bias, k_x = jax.random.split(key, 6)

    features = jax.random.normal(k_feat, (N_NODES, INPUT_DIM), dtype=jnp.float32)

    # GraphConvolution parameters: kaiming_uniform-style weight, zero bias
    # (matching reset_parameters()).
    bound = float(jnp.sqrt(6.0 / INPUT_DIM))
    gcn_weight = jax.random.uniform(k_w, (INPUT_DIM, HIDDEN), jnp.float32,
                                    -bound, bound)
    gcn_bias = jnp.zeros((HIDDEN,), dtype=jnp.float32)

    # ---- full ProtoIGCN forward with Pallas kernels -------------------------
    fwd_pallas = jax.jit(functools.partial(
        proto_igcn_forward, n_way=N_WAY, ops=PallasOps(jnp.bfloat16)))
    out = jax.block_until_ready(fwd_pallas(features, gcn_weight, gcn_bias))

    assert out.shape == (N_NODES, HIDDEN)
    assert bool(jnp.all(jnp.isfinite(out)))

    # ---- reference: same forward with plain-jnp math (same roundings) ------
    fwd_ref = jax.jit(functools.partial(
        proto_igcn_forward, n_way=N_WAY, ops=RefOps(jnp.bfloat16)))
    ref = jax.block_until_ready(fwd_ref(features, gcn_weight, gcn_bias))
    # Loose tolerance: differences come only from MXU vs XLA matmul precision
    # paths (and, through them, possible top-k tie flips), not from plumbing.
    assert jnp.allclose(out, ref, atol=5e-2, rtol=5e-2), float(
        jnp.max(jnp.abs(out - ref)))

    # ---- standalone checks of the individual Pallas kernels -----------------
    a_t = jax.random.normal(k_a, (N_NODES, N_NODES), jnp.float32) / N_NODES
    b_t = jax.random.normal(k_b, (N_NODES, HIDDEN), jnp.float32)
    bias_t = jax.random.normal(k_bias, (HIDDEN,), jnp.float32)

    # plain f32 matmul + bias
    got = pallas_matmul(a_t, b_t, bias_t)
    want = jnp.matmul(a_t, b_t) + bias_t
    assert jnp.allclose(got, want, atol=1e-2, rtol=1e-2), float(
        jnp.max(jnp.abs(got - want)))

    # fused bias + eval-BN + ReLU epilogue
    got_f = pallas_matmul(a_t, b_t, bias_t, bn_relu=True)
    want_f = jnp.maximum((jnp.matmul(a_t, b_t) + bias_t) * _BN_SCALE, 0.0)
    assert jnp.allclose(got_f, want_f, atol=1e-2, rtol=1e-2), float(
        jnp.max(jnp.abs(got_f - want_f)))

    # bf16-input path (f32 MXU accumulation) vs a bf16-rounded f32 reference
    got_bf16 = pallas_matmul(a_t, b_t, bias_t, compute_dtype=jnp.bfloat16)
    a_r = a_t.astype(jnp.bfloat16).astype(jnp.float32)
    b_r = b_t.astype(jnp.bfloat16).astype(jnp.float32)
    want_bf16 = jnp.matmul(a_r, b_r) + bias_t
    assert jnp.allclose(got_bf16, want_bf16, atol=2e-2, rtol=2e-2), float(
        jnp.max(jnp.abs(got_bf16 - want_bf16)))

    # fused Gram + exp(-d2/9) kernel (scaled features so values are non-trivial)
    f_t = 0.2 * jax.random.normal(k_x, (N_NODES, INPUT_DIM), jnp.float32)
    got_e = pallas_gram_exp(f_t)
    sq_t = jnp.sum(f_t * f_t, axis=1)
    d2_t = jnp.maximum(sq_t[:, None] + sq_t[None, :] - 2.0 * jnp.matmul(f_t, f_t.T), 0.0)
    want_e = jnp.exp(-d2_t / 9.0)
    assert jnp.allclose(got_e, want_e, atol=2e-2, rtol=2e-2), float(
        jnp.max(jnp.abs(got_e - want_e)))

    # fused GCN block (X@W -> A@(XW)+bias -> bn -> relu) vs the jnp mirror
    x_t = jax.random.normal(k_x, (N_NODES, INPUT_DIM), jnp.float32)
    a_sm = jax.random.uniform(k_a, (N_NODES, N_NODES), jnp.float32) / N_NODES
    got_g = pallas_gcn_block(x_t, gcn_weight, bias_t, a_sm,
                             compute_dtype=jnp.bfloat16)
    want_g = RefOps(jnp.bfloat16).gcn_bn_relu(x_t, gcn_weight, bias_t, a_sm)
    assert got_g.shape == (N_NODES, HIDDEN)
    assert jnp.allclose(got_g, want_g, atol=5e-2, rtol=5e-2), float(
        jnp.max(jnp.abs(got_g - want_g)))

    print("KERNEL_OK")
</pallas_src>

<mosaic_0001>
module attributes {stable_mosaic.version = 11 : i64} {
  func.func @kernel(%arg0: i32, %arg1: i32, %arg2: memref<256x128xf32, #tpu.memory_space<vmem>>, %arg3: memref<128x256xf32, #tpu.memory_space<vmem>>, %arg4: memref<256x1xf32, #tpu.memory_space<vmem>>, %arg5: memref<1x256xf32, #tpu.memory_space<vmem>>, %arg6: memref<256x256xf32, #tpu.memory_space<vmem>>) attributes {dimension_semantics = [#tpu.dimension_semantics<parallel>, #tpu.dimension_semantics<arbitrary>], iteration_bounds = array<i64: 1, 1>, scalar_prefetch = 0 : i64, scratch_operands = 0 : i64, tpu.core_type = #tpu.core_type<tc>, window_params = [{transform_indices = @transform_0, window_bounds = array<i64: 256, 128>}, {transform_indices = @transform_1, window_bounds = array<i64: 128, 256>}, {transform_indices = @transform_2, window_bounds = array<i64: 256, 1>}, {pipeline_mode = #tpu.pipeline_mode<synchronous>, transform_indices = @transform_3, window_bounds = array<i64: 1, 256>}, {transform_indices = @transform_4, window_bounds = array<i64: 256, 256>}]} {
    %c0 = arith.constant 0 : index
    %c0_0 = arith.constant 0 : index
    %0 = vector.load %arg2[%c0, %c0_0] : memref<256x128xf32, #tpu.memory_space<vmem>>, vector<256x128xf32>
    %c0_1 = arith.constant 0 : index
    %c0_2 = arith.constant 0 : index
    %1 = vector.load %arg3[%c0_1, %c0_2] : memref<128x256xf32, #tpu.memory_space<vmem>>, vector<128x256xf32>
    %cst = arith.constant dense<0.000000e+00> : vector<256x256xf32>
    %2 = tpu.matmul %0, %1, %cst {dimension_numbers = #tpu.dot_dimension_numbers<[1], [0], [0], [1], [0, 0, 1, 1], [], []>} : vector<256x128xf32>, vector<128x256xf32>, vector<256x256xf32> -> vector<256x256xf32>
    %c0_3 = arith.constant 0 : index
    %c0_4 = arith.constant 0 : index
    %3 = vector.load %arg4[%c0_3, %c0_4] : memref<256x1xf32, #tpu.memory_space<vmem>>, vector<256x1xf32>
    %c0_5 = arith.constant 0 : index
    %c0_6 = arith.constant 0 : index
    %4 = vector.load %arg5[%c0_5, %c0_6] : memref<1x256xf32, #tpu.memory_space<vmem>>, vector<1x256xf32>
    %5 = vector.broadcast %3 : vector<256x1xf32> to vector<256x256xf32>
    %6 = vector.broadcast %4 : vector<1x256xf32> to vector<256x256xf32>
    %7 = arith.addf %5, %6 : vector<256x256xf32>
    %cst_7 = arith.constant 2.000000e+00 : f32
    %8 = vector.broadcast %cst_7 : f32 to vector<256x256xf32>
    %9 = arith.mulf %8, %2 : vector<256x256xf32>
    %10 = arith.subf %7, %9 : vector<256x256xf32>
    %cst_8 = arith.constant 0.000000e+00 : f32
    %11 = vector.broadcast %cst_8 : f32 to vector<256x256xf32>
    %12 = arith.maximumf %10, %11 : vector<256x256xf32>
    %cst_9 = arith.constant -0.111111112 : f32
    %13 = vector.broadcast %cst_9 : f32 to vector<256x256xf32>
    %14 = arith.mulf %12, %13 : vector<256x256xf32>
    %15 = math.exp %14 : vector<256x256xf32>
    %c0_10 = arith.constant 0 : index
    %c0_11 = arith.constant 0 : index
    %16 = vector.load %arg6[%c0_10, %c0_11] : memref<256x256xf32, #tpu.memory_space<vmem>>, vector<256x256xf32>
    tpu.vector_store %arg6[%c0_10, %c0_11], %15 {strides = array<i32>} : memref<256x256xf32, #tpu.memory_space<vmem>>, vector<256x256xf32>,
    return
  }
  func.func @transform_0(%arg0: i32, %arg1: i32) -> (i32, i32) {
    %c0_i32 = arith.constant 0 : i32
    return %arg0, %arg1 : i32, i32
  }
  func.func @transform_1(%arg0: i32, %arg1: i32) -> (i32, i32) {
    %c0_i32 = arith.constant 0 : i32
    %c0_i32_0 = arith.constant 0 : i32
    return %arg1, %c0_i32 : i32, i32
  }
  func.func @transform_2(%arg0: i32, %arg1: i32) -> (i32, i32) {
    %c0_i32 = arith.constant 0 : i32
    %c0_i32_0 = arith.constant 0 : i32
    return %arg0, %c0_i32 : i32, i32
  }
  func.func @transform_3(%arg0: i32, %arg1: i32) -> (i32, i32) {
    %c0_i32 = arith.constant 0 : i32
    %c0_i32_0 = arith.constant 0 : i32
    %c0_i32_1 = arith.constant 0 : i32
    return %c0_i32, %c0_i32_0 : i32, i32
  }
  func.func @transform_4(%arg0: i32, %arg1: i32) -> (i32, i32) {
    %c0_i32 = arith.constant 0 : i32
    %c0_i32_0 = arith.constant 0 : i32
    return %arg0, %c0_i32 : i32, i32
  }
}

module attributes {stable_mosaic.version = 11 : i64} {
  func.func @kernel(%arg0: i32, %arg1: i32, %arg2: memref<256x256xbf16, #tpu.memory_space<vmem>>, %arg3: memref<256x256xbf16, #tpu.memory_space<vmem>>, %arg4: memref<256x256xf32, #tpu.memory_space<vmem>>) attributes {dimension_semantics = [#tpu.dimension_semantics<parallel>, #tpu.dimension_semantics<arbitrary>], iteration_bounds = array<i64: 1, 1>, scalar_prefetch = 0 : i64, scratch_operands = 0 : i64, tpu.core_type = #tpu.core_type<tc>, window_params = [{transform_indices = @transform_0, window_bounds = array<i64: 256, 256>}, {transform_indices = @transform_1, window_bounds = array<i64: 256, 256>}, {transform_indices = @transform_2, window_bounds = array<i64: 256, 256>}]} {
    %c0 = arith.constant 0 : index
    %c0_0 = arith.constant 0 : index
    %0 = vector.load %arg2[%c0, %c0_0] : memref<256x256xbf16, #tpu.memory_space<vmem>>, vector<256x256xbf16>
    %c0_1 = arith.constant 0 : index
    %c0_2 = arith.constant 0 : index
    %1 = vector.load %arg3[%c0_1, %c0_2] : memref<256x256xbf16, #tpu.memory_space<vmem>>, vector<256x256xbf16>
    %cst = arith.constant dense<0.000000e+00> : vector<256x256xf32>
    %2 = tpu.matmul %0, %1, %cst {dimension_numbers = #tpu.dot_dimension_numbers<[1], [0], [0], [1], [0, 0, 1, 1], [], []>} : vector<256x256xbf16>, vector<256x256xbf16>, vector<256x256xf32> -> vector<256x256xf32>
    %c0_3 = arith.constant 0 : index
    %c0_4 = arith.constant 0 : index
    %3 = vector.load %arg4[%c0_3, %c0_4] : memref<256x256xf32, #tpu.memory_space<vmem>>, vector<256x256xf32>
    tpu.vector_store %arg4[%c0_3, %c0_4], %2 {strides = array<i32>} : memref<256x256xf32, #tpu.memory_space<vmem>>, vector<256x256xf32>,
    return
  }
  func.func @transform_0(%arg0: i32, %arg1: i32) -> (i32, i32) {
    %c0_i32 = arith.constant 0 : i32
    return %arg0, %arg1 : i32, i32
  }
  func.func @transform_1(%arg0: i32, %arg1: i32) -> (i32, i32) {
    %c0_i32 = arith.constant 0 : i32
    %c0_i32_0 = arith.constant 0 : i32
    return %arg1, %c0_i32 : i32, i32
  }
  func.func @transform_2(%arg0: i32, %arg1: i32) -> (i32, i32) {
    %c0_i32 = arith.constant 0 : i32
    %c0_i32_0 = arith.constant 0 : i32
    return %arg0, %c0_i32 : i32, i32
  }
}

module attributes {stable_mosaic.version = 11 : i64} {
  func.func @kernel(%arg0: i32, %arg1: i32, %arg2: memref<256x256xbf16, #tpu.memory_space<vmem>>, %arg3: memref<256x128xbf16, #tpu.memory_space<vmem>>, %arg4: memref<256x128xf32, #tpu.memory_space<vmem>>) attributes {dimension_semantics = [#tpu.dimension_semantics<parallel>, #tpu.dimension_semantics<arbitrary>], iteration_bounds = array<i64: 1, 1>, scalar_prefetch = 0 : i64, scratch_operands = 0 : i64, tpu.core_type = #tpu.core_type<tc>, window_params = [{transform_indices = @transform_0, window_bounds = array<i64: 256, 256>}, {transform_indices = @transform_1, window_bounds = array<i64: 256, 128>}, {transform_indices = @transform_2, window_bounds = array<i64: 256, 128>}]} {
    %c0 = arith.constant 0 : index
    %c0_0 = arith.constant 0 : index
    %0 = vector.load %arg2[%c0, %c0_0] : memref<256x256xbf16, #tpu.memory_space<vmem>>, vector<256x256xbf16>
    %c0_1 = arith.constant 0 : index
    %c0_2 = arith.constant 0 : index
    %1 = vector.load %arg3[%c0_1, %c0_2] : memref<256x128xbf16, #tpu.memory_space<vmem>>, vector<256x128xbf16>
    %cst = arith.constant dense<0.000000e+00> : vector<256x128xf32>
    %2 = tpu.matmul %0, %1, %cst {dimension_numbers = #tpu.dot_dimension_numbers<[1], [0], [0], [1], [0, 0, 1, 1], [], []>} : vector<256x256xbf16>, vector<256x128xbf16>, vector<256x128xf32> -> vector<256x128xf32>
    %cst_3 = arith.constant 0.999994993 : f32
    %3 = vector.broadcast %cst_3 : f32 to vector<256x128xf32>
    %4 = arith.mulf %2, %3 : vector<256x128xf32>
    %cst_4 = arith.constant 0.000000e+00 : f32
    %5 = vector.broadcast %cst_4 : f32 to vector<256x128xf32>
    %6 = arith.maximumf %4, %5 : vector<256x128xf32>
    %c0_5 = arith.constant 0 : index
    %c0_6 = arith.constant 0 : index
    %7 = vector.load %arg4[%c0_5, %c0_6] : memref<256x128xf32, #tpu.memory_space<vmem>>, vector<256x128xf32>
    tpu.vector_store %arg4[%c0_5, %c0_6], %6 {strides = array<i32>} : memref<256x128xf32, #tpu.memory_space<vmem>>, vector<256x128xf32>,
    return
  }
  func.func @transform_0(%arg0: i32, %arg1: i32) -> (i32, i32) {
    %c0_i32 = arith.constant 0 : i32
    return %arg0, %arg1 : i32, i32
  }
  func.func @transform_1(%arg0: i32, %arg1: i32) -> (i32, i32) {
    %c0_i32 = arith.constant 0 : i32
    %c0_i32_0 = arith.constant 0 : i32
    return %arg1, %c0_i32 : i32, i32
  }
  func.func @transform_2(%arg0: i32, %arg1: i32) -> (i32, i32) {
    %c0_i32 = arith.constant 0 : i32
    %c0_i32_0 = arith.constant 0 : i32
    return %arg0, %c0_i32 : i32, i32
  }
}

module attributes {stable_mosaic.version = 11 : i64} {
  func.func @kernel(%arg0: i32, %arg1: memref<256x128xbf16, #tpu.memory_space<vmem>>, %arg2: memref<128x1024xbf16, #tpu.memory_space<vmem>>, %arg3: memref<256x256xbf16, #tpu.memory_space<vmem>>, %arg4: memref<1x1024xf32, #tpu.memory_space<vmem>>, %arg5: memref<256x1024xf32, #tpu.memory_space<vmem>>) attributes {dimension_semantics = [#tpu.dimension_semantics<parallel>], iteration_bounds = array<i64: 1>, scalar_prefetch = 0 : i64, scratch_operands = 0 : i64, tpu.core_type = #tpu.core_type<tc>, window_params = [{pipeline_mode = #tpu.pipeline_mode<synchronous>, transform_indices = @transform_0, window_bounds = array<i64: 256, 128>}, {pipeline_mode = #tpu.pipeline_mode<synchronous>, transform_indices = @transform_1, window_bounds = array<i64: 128, 1024>}, {transform_indices = @transform_2, window_bounds = array<i64: 256, 256>}, {pipeline_mode = #tpu.pipeline_mode<synchronous>, transform_indices = @transform_3, window_bounds = array<i64: 1, 1024>}, {transform_indices = @transform_4, window_bounds = array<i64: 256, 1024>}]} {
    %c0 = arith.constant 0 : index
    %c0_0 = arith.constant 0 : index
    %0 = vector.load %arg1[%c0, %c0_0] : memref<256x128xbf16, #tpu.memory_space<vmem>>, vector<256x128xbf16>
    %c0_1 = arith.constant 0 : index
    %c0_2 = arith.constant 0 : index
    %1 = vector.load %arg2[%c0_1, %c0_2] : memref<128x1024xbf16, #tpu.memory_space<vmem>>, vector<128x1024xbf16>
    %cst = arith.constant dense<0.000000e+00> : vector<256x1024xf32>
    %2 = tpu.matmul %0, %1, %cst {dimension_numbers = #tpu.dot_dimension_numbers<[1], [0], [0], [1], [0, 0, 1, 1], [], []>} : vector<256x128xbf16>, vector<128x1024xbf16>, vector<256x1024xf32> -> vector<256x1024xf32>
    %3 = arith.truncf %2 : vector<256x1024xf32> to vector<256x1024xbf16>
    %c0_3 = arith.constant 0 : index
    %c0_4 = arith.constant 0 : index
    %4 = vector.load %arg3[%c0_3, %c0_4] : memref<256x256xbf16, #tpu.memory_space<vmem>>, vector<256x256xbf16>
    %cst_5 = arith.constant dense<0.000000e+00> : vector<256x1024xf32>
    %5 = tpu.matmul %4, %3, %cst_5 {dimension_numbers = #tpu.dot_dimension_numbers<[1], [0], [0], [1], [0, 0, 1, 1], [], []>} : vector<256x256xbf16>, vector<256x1024xbf16>, vector<256x1024xf32> -> vector<256x1024xf32>
    %c0_6 = arith.constant 0 : index
    %c0_7 = arith.constant 0 : index
    %6 = vector.load %arg4[%c0_6, %c0_7] : memref<1x1024xf32, #tpu.memory_space<vmem>>, vector<1x1024xf32>
    %7 = vector.broadcast %6 : vector<1x1024xf32> to vector<256x1024xf32>
    %8 = arith.addf %5, %7 : vector<256x1024xf32>
    %cst_8 = arith.constant 0.999994993 : f32
    %9 = vector.broadcast %cst_8 : f32 to vector<256x1024xf32>
    %10 = arith.mulf %8, %9 : vector<256x1024xf32>
    %cst_9 = arith.constant 0.000000e+00 : f32
    %11 = vector.broadcast %cst_9 : f32 to vector<256x1024xf32>
    %12 = arith.maximumf %10, %11 : vector<256x1024xf32>
    %c0_10 = arith.constant 0 : index
    %c0_11 = arith.constant 0 : index
    %13 = vector.load %arg5[%c0_10, %c0_11] : memref<256x1024xf32, #tpu.memory_space<vmem>>, vector<256x1024xf32>
    tpu.vector_store %arg5[%c0_10, %c0_11], %12 {strides = array<i32>} : memref<256x1024xf32, #tpu.memory_space<vmem>>, vector<256x1024xf32>,
    return
  }
  func.func @transform_0(%arg0: i32) -> (i32, i32) {
    %c0_i32 = arith.constant 0 : i32
    %c0_i32_0 = arith.constant 0 : i32
    %c0_i32_1 = arith.constant 0 : i32
    return %c0_i32, %c0_i32_0 : i32, i32
  }
  func.func @transform_1(%arg0: i32) -> (i32, i32) {
    %c0_i32 = arith.constant 0 : i32
    %c0_i32_0 = arith.constant 0 : i32
    %c0_i32_1 = arith.constant 0 : i32
    return %c0_i32, %c0_i32_0 : i32, i32
  }
  func.func @transform_2(%arg0: i32) -> (i32, i32) {
    %c0_i32 = arith.constant 0 : i32
    %c0_i32_0 = arith.constant 0 : i32
    return %arg0, %c0_i32 : i32, i32
  }
  func.func @transform_3(%arg0: i32) -> (i32, i32) {
    %c0_i32 = arith.constant 0 : i32
    %c0_i32_0 = arith.constant 0 : i32
    %c0_i32_1 = arith.constant 0 : i32
    return %c0_i32, %c0_i32_0 : i32, i32
  }
  func.func @transform_4(%arg0: i32) -> (i32, i32) {
    %c0_i32 = arith.constant 0 : i32
    %c0_i32_0 = arith.constant 0 : i32
    return %arg0, %c0_i32 : i32, i32
  }
}

</mosaic_0001>

<llo_original>
// kernel: proto_igcn_forward.6
$region0: #{proto_igcn_forward.6}
  #allocation0 [shape = 'u32[]', space=smem, size = 0x4, offset = 0x4, fixed_abs, tag = 'smem constant byte address 0x4 - core index']
  #allocation1 [shape = 'u32[144,128]{1,0:T(1,128)}', space=vmem, size = 0x12000, scoped, tag = 'internal scratch']
  %s0 = inlined_call_operand.vmem [shape: f32[256,128], index: 0, kind: input, shape index: {}]
  %s1 = inlined_call_operand.vmem [shape: f32[128,256], index: 1, kind: input, shape index: {}]
  %s2 = inlined_call_operand.vmem [shape: f32[256,1], index: 2, kind: input, shape index: {}]
  %s3 = inlined_call_operand.vmem [shape: f32[1,256], index: 3, kind: input, shape index: {}]
  %s4 = inlined_call_operand.vmem [shape: f32[256,256], index: 4, kind: output, shape index: {}]
  %s5 = sld [smem:[#allocation0]]
  $region26: #{proto_igcn_forward.6} parent=0
    _
  %s7 = ssub.s32 1, %s5
  %s8 = scalar_select 0, %s7, %s5
  // Predicated region
  $region2: #{proto_igcn_forward.6} parent=0 // pred_check
    _
  $region3: #{proto_igcn_forward.6} parent=0 // pred_check_branch
    %10 = sbr.rel (0) target = $region5
  $region4: #{proto_igcn_forward.6} parent=0 // pred_region
    _
  $region5: #{proto_igcn_forward.6} parent=0 // pred_fallthru
    _
  // Predicated region
  $region6: #{proto_igcn_forward.6} parent=0 // pred_check
    _
  $region7: #{proto_igcn_forward.6} parent=0 // pred_check_branch
    %12 = sbr.rel (0) target = $region9
  $region8: #{proto_igcn_forward.6} parent=0 // pred_region
    _
  $region9: #{proto_igcn_forward.6} parent=0 // pred_fallthru
    _
  // Predicated region
  $region10: #{proto_igcn_forward.6} parent=0 // pred_check
    _
  $region11: #{proto_igcn_forward.6} parent=0 // pred_check_branch
    %14 = sbr.rel (0) target = $region13
  $region12: #{proto_igcn_forward.6} parent=0 // pred_region
    _
  $region13: #{proto_igcn_forward.6} parent=0 // pred_fallthru
    _
  // Predicated region
  $region14: #{proto_igcn_forward.6} parent=0 // pred_check
    _
  $region15: #{proto_igcn_forward.6} parent=0 // pred_check_branch
    %16 = sbr.rel (0) target = $region17
  $region16: #{proto_igcn_forward.6} parent=0 // pred_region
    _
  $region17: #{proto_igcn_forward.6} parent=0 // pred_fallthru
    _
  %v17 = vld [vmem:[%s0] sm:$0xff]
  %v18 = vld [vmem:[%s0 + $0x8] sm:$0xff]
  %v19 = vld [vmem:[%s0 + $0x10] sm:$0xff]
  %v20 = vld [vmem:[%s0 + $0x18] sm:$0xff]
  %v21 = vld [vmem:[%s0 + $0x20] sm:$0xff]
  %v22 = vld [vmem:[%s0 + $0x28] sm:$0xff]
  %v23 = vld [vmem:[%s0 + $0x30] sm:$0xff]
  %v24 = vld [vmem:[%s0 + $0x38] sm:$0xff]
  %v25 = vld [vmem:[%s0 + $0x40] sm:$0xff]
  %v26 = vld [vmem:[%s0 + $0x48] sm:$0xff]
  %v27 = vld [vmem:[%s0 + $0x50] sm:$0xff]
  %v28 = vld [vmem:[%s0 + $0x58] sm:$0xff]
  %v29 = vld [vmem:[%s0 + $0x60] sm:$0xff]
  %v30 = vld [vmem:[%s0 + $0x68] sm:$0xff]
  %v31 = vld [vmem:[%s0 + $0x70] sm:$0xff]
  %v32 = vld [vmem:[%s0 + $0x78] sm:$0xff]
  %v33 = vld [vmem:[%s0 + $0x80] sm:$0xff]
  %v34 = vld [vmem:[%s0 + $0x88] sm:$0xff]
  %v35 = vld [vmem:[%s0 + $0x90] sm:$0xff]
  %v36 = vld [vmem:[%s0 + $0x98] sm:$0xff]
  %v37 = vld [vmem:[%s0 + $0xa0] sm:$0xff]
  %v38 = vld [vmem:[%s0 + $0xa8] sm:$0xff]
  %v39 = vld [vmem:[%s0 + $0xb0] sm:$0xff]
  %v40 = vld [vmem:[%s0 + $0xb8] sm:$0xff]
  %v41 = vld [vmem:[%s0 + $0xc0] sm:$0xff]
  %v42 = vld [vmem:[%s0 + $0xc8] sm:$0xff]
  %v43 = vld [vmem:[%s0 + $0xd0] sm:$0xff]
  %v44 = vld [vmem:[%s0 + $0xd8] sm:$0xff]
  %v45 = vld [vmem:[%s0 + $0xe0] sm:$0xff]
  %v46 = vld [vmem:[%s0 + $0xe8] sm:$0xff]
  %v47 = vld [vmem:[%s0 + $0xf0] sm:$0xff]
  %v48 = vld [vmem:[%s0 + $0xf8] sm:$0xff]
  %v49 = vld [vmem:[%s1] sm:$0xff]
  %v50 = vld [vmem:[%s1 + $0x8] sm:$0xff]
  %v51 = vld [vmem:[%s1 + $0x10] sm:$0xff]
  %v52 = vld [vmem:[%s1 + $0x18] sm:$0xff]
  %v53 = vld [vmem:[%s1 + $0x20] sm:$0xff]
  %v54 = vld [vmem:[%s1 + $0x28] sm:$0xff]
  %v55 = vld [vmem:[%s1 + $0x30] sm:$0xff]
  %v56 = vld [vmem:[%s1 + $0x38] sm:$0xff]
  %v57 = vld [vmem:[%s1 + $0x40] sm:$0xff]
  %v58 = vld [vmem:[%s1 + $0x48] sm:$0xff]
  %v59 = vld [vmem:[%s1 + $0x50] sm:$0xff]
  %v60 = vld [vmem:[%s1 + $0x58] sm:$0xff]
  %v61 = vld [vmem:[%s1 + $0x60] sm:$0xff]
  %v62 = vld [vmem:[%s1 + $0x68] sm:$0xff]
  %v63 = vld [vmem:[%s1 + $0x70] sm:$0xff]
  %v64 = vld [vmem:[%s1 + $0x78] sm:$0xff]
  %v65 = vld [vmem:[%s1 + $0x80] sm:$0xff]
  %v66 = vld [vmem:[%s1 + $0x88] sm:$0xff]
  %v67 = vld [vmem:[%s1 + $0x90] sm:$0xff]
  %v68 = vld [vmem:[%s1 + $0x98] sm:$0xff]
  %v69 = vld [vmem:[%s1 + $0xa0] sm:$0xff]
  %v70 = vld [vmem:[%s1 + $0xa8] sm:$0xff]
  %v71 = vld [vmem:[%s1 + $0xb0] sm:$0xff]
  %v72 = vld [vmem:[%s1 + $0xb8] sm:$0xff]
  %v73 = vld [vmem:[%s1 + $0xc0] sm:$0xff]
  %v74 = vld [vmem:[%s1 + $0xc8] sm:$0xff]
  %v75 = vld [vmem:[%s1 + $0xd0] sm:$0xff]
  %v76 = vld [vmem:[%s1 + $0xd8] sm:$0xff]
  %v77 = vld [vmem:[%s1 + $0xe0] sm:$0xff]
  %v78 = vld [vmem:[%s1 + $0xe8] sm:$0xff]
  %v79 = vld [vmem:[%s1 + $0xf0] sm:$0xff]
  %v80 = vld [vmem:[%s1 + $0xf8] sm:$0xff]
  %81 = vmatprep.subr.mxu0 %v50
  %82 = vmatpush1.msra.mxu0 %v49
  %83 = vmatprep.subr.mxu0 %v52
  %84 = vmatpush1.msra.mxu0 %v51
  %85 = vmatprep.subr.mxu0 %v54
  %86 = vmatpush1.msra.mxu0 %v53
  %87 = vmatprep.subr.mxu0 %v56
  %88 = vmatpush1.msra.mxu0 %v55
  %89 = vmatprep.subr.mxu0 %v58
  %90 = vmatpush1.msra.mxu0 %v57
  %91 = vmatprep.subr.mxu0 %v60
  %92 = vmatpush1.msra.mxu0 %v59
  %93 = vmatprep.subr.mxu0 %v62
  %94 = vmatpush1.msra.mxu0 %v61
  %95 = vmatprep.subr.mxu0 %v64
  %96 = vmatpush1.msra.mxu0 %v63
  %97 = vmatprep.subr.mxu0 %v66
  %98 = vmatpush1.msra.mxu0 %v65
  %99 = vmatprep.subr.mxu0 %v68
  %100 = vmatpush1.msra.mxu0 %v67
  %101 = vmatprep.subr.mxu0 %v70
  %102 = vmatpush1.msra.mxu0 %v69
  %103 = vmatprep.subr.mxu0 %v72
  %104 = vmatpush1.msra.mxu0 %v71
  %105 = vmatprep.subr.mxu0 %v74
  %106 = vmatpush1.msra.mxu0 %v73
  %107 = vmatprep.subr.mxu0 %v76
  %108 = vmatpush1.msra.mxu0 %v75
  %109 = vmatprep.subr.mxu0 %v78
  %110 = vmatpush1.msra.mxu0 %v77
  %111 = vmatprep.subr.mxu0 %v80
  %112 = vmatpush1.msra.mxu0 %v79
  %113 = vmatprep.subr.mxu0 0.0
  %114 = vmatpush1.msra.mxu0 0.0
  %115 = vmatprep.subr.mxu0 0.0
  %116 = vmatpush1.msra.mxu0 0.0
  %117 = vmatprep.subr.mxu0 0.0
  %118 = vmatpush1.msra.mxu0 0.0
  %119 = vmatprep.subr.mxu0 0.0
  %120 = vmatpush1.msra.mxu0 0.0
  %121 = vmatprep.subr.mxu0 0.0
  %122 = vmatpush1.msra.mxu0 0.0
  %123 = vmatprep.subr.mxu0 0.0
  %124 = vmatpush1.msra.mxu0 0.0
  %125 = vmatprep.subr.mxu0 0.0
  %126 = vmatpush1.msra.mxu0 0.0
  %127 = vmatprep.subr.mxu0 0.0
  %128 = vmatpush1.msra.mxu0 0.0
  %129 = vmatprep.subr.mxu0 0.0
  %130 = vmatpush1.msra.mxu0 0.0
  %131 = vmatprep.subr.mxu0 0.0
  %132 = vmatpush1.msra.mxu0 0.0
  %133 = vmatprep.subr.mxu0 0.0
  %134 = vmatpush1.msra.mxu0 0.0
  %135 = vmatprep.subr.mxu0 0.0
  %136 = vmatpush1.msra.mxu0 0.0
  %137 = vmatprep.subr.mxu0 0.0
  %138 = vmatpush1.msra.mxu0 0.0
  %139 = vmatprep.subr.mxu0 0.0
  %140 = vmatpush1.msra.mxu0 0.0
  %141 = vmatprep.subr.mxu0 0.0
  %142 = vmatpush1.msra.mxu0 0.0
  %143 = vmatprep.subr.mxu0 0.0
  %144 = vmatpush1.msra.mxu0 0.0
  %145 = vmatprep.mubr.f32.mxu0 0.0
  %146 = vmatmul.mubr.f32.gmra.mrb[0].mxu0 %v17
  %v147 = vpop.f32.mrb[0].mxu0
  %v148 = vadd.f32 0.0, %v147
  %v149 = vpop.f32.mrb[0].mxu0
  %v150 = vadd.f32 0.0, %v149
  %151 = vmatprep.mubr.f32.mxu0 0.0
  %152 = vmatmul.mubr.f32.gmra.mrb[0].mxu0 %v18
  %v153 = vpop.f32.mrb[0].mxu0
  %v154 = vadd.f32 0.0, %v153
  %v155 = vpop.f32.mrb[0].mxu0
  %v156 = vadd.f32 0.0, %v155
  %157 = vmatprep.mubr.f32.mxu0 0.0
  %158 = vmatmul.mubr.f32.gmra.mrb[0].mxu0 %v19
  %v159 = vpop.f32.mrb[0].mxu0
  %v160 = vadd.f32 0.0, %v159
  %v161 = vpop.f32.mrb[0].mxu0
  %v162 = vadd.f32 0.0, %v161
  %163 = vmatprep.mubr.f32.mxu0 0.0
  %164 = vmatmul.mubr.f32.gmra.mrb[0].mxu0 %v20
  %v165 = vpop.f32.mrb[0].mxu0
  %v166 = vadd.f32 0.0, %v165
  %v167 = vpop.f32.mrb[0].mxu0
  %v168 = vadd.f32 0.0, %v167
  %169 = vmatprep.mubr.f32.mxu0 0.0
  %170 = vmatmul.mubr.f32.gmra.mrb[0].mxu0 %v21
  %v171 = vpop.f32.mrb[0].mxu0
  %v172 = vadd.f32 0.0, %v171
  %v173 = vpop.f32.mrb[0].mxu0
  %v174 = vadd.f32 0.0, %v173
  %175 = vmatprep.mubr.f32.mxu0 0.0
  %176 = vmatmul.mubr.f32.gmra.mrb[0].mxu0 %v22
  %v177 = vpop.f32.mrb[0].mxu0
  %v178 = vadd.f32 0.0, %v177
  %v179 = vpop.f32.mrb[0].mxu0
  %v180 = vadd.f32 0.0, %v179
  %181 = vmatprep.mubr.f32.mxu0 0.0
  %182 = vmatmul.mubr.f32.gmra.mrb[0].mxu0 %v23
  %v183 = vpop.f32.mrb[0].mxu0
  %v184 = vadd.f32 0.0, %v183
  %v185 = vpop.f32.mrb[0].mxu0
  %v186 = vadd.f32 0.0, %v185
  %187 = vmatprep.mubr.f32.mxu0 0.0
  %188 = vmatmul.mubr.f32.gmra.mrb[0].mxu0 %v24
  %v189 = vpop.f32.mrb[0].mxu0
  %v190 = vadd.f32 0.0, %v189
  %v191 = vpop.f32.mrb[0].mxu0
  %v192 = vadd.f32 0.0, %v191
  %193 = vmatprep.mubr.f32.mxu0 0.0
  %194 = vmatmul.mubr.f32.gmra.mrb[0].mxu0 %v25
  %v195 = vpop.f32.mrb[0].mxu0
  %v196 = vadd.f32 0.0, %v195
  %v197 = vpop.f32.mrb[0].mxu0
  %v198 = vadd.f32 0.0, %v197
  %199 = vmatprep.mubr.f32.mxu0 0.0
  %200 = vmatmul.mubr.f32.gmra.mrb[0].mxu0 %v26
  %v201 = vpop.f32.mrb[0].mxu0
  %v202 = vadd.f32 0.0, %v201
  %v203 = vpop.f32.mrb[0].mxu0
  %v204 = vadd.f32 0.0, %v203
  %205 = vmatprep.mubr.f32.mxu0 0.0
  %206 = vmatmul.mubr.f32.gmra.mrb[0].mxu0 %v27
  %v207 = vpop.f32.mrb[0].mxu0
  %v208 = vadd.f32 0.0, %v207
  %v209 = vpop.f32.mrb[0].mxu0
  %v210 = vadd.f32 0.0, %v209
  %211 = vmatprep.mubr.f32.mxu0 0.0
  %212 = vmatmul.mubr.f32.gmra.mrb[0].mxu0 %v28
  %v213 = vpop.f32.mrb[0].mxu0
  %v214 = vadd.f32 0.0, %v213
  %v215 = vpop.f32.mrb[0].mxu0
  %v216 = vadd.f32 0.0, %v215
  %217 = vmatprep.mubr.f32.mxu0 0.0
  %218 = vmatmul.mubr.f32.gmra.mrb[0].mxu0 %v29
  %v219 = vpop.f32.mrb[0].mxu0
  %v220 = vadd.f32 0.0, %v219
  %v221 = vpop.f32.mrb[0].mxu0
  %v222 = vadd.f32 0.0, %v221
  %223 = vmatprep.mubr.f32.mxu0 0.0
  %224 = vmatmul.mubr.f32.gmra.mrb[0].mxu0 %v30
  %v225 = vpop.f32.mrb[0].mxu0
  %v226 = vadd.f32 0.0, %v225
  %v227 = vpop.f32.mrb[0].mxu0
  %v228 = vadd.f32 0.0, %v227
  %229 = vmatprep.mubr.f32.mxu0 0.0
  %230 = vmatmul.mubr.f32.gmra.mrb[0].mxu0 %v31
  %v231 = vpop.f32.mrb[0].mxu0
  %v232 = vadd.f32 0.0, %v231
  %v233 = vpop.f32.mrb[0].mxu0
  %v234 = vadd.f32 0.0, %v233
  %235 = vmatprep.mubr.f32.mxu0 0.0
  %236 = vmatmul.mubr.f32.gmra.mrb[0].mxu0 %v32
  %v237 = vpop.f32.mrb[0].mxu0
  %v238 = vadd.f32 0.0, %v237
  %v239 = vpop.f32.mrb[0].mxu0
  %v240 = vadd.f32 0.0, %v239
  %241 = vmatprep.mubr.f32.mxu0 0.0
  %242 = vmatmul.mubr.f32.gmra.mrb[0].mxu0 %v33
  %v243 = vpop.f32.mrb[0].mxu0
  %v244 = vadd.f32 0.0, %v243
  %v245 = vpop.f32.mrb[0].mxu0
  %v246 = vadd.f32 0.0, %v245
  %247 = vmatprep.mubr.f32.mxu0 0.0
  %248 = vmatmul.mubr.f32.gmra.mrb[0].mxu0 %v34
  %v249 = vpop.f32.mrb[0].mxu0
  %v250 = vadd.f32 0.0, %v249
  %v251 = vpop.f32.mrb[0].mxu0
  %v252 = vadd.f32 0.0, %v251
  %253 = vmatprep.mubr.f32.mxu0 0.0
  %254 = vmatmul.mubr.f32.gmra.mrb[0].mxu0 %v35
  %v255 = vpop.f32.mrb[0].mxu0
  %v256 = vadd.f32 0.0, %v255
  %v257 = vpop.f32.mrb[0].mxu0
  %v258 = vadd.f32 0.0, %v257
  %259 = vmatprep.mubr.f32.mxu0 0.0
  %260 = vmatmul.mubr.f32.gmra.mrb[0].mxu0 %v36
  %v261 = vpop.f32.mrb[0].mxu0
  %v262 = vadd.f32 0.0, %v261
  %v263 = vpop.f32.mrb[0].mxu0
  %v264 = vadd.f32 0.0, %v263
  %265 = vmatprep.mubr.f32.mxu0 0.0
  %266 = vmatmul.mubr.f32.gmra.mrb[0].mxu0 %v37
  %v267 = vpop.f32.mrb[0].mxu0
  %v268 = vadd.f32 0.0, %v267
  %v269 = vpop.f32.mrb[0].mxu0
  %v270 = vadd.f32 0.0, %v269
  %271 = vmatprep.mubr.f32.mxu0 0.0
  %272 = vmatmul.mubr.f32.gmra.mrb[0].mxu0 %v38
  %v273 = vpop.f32.mrb[0].mxu0
  %v274 = vadd.f32 0.0, %v273
  %v275 = vpop.f32.mrb[0].mxu0
  %v276 = vadd.f32 0.0, %v275
  %277 = vmatprep.mubr.f32.mxu0 0.0
  %278 = vmatmul.mubr.f32.gmra.mrb[0].mxu0 %v39
  %v279 = vpop.f32.mrb[0].mxu0
  %v280 = vadd.f32 0.0, %v279
  %v281 = vpop.f32.mrb[0].mxu0
  %v282 = vadd.f32 0.0, %v281
  %283 = vmatprep.mubr.f32.mxu0 0.0
  %284 = vmatmul.mubr.f32.gmra.mrb[0].mxu0 %v40
  %v285 = vpop.f32.mrb[0].mxu0
  %v286 = vadd.f32 0.0, %v285
  %v287 = vpop.f32.mrb[0].mxu0
  %v288 = vadd.f32 0.0, %v287
  %289 = vmatprep.mubr.f32.mxu0 0.0
  %290 = vmatmul.mubr.f32.gmra.mrb[0].mxu0 %v41
  %v291 = vpop.f32.mrb[0].mxu0
  %v292 = vadd.f32 0.0, %v291
  %v293 = vpop.f32.mrb[0].mxu0
  %v294 = vadd.f32 0.0, %v293
  %295 = vmatprep.mubr.f32.mxu0 0.0
  %296 = vmatmul.mubr.f32.gmra.mrb[0].mxu0 %v42
  %v297 = vpop.f32.mrb[0].mxu0
  %v298 = vadd.f32 0.0, %v297
  %v299 = vpop.f32.mrb[0].mxu0
  %v300 = vadd.f32 0.0, %v299
  %301 = vmatprep.mubr.f32.mxu0 0.0
  %302 = vmatmul.mubr.f32.gmra.mrb[0].mxu0 %v43
  %v303 = vpop.f32.mrb[0].mxu0
  %v304 = vadd.f32 0.0, %v303
  %v305 = vpop.f32.mrb[0].mxu0
  %v306 = vadd.f32 0.0, %v305
  %307 = vmatprep.mubr.f32.mxu0 0.0
  %308 = vmatmul.mubr.f32.gmra.mrb[0].mxu0 %v44
  %v309 = vpop.f32.mrb[0].mxu0
  %v310 = vadd.f32 0.0, %v309
  %v311 = vpop.f32.mrb[0].mxu0
  %v312 = vadd.f32 0.0, %v311
  %313 = vmatprep.mubr.f32.mxu0 0.0
  %314 = vmatmul.mubr.f32.gmra.mrb[0].mxu0 %v45
  %v315 = vpop.f32.mrb[0].mxu0
  %v316 = vadd.f32 0.0, %v315
  %v317 = vpop.f32.mrb[0].mxu0
  %v318 = vadd.f32 0.0, %v317
  %319 = vmatprep.mubr.f32.mxu0 0.0
  %320 = vmatmul.mubr.f32.gmra.mrb[0].mxu0 %v46
  %v321 = vpop.f32.mrb[0].mxu0
  %v322 = vadd.f32 0.0, %v321
  %v323 = vpop.f32.mrb[0].mxu0
  %v324 = vadd.f32 0.0, %v323
  %325 = vmatprep.mubr.f32.mxu0 0.0
  %326 = vmatmul.mubr.f32.gmra.mrb[0].mxu0 %v47
  %v327 = vpop.f32.mrb[0].mxu0
  %v328 = vadd.f32 0.0, %v327
  %v329 = vpop.f32.mrb[0].mxu0
  %v330 = vadd.f32 0.0, %v329
  %331 = vmatprep.mubr.f32.mxu0 0.0
  %332 = vmatmul.mubr.f32.gmra.mrb[0].mxu0 %v48
  %v333 = vpop.f32.mrb[0].mxu0
  %v334 = vadd.f32 0.0, %v333
  %v335 = vpop.f32.mrb[0].mxu0
  %v336 = vadd.f32 0.0, %v335
  %337 = vdwg.mxu0
  %v338 = vld [vmem:[%s2] sm:$0xff]
  %v339 = vld [vmem:[%s2 + $0x8] sm:$0xff]
  %v340 = vld [vmem:[%s2 + $0x10] sm:$0xff]
  %v341 = vld [vmem:[%s2 + $0x18] sm:$0xff]
  %v342 = vld [vmem:[%s2 + $0x20] sm:$0xff]
  %v343 = vld [vmem:[%s2 + $0x28] sm:$0xff]
  %v344 = vld [vmem:[%s2 + $0x30] sm:$0xff]
  %v345 = vld [vmem:[%s2 + $0x38] sm:$0xff]
  %v346 = vld [vmem:[%s2 + $0x40] sm:$0xff]
  %v347 = vld [vmem:[%s2 + $0x48] sm:$0xff]
  %v348 = vld [vmem:[%s2 + $0x50] sm:$0xff]
  %v349 = vld [vmem:[%s2 + $0x58] sm:$0xff]
  %v350 = vld [vmem:[%s2 + $0x60] sm:$0xff]
  %v351 = vld [vmem:[%s2 + $0x68] sm:$0xff]
  %v352 = vld [vmem:[%s2 + $0x70] sm:$0xff]
  %v353 = vld [vmem:[%s2 + $0x78] sm:$0xff]
  %v354 = vld [vmem:[%s2 + $0x80] sm:$0xff]
  %v355 = vld [vmem:[%s2 + $0x88] sm:$0xff]
  %v356 = vld [vmem:[%s2 + $0x90] sm:$0xff]
  %v357 = vld [vmem:[%s2 + $0x98] sm:$0xff]
  %v358 = vld [vmem:[%s2 + $0xa0] sm:$0xff]
  %v359 = vld [vmem:[%s2 + $0xa8] sm:$0xff]
  %v360 = vld [vmem:[%s2 + $0xb0] sm:$0xff]
  %v361 = vld [vmem:[%s2 + $0xb8] sm:$0xff]
  %v362 = vld [vmem:[%s2 + $0xc0] sm:$0xff]
  %v363 = vld [vmem:[%s2 + $0xc8] sm:$0xff]
  %v364 = vld [vmem:[%s2 + $0xd0] sm:$0xff]
  %v365 = vld [vmem:[%s2 + $0xd8] sm:$0xff]
  %v366 = vld [vmem:[%s2 + $0xe0] sm:$0xff]
  %v367 = vld [vmem:[%s2 + $0xe8] sm:$0xff]
  %v368 = vld [vmem:[%s2 + $0xf0] sm:$0xff]
  %v369 = vld [vmem:[%s2 + $0xf8] sm:$0xff]
  %v370 = vld [vmem:[%s3] sm:$0x3]
  %372 = vset.pattern.permute.xlu0 0
  %373 = vperm.xlu0 %372, %v338
  %v374 = vpop.permute.xlu0 %373
  %377 = vset.pattern.permute.xlu0 0
  %378 = vperm.xlu0 %377, %v339
  %v379 = vpop.permute.xlu0 %378
  %382 = vset.pattern.permute.xlu0 0
  %383 = vperm.xlu0 %382, %v340
  %v384 = vpop.permute.xlu0 %383
  %387 = vset.pattern.permute.xlu0 0
  %388 = vperm.xlu0 %387, %v341
  %v389 = vpop.permute.xlu0 %388
  %392 = vset.pattern.permute.xlu0 0
  %393 = vperm.xlu0 %392, %v342
  %v394 = vpop.permute.xlu0 %393
  %397 = vset.pattern.permute.xlu0 0
  %398 = vperm.xlu0 %397, %v343
  %v399 = vpop.permute.xlu0 %398
  %402 = vset.pattern.permute.xlu0 0
  %403 = vperm.xlu0 %402, %v344
  %v404 = vpop.permute.xlu0 %403
  %407 = vset.pattern.permute.xlu0 0
  %408 = vperm.xlu0 %407, %v345
  %v409 = vpop.permute.xlu0 %408
  %412 = vset.pattern.permute.xlu0 0
  %413 = vperm.xlu0 %412, %v346
  %v414 = vpop.permute.xlu0 %413
  %417 = vset.pattern.permute.xlu0 0
  %418 = vperm.xlu0 %417, %v347
  %v419 = vpop.permute.xlu0 %418
  %422 = vset.pattern.permute.xlu0 0
  %423 = vperm.xlu0 %422, %v348
  %v424 = vpop.permute.xlu0 %423
  %427 = vset.pattern.permute.xlu0 0
  %428 = vperm.xlu0 %427, %v349
  %v429 = vpop.permute.xlu0 %428
  %432 = vset.pattern.permute.xlu0 0
  %433 = vperm.xlu0 %432, %v350
  %v434 = vpop.permute.xlu0 %433
  %437 = vset.pattern.permute.xlu0 0
  %438 = vperm.xlu0 %437, %v351
  %v439 = vpop.permute.xlu0 %438
  %442 = vset.pattern.permute.xlu0 0
  %443 = vperm.xlu0 %442, %v352
  %v444 = vpop.permute.xlu0 %443
  %447 = vset.pattern.permute.xlu0 0
  %448 = vperm.xlu0 %447, %v353
  %v449 = vpop.permute.xlu0 %448
  %452 = vset.pattern.permute.xlu0 0
  %453 = vperm.xlu0 %452, %v354
  %v454 = vpop.permute.xlu0 %453
  %457 = vset.pattern.permute.xlu0 0
  %458 = vperm.xlu0 %457, %v355
  %v459 = vpop.permute.xlu0 %458
  %462 = vset.pattern.permute.xlu0 0
  %463 = vperm.xlu0 %462, %v356
  %v464 = vpop.permute.xlu0 %463
  %467 = vset.pattern.permute.xlu0 0
  %468 = vperm.xlu0 %467, %v357
  %v469 = vpop.permute.xlu0 %468
  %472 = vset.pattern.permute.xlu0 0
  %473 = vperm.xlu0 %472, %v358
  %v474 = vpop.permute.xlu0 %473
  %477 = vset.pattern.permute.xlu0 0
  %478 = vperm.xlu0 %477, %v359
  %v479 = vpop.permute.xlu0 %478
  %482 = vset.pattern.permute.xlu0 0
  %483 = vperm.xlu0 %482, %v360
  %v484 = vpop.permute.xlu0 %483
  %487 = vset.pattern.permute.xlu0 0
  %488 = vperm.xlu0 %487, %v361
  %v489 = vpop.permute.xlu0 %488
  %492 = vset.pattern.permute.xlu0 0
  %493 = vperm.xlu0 %492, %v362
  %v494 = vpop.permute.xlu0 %493
  %497 = vset.pattern.permute.xlu0 0
  %498 = vperm.xlu0 %497, %v363
  %v499 = vpop.permute.xlu0 %498
  %502 = vset.pattern.permute.xlu0 0
  %503 = vperm.xlu0 %502, %v364
  %v504 = vpop.permute.xlu0 %503
  %507 = vset.pattern.permute.xlu0 0
  %508 = vperm.xlu0 %507, %v365
  %v509 = vpop.permute.xlu0 %508
  %512 = vset.pattern.permute.xlu0 0
  %513 = vperm.xlu0 %512, %v366
  %v514 = vpop.permute.xlu0 %513
  %517 = vset.pattern.permute.xlu0 0
  %518 = vperm.xlu0 %517, %v367
  %v519 = vpop.permute.xlu0 %518
  %522 = vset.pattern.permute.xlu0 0
  %523 = vperm.xlu0 %522, %v368
  %v524 = vpop.permute.xlu0 %523
  %527 = vset.pattern.permute.xlu0 0
  %528 = vperm.xlu0 %527, %v369
  %v529 = vpop.permute.xlu0 %528
  %v532 = vlaneseq
  %v533 = vshrl.u32 %v532, 7
  %v534 = vsub.s32 0, %v533
  %v535 = vrot.slane %v370, %v534
  %v536 = vlaneseq
  %v537 = vshrl.u32 %v536, 7
  %v538 = vsub.s32 1, %v537
  %v539 = vrot.slane %v370, %v538
  %v542 = vadd.f32 %v374, %v535
  %v543 = vadd.f32 %v374, %v539
  %v544 = vadd.f32 %v379, %v535
  %v545 = vadd.f32 %v379, %v539
  %v546 = vadd.f32 %v384, %v535
  %v547 = vadd.f32 %v384, %v539
  %v548 = vadd.f32 %v389, %v535
  %v549 = vadd.f32 %v389, %v539
  %v550 = vadd.f32 %v394, %v535
  %v551 = vadd.f32 %v394, %v539
  %v552 = vadd.f32 %v399, %v535
  %v553 = vadd.f32 %v399, %v539
  %v554 = vadd.f32 %v404, %v535
  %v555 = vadd.f32 %v404, %v539
  %v556 = vadd.f32 %v409, %v535
  %v557 = vadd.f32 %v409, %v539
  %v558 = vadd.f32 %v414, %v535
  %v559 = vadd.f32 %v414, %v539
  %v560 = vadd.f32 %v419, %v535
  %v561 = vadd.f32 %v419, %v539
  %v562 = vadd.f32 %v424, %v535
  %v563 = vadd.f32 %v424, %v539
  %v564 = vadd.f32 %v429, %v535
  %v565 = vadd.f32 %v429, %v539
  %v566 = vadd.f32 %v434, %v535
  %v567 = vadd.f32 %v434, %v539
  %v568 = vadd.f32 %v439, %v535
  %v569 = vadd.f32 %v439, %v539
  %v570 = vadd.f32 %v444, %v535
  %v571 = vadd.f32 %v444, %v539
  %v572 = vadd.f32 %v449, %v535
  %v573 = vadd.f32 %v449, %v539
  %v574 = vadd.f32 %v454, %v535
  %v575 = vadd.f32 %v454, %v539
  %v576 = vadd.f32 %v459, %v535
  %v577 = vadd.f32 %v459, %v539
  %v578 = vadd.f32 %v464, %v535
  %v579 = vadd.f32 %v464, %v539
  %v580 = vadd.f32 %v469, %v535
  %v581 = vadd.f32 %v469, %v539
  %v582 = vadd.f32 %v474, %v535
  %v583 = vadd.f32 %v474, %v539
  %v584 = vadd.f32 %v479, %v535
  %v585 = vadd.f32 %v479, %v539
  %v586 = vadd.f32 %v484, %v535
  %v587 = vadd.f32 %v484, %v539
  %v588 = vadd.f32 %v489, %v535
  %v589 = vadd.f32 %v489, %v539
  %v590 = vadd.f32 %v494, %v535
  %v591 = vadd.f32 %v494, %v539
  %v592 = vadd.f32 %v499, %v535
  %v593 = vadd.f32 %v499, %v539
  %v594 = vadd.f32 %v504, %v535
  %v595 = vadd.f32 %v504, %v539
  %v596 = vadd.f32 %v509, %v535
  %v597 = vadd.f32 %v509, %v539
  %v598 = vadd.f32 %v514, %v535
  %v599 = vadd.f32 %v514, %v539
  %v600 = vadd.f32 %v519, %v535
  %v601 = vadd.f32 %v519, %v539
  %v602 = vadd.f32 %v524, %v535
  %v603 = vadd.f32 %v524, %v539
  %v604 = vadd.f32 %v529, %v535
  %v605 = vadd.f32 %v529, %v539
  %v606 = vmul.f32 %v148, 2.0
  %v607 = vmul.f32 %v150, 2.0
  %v608 = vmul.f32 %v154, 2.0
  %v609 = vmul.f32 %v156, 2.0
  %v610 = vmul.f32 %v160, 2.0
  %v611 = vmul.f32 %v162, 2.0
  %v612 = vmul.f32 %v166, 2.0
  %v613 = vmul.f32 %v168, 2.0
  %v614 = vmul.f32 %v172, 2.0
  %v615 = vmul.f32 %v174, 2.0
  %v616 = vmul.f32 %v178, 2.0
  %v617 = vmul.f32 %v180, 2.0
  %v618 = vmul.f32 %v184, 2.0
  %v619 = vmul.f32 %v186, 2.0
  %v620 = vmul.f32 %v190, 2.0
  %v621 = vmul.f32 %v192, 2.0
  %v622 = vmul.f32 %v196, 2.0
  %v623 = vmul.f32 %v198, 2.0
  %v624 = vmul.f32 %v202, 2.0
  %v625 = vmul.f32 %v204, 2.0
  %v626 = vmul.f32 %v208, 2.0
  %v627 = vmul.f32 %v210, 2.0
  %v628 = vmul.f32 %v214, 2.0
  %v629 = vmul.f32 %v216, 2.0
  %v630 = vmul.f32 %v220, 2.0
  %v631 = vmul.f32 %v222, 2.0
  %v632 = vmul.f32 %v226, 2.0
  %v633 = vmul.f32 %v228, 2.0
  %v634 = vmul.f32 %v232, 2.0
  %v635 = vmul.f32 %v234, 2.0
  %v636 = vmul.f32 %v238, 2.0
  %v637 = vmul.f32 %v240, 2.0
  %v638 = vmul.f32 %v244, 2.0
  %v639 = vmul.f32 %v246, 2.0
  %v640 = vmul.f32 %v250, 2.0
  %v641 = vmul.f32 %v252, 2.0
  %v642 = vmul.f32 %v256, 2.0
  %v643 = vmul.f32 %v258, 2.0
  %v644 = vmul.f32 %v262, 2.0
  %v645 = vmul.f32 %v264, 2.0
  %v646 = vmul.f32 %v268, 2.0
  %v647 = vmul.f32 %v270, 2.0
  %v648 = vmul.f32 %v274, 2.0
  %v649 = vmul.f32 %v276, 2.0
  %v650 = vmul.f32 %v280, 2.0
  %v651 = vmul.f32 %v282, 2.0
  %v652 = vmul.f32 %v286, 2.0
  %v653 = vmul.f32 %v288, 2.0
  %v654 = vmul.f32 %v292, 2.0
  %v655 = vmul.f32 %v294, 2.0
  %v656 = vmul.f32 %v298, 2.0
  %v657 = vmul.f32 %v300, 2.0
  %v658 = vmul.f32 %v304, 2.0
  %v659 = vmul.f32 %v306, 2.0
  %v660 = vmul.f32 %v310, 2.0
  %v661 = vmul.f32 %v312, 2.0
  %v662 = vmul.f32 %v316, 2.0
  %v663 = vmul.f32 %v318, 2.0
  %v664 = vmul.f32 %v322, 2.0
  %v665 = vmul.f32 %v324, 2.0
  %v666 = vmul.f32 %v328, 2.0
  %v667 = vmul.f32 %v330, 2.0
  %v668 = vmul.f32 %v334, 2.0
  %v669 = vmul.f32 %v336, 2.0
  %v670 = vsub.f32 %v542, %v606
  %v671 = vsub.f32 %v543, %v607
  %v672 = vsub.f32 %v544, %v608
  %v673 = vsub.f32 %v545, %v609
  %v674 = vsub.f32 %v546, %v610
  %v675 = vsub.f32 %v547, %v611
  %v676 = vsub.f32 %v548, %v612
  %v677 = vsub.f32 %v549, %v613
  %v678 = vsub.f32 %v550, %v614
  %v679 = vsub.f32 %v551, %v615
  %v680 = vsub.f32 %v552, %v616
  %v681 = vsub.f32 %v553, %v617
  %v682 = vsub.f32 %v554, %v618
  %v683 = vsub.f32 %v555, %v619
  %v684 = vsub.f32 %v556, %v620
  %v685 = vsub.f32 %v557, %v621
  %v686 = vsub.f32 %v558, %v622
  %v687 = vsub.f32 %v559, %v623
  %v688 = vsub.f32 %v560, %v624
  %v689 = vsub.f32 %v561, %v625
  %v690 = vsub.f32 %v562, %v626
  %v691 = vsub.f32 %v563, %v627
  %v692 = vsub.f32 %v564, %v628
  %v693 = vsub.f32 %v565, %v629
  %v694 = vsub.f32 %v566, %v630
  %v695 = vsub.f32 %v567, %v631
  %v696 = vsub.f32 %v568, %v632
  %v697 = vsub.f32 %v569, %v633
  %v698 = vsub.f32 %v570, %v634
  %v699 = vsub.f32 %v571, %v635
  %v700 = vsub.f32 %v572, %v636
  %v701 = vsub.f32 %v573, %v637
  %v702 = vsub.f32 %v574, %v638
  %v703 = vsub.f32 %v575, %v639
  %v704 = vsub.f32 %v576, %v640
  %v705 = vsub.f32 %v577, %v641
  %v706 = vsub.f32 %v578, %v642
  %v707 = vsub.f32 %v579, %v643
  %v708 = vsub.f32 %v580, %v644
  %v709 = vsub.f32 %v581, %v645
  %v710 = vsub.f32 %v582, %v646
  %v711 = vsub.f32 %v583, %v647
  %v712 = vsub.f32 %v584, %v648
  %v713 = vsub.f32 %v585, %v649
  %v714 = vsub.f32 %v586, %v650
  %v715 = vsub.f32 %v587, %v651
  %v716 = vsub.f32 %v588, %v652
  %v717 = vsub.f32 %v589, %v653
  %v718 = vsub.f32 %v590, %v654
  %v719 = vsub.f32 %v591, %v655
  %v720 = vsub.f32 %v592, %v656
  %v721 = vsub.f32 %v593, %v657
  %v722 = vsub.f32 %v594, %v658
  %v723 = vsub.f32 %v595, %v659
  %v724 = vsub.f32 %v596, %v660
  %v725 = vsub.f32 %v597, %v661
  %v726 = vsub.f32 %v598, %v662
  %v727 = vsub.f32 %v599, %v663
  %v728 = vsub.f32 %v600, %v664
  %v729 = vsub.f32 %v601, %v665
  %v730 = vsub.f32 %v602, %v666
  %v731 = vsub.f32 %v603, %v667
  %v732 = vsub.f32 %v604, %v668
  %v733 = vsub.f32 %v605, %v669
  %v734 = vmax.f32 %v670, 0.0
  %v735 = vmax.f32 %v671, 0.0
  %v736 = vmax.f32 %v672, 0.0
  %v737 = vmax.f32 %v673, 0.0
  %v738 = vmax.f32 %v674, 0.0
  %v739 = vmax.f32 %v675, 0.0
  %v740 = vmax.f32 %v676, 0.0
  %v741 = vmax.f32 %v677, 0.0
  %v742 = vmax.f32 %v678, 0.0
  %v743 = vmax.f32 %v679, 0.0
  %v744 = vmax.f32 %v680, 0.0
  %v745 = vmax.f32 %v681, 0.0
  %v746 = vmax.f32 %v682, 0.0
  %v747 = vmax.f32 %v683, 0.0
  %v748 = vmax.f32 %v684, 0.0
  %v749 = vmax.f32 %v685, 0.0
  %v750 = vmax.f32 %v686, 0.0
  %v751 = vmax.f32 %v687, 0.0
  %v752 = vmax.f32 %v688, 0.0
  %v753 = vmax.f32 %v689, 0.0
  %v754 = vmax.f32 %v690, 0.0
  %v755 = vmax.f32 %v691, 0.0
  %v756 = vmax.f32 %v692, 0.0
  %v757 = vmax.f32 %v693, 0.0
  %v758 = vmax.f32 %v694, 0.0
  %v759 = vmax.f32 %v695, 0.0
  %v760 = vmax.f32 %v696, 0.0
  %v761 = vmax.f32 %v697, 0.0
  %v762 = vmax.f32 %v698, 0.0
  %v763 = vmax.f32 %v699, 0.0
  %v764 = vmax.f32 %v700, 0.0
  %v765 = vmax.f32 %v701, 0.0
  %v766 = vmax.f32 %v702, 0.0
  %v767 = vmax.f32 %v703, 0.0
  %v768 = vmax.f32 %v704, 0.0
  %v769 = vmax.f32 %v705, 0.0
  %v770 = vmax.f32 %v706, 0.0
  %v771 = vmax.f32 %v707, 0.0
  %v772 = vmax.f32 %v708, 0.0
  %v773 = vmax.f32 %v709, 0.0
  %v774 = vmax.f32 %v710, 0.0
  %v775 = vmax.f32 %v711, 0.0
  %v776 = vmax.f32 %v712, 0.0
  %v777 = vmax.f32 %v713, 0.0
  %v778 = vmax.f32 %v714, 0.0
  %v779 = vmax.f32 %v715, 0.0
  %v780 = vmax.f32 %v716, 0.0
  %v781 = vmax.f32 %v717, 0.0
  %v782 = vmax.f32 %v718, 0.0
  %v783 = vmax.f32 %v719, 0.0
  %v784 = vmax.f32 %v720, 0.0
  %v785 = vmax.f32 %v721, 0.0
  %v786 = vmax.f32 %v722, 0.0
  %v787 = vmax.f32 %v723, 0.0
  %v788 = vmax.f32 %v724, 0.0
  %v789 = vmax.f32 %v725, 0.0
  %v790 = vmax.f32 %v726, 0.0
  %v791 = vmax.f32 %v727, 0.0
  %v792 = vmax.f32 %v728, 0.0
  %v793 = vmax.f32 %v729, 0.0
  %v794 = vmax.f32 %v730, 0.0
  %v795 = vmax.f32 %v731, 0.0
  %v796 = vmax.f32 %v732, 0.0
  %v797 = vmax.f32 %v733, 0.0
  %v798 = vmul.f32 %v734, -0.11111111
  %v799 = vmul.f32 %v735, -0.11111111
  %v800 = vmul.f32 %v736, -0.11111111
  %v801 = vmul.f32 %v737, -0.11111111
  %v802 = vmul.f32 %v738, -0.11111111
  %v803 = vmul.f32 %v739, -0.11111111
  %v804 = vmul.f32 %v740, -0.11111111
  %v805 = vmul.f32 %v741, -0.11111111
  %v806 = vmul.f32 %v742, -0.11111111
  %v807 = vmul.f32 %v743, -0.11111111
  %v808 = vmul.f32 %v744, -0.11111111
  %v809 = vmul.f32 %v745, -0.11111111
  %v810 = vmul.f32 %v746, -0.11111111
  %v811 = vmul.f32 %v747, -0.11111111
  %v812 = vmul.f32 %v748, -0.11111111
  %v813 = vmul.f32 %v749, -0.11111111
  %v814 = vmul.f32 %v750, -0.11111111
  %v815 = vmul.f32 %v751, -0.11111111
  %v816 = vmul.f32 %v752, -0.11111111
  %v817 = vmul.f32 %v753, -0.11111111
  %v818 = vmul.f32 %v754, -0.11111111
  %v819 = vmul.f32 %v755, -0.11111111
  %v820 = vmul.f32 %v756, -0.11111111
  %v821 = vmul.f32 %v757, -0.11111111
  %v822 = vmul.f32 %v758, -0.11111111
  %v823 = vmul.f32 %v759, -0.11111111
  %v824 = vmul.f32 %v760, -0.11111111
  %v825 = vmul.f32 %v761, -0.11111111
  %v826 = vmul.f32 %v762, -0.11111111
  %v827 = vmul.f32 %v763, -0.11111111
  %v828 = vmul.f32 %v764, -0.11111111
  %v829 = vmul.f32 %v765, -0.11111111
  %v830 = vmul.f32 %v766, -0.11111111
  %v831 = vmul.f32 %v767, -0.11111111
  %v832 = vmul.f32 %v768, -0.11111111
  %v833 = vmul.f32 %v769, -0.11111111
  %v834 = vmul.f32 %v770, -0.11111111
  %v835 = vmul.f32 %v771, -0.11111111
  %v836 = vmul.f32 %v772, -0.11111111
  %v837 = vmul.f32 %v773, -0.11111111
  %v838 = vmul.f32 %v774, -0.11111111
  %v839 = vmul.f32 %v775, -0.11111111
  %v840 = vmul.f32 %v776, -0.11111111
  %v841 = vmul.f32 %v777, -0.11111111
  %v842 = vmul.f32 %v778, -0.11111111
  %v843 = vmul.f32 %v779, -0.11111111
  %v844 = vmul.f32 %v780, -0.11111111
  %v845 = vmul.f32 %v781, -0.11111111
  %v846 = vmul.f32 %v782, -0.11111111
  %v847 = vmul.f32 %v783, -0.11111111
  %v848 = vmul.f32 %v784, -0.11111111
  %v849 = vmul.f32 %v785, -0.11111111
  %v850 = vmul.f32 %v786, -0.11111111
  %v851 = vmul.f32 %v787, -0.11111111
  %v852 = vmul.f32 %v788, -0.11111111
  %v853 = vmul.f32 %v789, -0.11111111
  %v854 = vmul.f32 %v790, -0.11111111
  %v855 = vmul.f32 %v791, -0.11111111
  %v856 = vmul.f32 %v792, -0.11111111
  %v857 = vmul.f32 %v793, -0.11111111
  %v858 = vmul.f32 %v794, -0.11111111
  %v859 = vmul.f32 %v795, -0.11111111
  %v860 = vmul.f32 %v796, -0.11111111
  %v861 = vmul.f32 %v797, -0.11111111
  %v862 = vmul.f32 %v798, 1.442695
  %v863 = vpow.pop %v862
  %v864 = vmul.f32 %v799, 1.442695
  %v865 = vpow.pop %v864
  %v866 = vmul.f32 %v800, 1.442695
  %v867 = vpow.pop %v866
  %v868 = vmul.f32 %v801, 1.442695
  %v869 = vpow.pop %v868
  %v870 = vmul.f32 %v802, 1.442695
  %v871 = vpow.pop %v870
  %v872 = vmul.f32 %v803, 1.442695
  %v873 = vpow.pop %v872
  %v874 = vmul.f32 %v804, 1.442695
  %v875 = vpow.pop %v874
  %v876 = vmul.f32 %v805, 1.442695
  %v877 = vpow.pop %v876
  %v878 = vmul.f32 %v806, 1.442695
  %v879 = vpow.pop %v878
  %v880 = vmul.f32 %v807, 1.442695
  %v881 = vpow.pop %v880
  %v882 = vmul.f32 %v808, 1.442695
  %v883 = vpow.pop %v882
  %v884 = vmul.f32 %v809, 1.442695
  %v885 = vpow.pop %v884
  %v886 = vmul.f32 %v810, 1.442695
  %v887 = vpow.pop %v886
  %v888 = vmul.f32 %v811, 1.442695
  %v889 = vpow.pop %v888
  %v890 = vmul.f32 %v812, 1.442695
  %v891 = vpow.pop %v890
  %v892 = vmul.f32 %v813, 1.442695
  %v893 = vpow.pop %v892
  %v894 = vmul.f32 %v814, 1.442695
  %v895 = vpow.pop %v894
  %v896 = vmul.f32 %v815, 1.442695
  %v897 = vpow.pop %v896
  %v898 = vmul.f32 %v816, 1.442695
  %v899 = vpow.pop %v898
  %v900 = vmul.f32 %v817, 1.442695
  %v901 = vpow.pop %v900
  %v902 = vmul.f32 %v818, 1.442695
  %v903 = vpow.pop %v902
  %v904 = vmul.f32 %v819, 1.442695
  %v905 = vpow.pop %v904
  %v906 = vmul.f32 %v820, 1.442695
  %v907 = vpow.pop %v906
  %v908 = vmul.f32 %v821, 1.442695
  %v909 = vpow.pop %v908
  %v910 = vmul.f32 %v822, 1.442695
  %v911 = vpow.pop %v910
  %v912 = vmul.f32 %v823, 1.442695
  %v913 = vpow.pop %v912
  %v914 = vmul.f32 %v824, 1.442695
  %v915 = vpow.pop %v914
  %v916 = vmul.f32 %v825, 1.442695
  %v917 = vpow.pop %v916
  %v918 = vmul.f32 %v826, 1.442695
  %v919 = vpow.pop %v918
  %v920 = vmul.f32 %v827, 1.442695
  %v921 = vpow.pop %v920
  %v922 = vmul.f32 %v828, 1.442695
  %v923 = vpow.pop %v922
  %v924 = vmul.f32 %v829, 1.442695
  %v925 = vpow.pop %v924
  %v926 = vmul.f32 %v830, 1.442695
  %v927 = vpow.pop %v926
  %v928 = vmul.f32 %v831, 1.442695
  %v929 = vpow.pop %v928
  %v930 = vmul.f32 %v832, 1.442695
  %v931 = vpow.pop %v930
  %v932 = vmul.f32 %v833, 1.442695
  %v933 = vpow.pop %v932
  %v934 = vmul.f32 %v834, 1.442695
  %v935 = vpow.pop %v934
  %v936 = vmul.f32 %v835, 1.442695
  %v937 = vpow.pop %v936
  %v938 = vmul.f32 %v836, 1.442695
  %v939 = vpow.pop %v938
  %v940 = vmul.f32 %v837, 1.442695
  %v941 = vpow.pop %v940
  %v942 = vmul.f32 %v838, 1.442695
  %v943 = vpow.pop %v942
  %v944 = vmul.f32 %v839, 1.442695
  %v945 = vpow.pop %v944
  %v946 = vmul.f32 %v840, 1.442695
  %v947 = vpow.pop %v946
  %v948 = vmul.f32 %v841, 1.442695
  %v949 = vpow.pop %v948
  %v950 = vmul.f32 %v842, 1.442695
  %v951 = vpow.pop %v950
  %v952 = vmul.f32 %v843, 1.442695
  %v953 = vpow.pop %v952
  %v954 = vmul.f32 %v844, 1.442695
  %v955 = vpow.pop %v954
  %v956 = vmul.f32 %v845, 1.442695
  %v957 = vpow.pop %v956
  %v958 = vmul.f32 %v846, 1.442695
  %v959 = vpow.pop %v958
  %v960 = vmul.f32 %v847, 1.442695
  %v961 = vpow.pop %v960
  %v962 = vmul.f32 %v848, 1.442695
  %v963 = vpow.pop %v962
  %v964 = vmul.f32 %v849, 1.442695
  %v965 = vpow.pop %v964
  %v966 = vmul.f32 %v850, 1.442695
  %v967 = vpow.pop %v966
  %v968 = vmul.f32 %v851, 1.442695
  %v969 = vpow.pop %v968
  %v970 = vmul.f32 %v852, 1.442695
  %v971 = vpow.pop %v970
  %v972 = vmul.f32 %v853, 1.442695
  %v973 = vpow.pop %v972
  %v974 = vmul.f32 %v854, 1.442695
  %v975 = vpow.pop %v974
  %v976 = vmul.f32 %v855, 1.442695
  %v977 = vpow.pop %v976
  %v978 = vmul.f32 %v856, 1.442695
  %v979 = vpow.pop %v978
  %v980 = vmul.f32 %v857, 1.442695
  %v981 = vpow.pop %v980
  %v982 = vmul.f32 %v858, 1.442695
  %v983 = vpow.pop %v982
  %v984 = vmul.f32 %v859, 1.442695
  %v985 = vpow.pop %v984
  %v986 = vmul.f32 %v860, 1.442695
  %v987 = vpow.pop %v986
  %v988 = vmul.f32 %v861, 1.442695
  %v989 = vpow.pop %v988
  %990 = vst [vmem:[%s4] sm:$0xff] %v863
  %991 = vst [vmem:[%s4 + $0x8] sm:$0xff] %v865
  %992 = vst [vmem:[%s4 + $0x10] sm:$0xff] %v867
  %993 = vst [vmem:[%s4 + $0x18] sm:$0xff] %v869
  %994 = vst [vmem:[%s4 + $0x20] sm:$0xff] %v871
  %995 = vst [vmem:[%s4 + $0x28] sm:$0xff] %v873
  %996 = vst [vmem:[%s4 + $0x30] sm:$0xff] %v875
  %997 = vst [vmem:[%s4 + $0x38] sm:$0xff] %v877
  %998 = vst [vmem:[%s4 + $0x40] sm:$0xff] %v879
  %999 = vst [vmem:[%s4 + $0x48] sm:$0xff] %v881
  %1000 = vst [vmem:[%s4 + $0x50] sm:$0xff] %v883
  %1001 = vst [vmem:[%s4 + $0x58] sm:$0xff] %v885
  %1002 = vst [vmem:[%s4 + $0x60] sm:$0xff] %v887
  %1003 = vst [vmem:[%s4 + $0x68] sm:$0xff] %v889
  %1004 = vst [vmem:[%s4 + $0x70] sm:$0xff] %v891
  %1005 = vst [vmem:[%s4 + $0x78] sm:$0xff] %v893
  %1006 = vst [vmem:[%s4 + $0x80] sm:$0xff] %v895
  %1007 = vst [vmem:[%s4 + $0x88] sm:$0xff] %v897
  %1008 = vst [vmem:[%s4 + $0x90] sm:$0xff] %v899
  %1009 = vst [vmem:[%s4 + $0x98] sm:$0xff] %v901
  %1010 = vst [vmem:[%s4 + $0xa0] sm:$0xff] %v903
  %1011 = vst [vmem:[%s4 + $0xa8] sm:$0xff] %v905
  %1012 = vst [vmem:[%s4 + $0xb0] sm:$0xff] %v907
  %1013 = vst [vmem:[%s4 + $0xb8] sm:$0xff] %v909
  %1014 = vst [vmem:[%s4 + $0xc0] sm:$0xff] %v911
  %1015 = vst [vmem:[%s4 + $0xc8] sm:$0xff] %v913
  %1016 = vst [vmem:[%s4 + $0xd0] sm:$0xff] %v915
  %1017 = vst [vmem:[%s4 + $0xd8] sm:$0xff] %v917
  %1018 = vst [vmem:[%s4 + $0xe0] sm:$0xff] %v919
  %1019 = vst [vmem:[%s4 + $0xe8] sm:$0xff] %v921
  %1020 = vst [vmem:[%s4 + $0xf0] sm:$0xff] %v923
  %1021 = vst [vmem:[%s4 + $0xf8] sm:$0xff] %v925
  %1022 = vst [vmem:[%s4 + $0x100] sm:$0xff] %v927
  %1023 = vst [vmem:[%s4 + $0x108] sm:$0xff] %v929
  %1024 = vst [vmem:[%s4 + $0x110] sm:$0xff] %v931
  %1025 = vst [vmem:[%s4 + $0x118] sm:$0xff] %v933
  %1026 = vst [vmem:[%s4 + $0x120] sm:$0xff] %v935
  %1027 = vst [vmem:[%s4 + $0x128] sm:$0xff] %v937
  %1028 = vst [vmem:[%s4 + $0x130] sm:$0xff] %v939
  %1029 = vst [vmem:[%s4 + $0x138] sm:$0xff] %v941
  %1030 = vst [vmem:[%s4 + $0x140] sm:$0xff] %v943
  %1031 = vst [vmem:[%s4 + $0x148] sm:$0xff] %v945
  %1032 = vst [vmem:[%s4 + $0x150] sm:$0xff] %v947
  %1033 = vst [vmem:[%s4 + $0x158] sm:$0xff] %v949
  %1034 = vst [vmem:[%s4 + $0x160] sm:$0xff] %v951
  %1035 = vst [vmem:[%s4 + $0x168] sm:$0xff] %v953
  %1036 = vst [vmem:[%s4 + $0x170] sm:$0xff] %v955
  %1037 = vst [vmem:[%s4 + $0x178] sm:$0xff] %v957
  %1038 = vst [vmem:[%s4 + $0x180] sm:$0xff] %v959
  %1039 = vst [vmem:[%s4 + $0x188] sm:$0xff] %v961
  %1040 = vst [vmem:[%s4 + $0x190] sm:$0xff] %v963
  %1041 = vst [vmem:[%s4 + $0x198] sm:$0xff] %v965
  %1042 = vst [vmem:[%s4 + $0x1a0] sm:$0xff] %v967
  %1043 = vst [vmem:[%s4 + $0x1a8] sm:$0xff] %v969
  %1044 = vst [vmem:[%s4 + $0x1b0] sm:$0xff] %v971
  %1045 = vst [vmem:[%s4 + $0x1b8] sm:$0xff] %v973
  %1046 = vst [vmem:[%s4 + $0x1c0] sm:$0xff] %v975
  %1047 = vst [vmem:[%s4 + $0x1c8] sm:$0xff] %v977
  %1048 = vst [vmem:[%s4 + $0x1d0] sm:$0xff] %v979
  %1049 = vst [vmem:[%s4 + $0x1d8] sm:$0xff] %v981
  %1050 = vst [vmem:[%s4 + $0x1e0] sm:$0xff] %v983
  %1051 = vst [vmem:[%s4 + $0x1e8] sm:$0xff] %v985
  %1052 = vst [vmem:[%s4 + $0x1f0] sm:$0xff] %v987
  %1053 = vst [vmem:[%s4 + $0x1f8] sm:$0xff] %v989
  // Predicated region
  $region18: #{proto_igcn_forward.6} parent=0 // pred_check
    _
  $region19: #{proto_igcn_forward.6} parent=0 // pred_check_branch
    %1055 = sbr.rel (0) target = $region21
  $region20: #{proto_igcn_forward.6} parent=0 // pred_region
    _
  $region21: #{proto_igcn_forward.6} parent=0 // pred_fallthru
    _
  // Predicated region
  $region22: #{proto_igcn_forward.6} parent=0 // pred_check
    _
  $region23: #{proto_igcn_forward.6} parent=0 // pred_check_branch
    %1057 = sbr.rel (0) target = $region25
  $region24: #{proto_igcn_forward.6} parent=0 // pred_region
    _
  $region25: #{proto_igcn_forward.6} parent=0 // pred_fallthru
    _

// kernel: proto_igcn_forward.7
$region0: #{proto_igcn_forward.7}
  #allocation0 [shape = 'u32[]', space=smem, size = 0x4, offset = 0x4, fixed_abs, tag = 'smem constant byte address 0x4 - core index']
  #allocation1 [shape = 'u32[144,128]{1,0:T(1,128)}', space=vmem, size = 0x12000, scoped, tag = 'internal scratch']
  %s0 = inlined_call_operand.vmem [shape: bf16[256,256], index: 0, kind: input, shape index: {}, may-alias: {0,1}]
  %s1 = inlined_call_operand.vmem [shape: bf16[256,256], index: 1, kind: input, shape index: {}, may-alias: {0,1}]
  %s2 = inlined_call_operand.vmem [shape: f32[256,256], index: 2, kind: output, shape index: {}]
  %s3 = sld [smem:[#allocation0]]
  $region18: #{proto_igcn_forward.7} parent=0
    _
  %s5 = ssub.s32 1, %s3
  %s6 = scalar_select 0, %s5, %s3
  // Predicated region
  $region2: #{proto_igcn_forward.7} parent=0 // pred_check
    _
  $region3: #{proto_igcn_forward.7} parent=0 // pred_check_branch
    %8 = sbr.rel (0) target = $region5
  $region4: #{proto_igcn_forward.7} parent=0 // pred_region
    _
  $region5: #{proto_igcn_forward.7} parent=0 // pred_fallthru
    _
  // Predicated region
  $region6: #{proto_igcn_forward.7} parent=0 // pred_check
    _
  $region7: #{proto_igcn_forward.7} parent=0 // pred_check_branch
    %10 = sbr.rel (0) target = $region9
  $region8: #{proto_igcn_forward.7} parent=0 // pred_region
    _
  $region9: #{proto_igcn_forward.7} parent=0 // pred_fallthru
    _
  %v11 = vld [vmem:[%s0] sm:$0xff]
  %v12 = vld [vmem:[%s0 + $0x8] sm:$0xff]
  %v13 = vld [vmem:[%s0 + $0x10] sm:$0xff]
  %v14 = vld [vmem:[%s0 + $0x18] sm:$0xff]
  %v15 = vld [vmem:[%s0 + $0x20] sm:$0xff]
  %v16 = vld [vmem:[%s0 + $0x28] sm:$0xff]
  %v17 = vld [vmem:[%s0 + $0x30] sm:$0xff]
  %v18 = vld [vmem:[%s0 + $0x38] sm:$0xff]
  %v19 = vld [vmem:[%s0 + $0x40] sm:$0xff]
  %v20 = vld [vmem:[%s0 + $0x48] sm:$0xff]
  %v21 = vld [vmem:[%s0 + $0x50] sm:$0xff]
  %v22 = vld [vmem:[%s0 + $0x58] sm:$0xff]
  %v23 = vld [vmem:[%s0 + $0x60] sm:$0xff]
  %v24 = vld [vmem:[%s0 + $0x68] sm:$0xff]
  %v25 = vld [vmem:[%s0 + $0x70] sm:$0xff]
  %v26 = vld [vmem:[%s0 + $0x78] sm:$0xff]
  %v27 = vld [vmem:[%s0 + $0x80] sm:$0xff]
  %v28 = vld [vmem:[%s0 + $0x88] sm:$0xff]
  %v29 = vld [vmem:[%s0 + $0x90] sm:$0xff]
  %v30 = vld [vmem:[%s0 + $0x98] sm:$0xff]
  %v31 = vld [vmem:[%s0 + $0xa0] sm:$0xff]
  %v32 = vld [vmem:[%s0 + $0xa8] sm:$0xff]
  %v33 = vld [vmem:[%s0 + $0xb0] sm:$0xff]
  %v34 = vld [vmem:[%s0 + $0xb8] sm:$0xff]
  %v35 = vld [vmem:[%s0 + $0xc0] sm:$0xff]
  %v36 = vld [vmem:[%s0 + $0xc8] sm:$0xff]
  %v37 = vld [vmem:[%s0 + $0xd0] sm:$0xff]
  %v38 = vld [vmem:[%s0 + $0xd8] sm:$0xff]
  %v39 = vld [vmem:[%s0 + $0xe0] sm:$0xff]
  %v40 = vld [vmem:[%s0 + $0xe8] sm:$0xff]
  %v41 = vld [vmem:[%s0 + $0xf0] sm:$0xff]
  %v42 = vld [vmem:[%s0 + $0xf8] sm:$0xff]
  %v43 = vld [vmem:[%s1] sm:$0xff]
  %v44 = vld [vmem:[%s1 + $0x8] sm:$0xff]
  %v45 = vld [vmem:[%s1 + $0x10] sm:$0xff]
  %v46 = vld [vmem:[%s1 + $0x18] sm:$0xff]
  %v47 = vld [vmem:[%s1 + $0x20] sm:$0xff]
  %v48 = vld [vmem:[%s1 + $0x28] sm:$0xff]
  %v49 = vld [vmem:[%s1 + $0x30] sm:$0xff]
  %v50 = vld [vmem:[%s1 + $0x38] sm:$0xff]
  %v51 = vld [vmem:[%s1 + $0x40] sm:$0xff]
  %v52 = vld [vmem:[%s1 + $0x48] sm:$0xff]
  %v53 = vld [vmem:[%s1 + $0x50] sm:$0xff]
  %v54 = vld [vmem:[%s1 + $0x58] sm:$0xff]
  %v55 = vld [vmem:[%s1 + $0x60] sm:$0xff]
  %v56 = vld [vmem:[%s1 + $0x68] sm:$0xff]
  %v57 = vld [vmem:[%s1 + $0x70] sm:$0xff]
  %v58 = vld [vmem:[%s1 + $0x78] sm:$0xff]
  %v59 = vld [vmem:[%s1 + $0x80] sm:$0xff]
  %v60 = vld [vmem:[%s1 + $0x88] sm:$0xff]
  %v61 = vld [vmem:[%s1 + $0x90] sm:$0xff]
  %v62 = vld [vmem:[%s1 + $0x98] sm:$0xff]
  %v63 = vld [vmem:[%s1 + $0xa0] sm:$0xff]
  %v64 = vld [vmem:[%s1 + $0xa8] sm:$0xff]
  %v65 = vld [vmem:[%s1 + $0xb0] sm:$0xff]
  %v66 = vld [vmem:[%s1 + $0xb8] sm:$0xff]
  %v67 = vld [vmem:[%s1 + $0xc0] sm:$0xff]
  %v68 = vld [vmem:[%s1 + $0xc8] sm:$0xff]
  %v69 = vld [vmem:[%s1 + $0xd0] sm:$0xff]
  %v70 = vld [vmem:[%s1 + $0xd8] sm:$0xff]
  %v71 = vld [vmem:[%s1 + $0xe0] sm:$0xff]
  %v72 = vld [vmem:[%s1 + $0xe8] sm:$0xff]
  %v73 = vld [vmem:[%s1 + $0xf0] sm:$0xff]
  %v74 = vld [vmem:[%s1 + $0xf8] sm:$0xff]
  %v107 = vunpack.c.l.b16 %v11
  %v108 = vunpack.c.h.b16 %v11
  %v109 = vunpack.c.l.b16 %v12
  %v110 = vunpack.c.h.b16 %v12
  %v111 = vunpack.c.l.b16 %v13
  %v112 = vunpack.c.h.b16 %v13
  %v113 = vunpack.c.l.b16 %v14
  %v114 = vunpack.c.h.b16 %v14
  %v115 = vunpack.c.l.b16 %v15
  %v116 = vunpack.c.h.b16 %v15
  %v117 = vunpack.c.l.b16 %v16
  %v118 = vunpack.c.h.b16 %v16
  %v119 = vunpack.c.l.b16 %v17
  %v120 = vunpack.c.h.b16 %v17
  %v121 = vunpack.c.l.b16 %v18
  %v122 = vunpack.c.h.b16 %v18
  %v123 = vunpack.c.l.b16 %v19
  %v124 = vunpack.c.h.b16 %v19
  %v125 = vunpack.c.l.b16 %v20
  %v126 = vunpack.c.h.b16 %v20
  %v127 = vunpack.c.l.b16 %v21
  %v128 = vunpack.c.h.b16 %v21
  %v129 = vunpack.c.l.b16 %v22
  %v130 = vunpack.c.h.b16 %v22
  %v131 = vunpack.c.l.b16 %v23
  %v132 = vunpack.c.h.b16 %v23
  %v133 = vunpack.c.l.b16 %v24
  %v134 = vunpack.c.h.b16 %v24
  %v135 = vunpack.c.l.b16 %v25
  %v136 = vunpack.c.h.b16 %v25
  %v137 = vunpack.c.l.b16 %v26
  %v138 = vunpack.c.h.b16 %v26
  %v139 = vunpack.c.l.b16 %v27
  %v140 = vunpack.c.h.b16 %v27
  %v141 = vunpack.c.l.b16 %v28
  %v142 = vunpack.c.h.b16 %v28
  %v143 = vunpack.c.l.b16 %v29
  %v144 = vunpack.c.h.b16 %v29
  %v145 = vunpack.c.l.b16 %v30
  %v146 = vunpack.c.h.b16 %v30
  %v147 = vunpack.c.l.b16 %v31
  %v148 = vunpack.c.h.b16 %v31
  %v149 = vunpack.c.l.b16 %v32
  %v150 = vunpack.c.h.b16 %v32
  %v151 = vunpack.c.l.b16 %v33
  %v152 = vunpack.c.h.b16 %v33
  %v153 = vunpack.c.l.b16 %v34
  %v154 = vunpack.c.h.b16 %v34
  %v155 = vunpack.c.l.b16 %v35
  %v156 = vunpack.c.h.b16 %v35
  %v157 = vunpack.c.l.b16 %v36
  %v158 = vunpack.c.h.b16 %v36
  %v159 = vunpack.c.l.b16 %v37
  %v160 = vunpack.c.h.b16 %v37
  %v161 = vunpack.c.l.b16 %v38
  %v162 = vunpack.c.h.b16 %v38
  %v163 = vunpack.c.l.b16 %v39
  %v164 = vunpack.c.h.b16 %v39
  %v165 = vunpack.c.l.b16 %v40
  %v166 = vunpack.c.h.b16 %v40
  %v167 = vunpack.c.l.b16 %v41
  %v168 = vunpack.c.h.b16 %v41
  %v169 = vunpack.c.l.b16 %v42
  %v170 = vunpack.c.h.b16 %v42
  %v171 = vpack.c.b16 %v109, %v107
  %v172 = vpack.c.b16 %v110, %v108
  %v173 = vpack.c.b16 %v113, %v111
  %v174 = vpack.c.b16 %v114, %v112
  %v175 = vpack.c.b16 %v117, %v115
  %v176 = vpack.c.b16 %v118, %v116
  %v177 = vpack.c.b16 %v121, %v119
  %v178 = vpack.c.b16 %v122, %v120
  %v179 = vpack.c.b16 %v125, %v123
  %v180 = vpack.c.b16 %v126, %v124
  %v181 = vpack.c.b16 %v129, %v127
  %v182 = vpack.c.b16 %v130, %v128
  %v183 = vpack.c.b16 %v133, %v131
  %v184 = vpack.c.b16 %v134, %v132
  %v185 = vpack.c.b16 %v137, %v135
  %v186 = vpack.c.b16 %v138, %v136
  %v187 = vpack.c.b16 %v141, %v139
  %v188 = vpack.c.b16 %v142, %v140
  %v189 = vpack.c.b16 %v145, %v143
  %v190 = vpack.c.b16 %v146, %v144
  %v191 = vpack.c.b16 %v149, %v147
  %v192 = vpack.c.b16 %v150, %v148
  %v193 = vpack.c.b16 %v153, %v151
  %v194 = vpack.c.b16 %v154, %v152
  %v195 = vpack.c.b16 %v157, %v155
  %v196 = vpack.c.b16 %v158, %v156
  %v197 = vpack.c.b16 %v161, %v159
  %v198 = vpack.c.b16 %v162, %v160
  %v199 = vpack.c.b16 %v165, %v163
  %v200 = vpack.c.b16 %v166, %v164
  %v201 = vpack.c.b16 %v169, %v167
  %v202 = vpack.c.b16 %v170, %v168
  %v267 = vunpack.c.l.b16 %v43
  %v268 = vunpack.c.h.b16 %v43
  %v269 = vunpack.c.l.b16 %v44
  %v270 = vunpack.c.h.b16 %v44
  %v271 = vunpack.c.l.b16 %v45
  %v272 = vunpack.c.h.b16 %v45
  %v273 = vunpack.c.l.b16 %v46
  %v274 = vunpack.c.h.b16 %v46
  %v275 = vunpack.c.l.b16 %v47
  %v276 = vunpack.c.h.b16 %v47
  %v277 = vunpack.c.l.b16 %v48
  %v278 = vunpack.c.h.b16 %v48
  %v279 = vunpack.c.l.b16 %v49
  %v280 = vunpack.c.h.b16 %v49
  %v281 = vunpack.c.l.b16 %v50
  %v282 = vunpack.c.h.b16 %v50
  %v283 = vunpack.c.l.b16 %v51
  %v284 = vunpack.c.h.b16 %v51
  %v285 = vunpack.c.l.b16 %v52
  %v286 = vunpack.c.h.b16 %v52
  %v287 = vunpack.c.l.b16 %v53
  %v288 = vunpack.c.h.b16 %v53
  %v289 = vunpack.c.l.b16 %v54
  %v290 = vunpack.c.h.b16 %v54
  %v291 = vunpack.c.l.b16 %v55
  %v292 = vunpack.c.h.b16 %v55
  %v293 = vunpack.c.l.b16 %v56
  %v294 = vunpack.c.h.b16 %v56
  %v295 = vunpack.c.l.b16 %v57
  %v296 = vunpack.c.h.b16 %v57
  %v297 = vunpack.c.l.b16 %v58
  %v298 = vunpack.c.h.b16 %v58
  %v299 = vunpack.c.l.b16 %v59
  %v300 = vunpack.c.h.b16 %v59
  %v301 = vunpack.c.l.b16 %v60
  %v302 = vunpack.c.h.b16 %v60
  %v303 = vunpack.c.l.b16 %v61
  %v304 = vunpack.c.h.b16 %v61
  %v305 = vunpack.c.l.b16 %v62
  %v306 = vunpack.c.h.b16 %v62
  %v307 = vunpack.c.l.b16 %v63
  %v308 = vunpack.c.h.b16 %v63
  %v309 = vunpack.c.l.b16 %v64
  %v310 = vunpack.c.h.b16 %v64
  %v311 = vunpack.c.l.b16 %v65
  %v312 = vunpack.c.h.b16 %v65
  %v313 = vunpack.c.l.b16 %v66
  %v314 = vunpack.c.h.b16 %v66
  %v315 = vunpack.c.l.b16 %v67
  %v316 = vunpack.c.h.b16 %v67
  %v317 = vunpack.c.l.b16 %v68
  %v318 = vunpack.c.h.b16 %v68
  %v319 = vunpack.c.l.b16 %v69
  %v320 = vunpack.c.h.b16 %v69
  %v321 = vunpack.c.l.b16 %v70
  %v322 = vunpack.c.h.b16 %v70
  %v323 = vunpack.c.l.b16 %v71
  %v324 = vunpack.c.h.b16 %v71
  %v325 = vunpack.c.l.b16 %v72
  %v326 = vunpack.c.h.b16 %v72
  %v327 = vunpack.c.l.b16 %v73
  %v328 = vunpack.c.h.b16 %v73
  %v329 = vunpack.c.l.b16 %v74
  %v330 = vunpack.c.h.b16 %v74
  %v331 = vpack.c.b16 %v269, %v267
  %v332 = vpack.c.b16 %v270, %v268
  %v333 = vpack.c.b16 %v273, %v271
  %v334 = vpack.c.b16 %v274, %v272
  %v335 = vpack.c.b16 %v277, %v275
  %v336 = vpack.c.b16 %v278, %v276
  %v337 = vpack.c.b16 %v281, %v279
  %v338 = vpack.c.b16 %v282, %v280
  %v339 = vpack.c.b16 %v285, %v283
  %v340 = vpack.c.b16 %v286, %v284
  %v341 = vpack.c.b16 %v289, %v287
  %v342 = vpack.c.b16 %v290, %v288
  %v343 = vpack.c.b16 %v293, %v291
  %v344 = vpack.c.b16 %v294, %v292
  %v345 = vpack.c.b16 %v297, %v295
  %v346 = vpack.c.b16 %v298, %v296
  %v347 = vpack.c.b16 %v301, %v299
  %v348 = vpack.c.b16 %v302, %v300
  %v349 = vpack.c.b16 %v305, %v303
  %v350 = vpack.c.b16 %v306, %v304
  %v351 = vpack.c.b16 %v309, %v307
  %v352 = vpack.c.b16 %v310, %v308
  %v353 = vpack.c.b16 %v313, %v311
  %v354 = vpack.c.b16 %v314, %v312
  %v355 = vpack.c.b16 %v317, %v315
  %v356 = vpack.c.b16 %v318, %v316
  %v357 = vpack.c.b16 %v321, %v319
  %v358 = vpack.c.b16 %v322, %v320
  %v359 = vpack.c.b16 %v325, %v323
  %v360 = vpack.c.b16 %v326, %v324
  %v361 = vpack.c.b16 %v329, %v327
  %v362 = vpack.c.b16 %v330, %v328
  %395 = vmatprep.subr.bf16.mxu0 %v332
  %396 = vmatpush1.bf16.msra.mxu0 %v331
  %397 = vmatprep.subr.bf16.mxu0 %v334
  %398 = vmatpush1.bf16.msra.mxu0 %v333
  %399 = vmatprep.subr.bf16.mxu0 %v336
  %400 = vmatpush1.bf16.msra.mxu0 %v335
  %401 = vmatprep.subr.bf16.mxu0 %v338
  %402 = vmatpush1.bf16.msra.mxu0 %v337
  %403 = vmatprep.subr.bf16.mxu0 %v340
  %404 = vmatpush1.bf16.msra.mxu0 %v339
  %405 = vmatprep.subr.bf16.mxu0 %v342
  %406 = vmatpush1.bf16.msra.mxu0 %v341
  %407 = vmatprep.subr.bf16.mxu0 %v344
  %408 = vmatpush1.bf16.msra.mxu0 %v343
  %409 = vmatprep.subr.bf16.mxu0 %v346
  %410 = vmatpush1.bf16.msra.mxu0 %v345
  %411 = vmatprep.subr.bf16.mxu0 %v348
  %412 = vmatpush1.bf16.msra.mxu0 %v347
  %413 = vmatprep.subr.bf16.mxu0 %v350
  %414 = vmatpush1.bf16.msra.mxu0 %v349
  %415 = vmatprep.subr.bf16.mxu0 %v352
  %416 = vmatpush1.bf16.msra.mxu0 %v351
  %417 = vmatprep.subr.bf16.mxu0 %v354
  %418 = vmatpush1.bf16.msra.mxu0 %v353
  %419 = vmatprep.subr.bf16.mxu0 %v356
  %420 = vmatpush1.bf16.msra.mxu0 %v355
  %421 = vmatprep.subr.bf16.mxu0 %v358
  %422 = vmatpush1.bf16.msra.mxu0 %v357
  %423 = vmatprep.subr.bf16.mxu0 %v360
  %424 = vmatpush1.bf16.msra.mxu0 %v359
  %425 = vmatprep.subr.bf16.mxu0 %v362
  %426 = vmatpush1.bf16.msra.mxu0 %v361
  %427 = vmatprep.mubr.bf16.mxu0 %v172
  %428 = vmatmul.mubr.bf16.gmra.mrb[0].mxu0 %v171
  %v429 = vpop.f32.mrb[0].mxu0
  %v430 = vadd.f32 0.0, %v429
  %v431 = vpop.f32.mrb[0].mxu0
  %v432 = vadd.f32 0.0, %v431
  %v433 = vpop.f32.mrb[0].mxu0
  %v434 = vadd.f32 0.0, %v433
  %v435 = vpop.f32.mrb[0].mxu0
  %v436 = vadd.f32 0.0, %v435
  %437 = vmatprep.mubr.bf16.mxu0 %v174
  %438 = vmatmul.mubr.bf16.gmra.mrb[0].mxu0 %v173
  %v439 = vpop.f32.mrb[0].mxu0
  %v440 = vadd.f32 0.0, %v439
  %v441 = vpop.f32.mrb[0].mxu0
  %v442 = vadd.f32 0.0, %v441
  %v443 = vpop.f32.mrb[0].mxu0
  %v444 = vadd.f32 0.0, %v443
  %v445 = vpop.f32.mrb[0].mxu0
  %v446 = vadd.f32 0.0, %v445
  %447 = vmatprep.mubr.bf16.mxu0 %v176
  %448 = vmatmul.mubr.bf16.gmra.mrb[0].mxu0 %v175
  %v449 = vpop.f32.mrb[0].mxu0
  %v450 = vadd.f32 0.0, %v449
  %v451 = vpop.f32.mrb[0].mxu0
  %v452 = vadd.f32 0.0, %v451
  %v453 = vpop.f32.mrb[0].mxu0
  %v454 = vadd.f32 0.0, %v453
  %v455 = vpop.f32.mrb[0].mxu0
  %v456 = vadd.f32 0.0, %v455
  %457 = vmatprep.mubr.bf16.mxu0 %v178
  %458 = vmatmul.mubr.bf16.gmra.mrb[0].mxu0 %v177
  %v459 = vpop.f32.mrb[0].mxu0
  %v460 = vadd.f32 0.0, %v459
  %v461 = vpop.f32.mrb[0].mxu0
  %v462 = vadd.f32 0.0, %v461
  %v463 = vpop.f32.mrb[0].mxu0
  %v464 = vadd.f32 0.0, %v463
  %v465 = vpop.f32.mrb[0].mxu0
  %v466 = vadd.f32 0.0, %v465
  %467 = vmatprep.mubr.bf16.mxu0 %v180
  %468 = vmatmul.mubr.bf16.gmra.mrb[0].mxu0 %v179
  %v469 = vpop.f32.mrb[0].mxu0
  %v470 = vadd.f32 0.0, %v469
  %v471 = vpop.f32.mrb[0].mxu0
  %v472 = vadd.f32 0.0, %v471
  %v473 = vpop.f32.mrb[0].mxu0
  %v474 = vadd.f32 0.0, %v473
  %v475 = vpop.f32.mrb[0].mxu0
  %v476 = vadd.f32 0.0, %v475
  %477 = vmatprep.mubr.bf16.mxu0 %v182
  %478 = vmatmul.mubr.bf16.gmra.mrb[0].mxu0 %v181
  %v479 = vpop.f32.mrb[0].mxu0
  %v480 = vadd.f32 0.0, %v479
  %v481 = vpop.f32.mrb[0].mxu0
  %v482 = vadd.f32 0.0, %v481
  %v483 = vpop.f32.mrb[0].mxu0
  %v484 = vadd.f32 0.0, %v483
  %v485 = vpop.f32.mrb[0].mxu0
  %v486 = vadd.f32 0.0, %v485
  %487 = vmatprep.mubr.bf16.mxu0 %v184
  %488 = vmatmul.mubr.bf16.gmra.mrb[0].mxu0 %v183
  %v489 = vpop.f32.mrb[0].mxu0
  %v490 = vadd.f32 0.0, %v489
  %v491 = vpop.f32.mrb[0].mxu0
  %v492 = vadd.f32 0.0, %v491
  %v493 = vpop.f32.mrb[0].mxu0
  %v494 = vadd.f32 0.0, %v493
  %v495 = vpop.f32.mrb[0].mxu0
  %v496 = vadd.f32 0.0, %v495
  %497 = vmatprep.mubr.bf16.mxu0 %v186
  %498 = vmatmul.mubr.bf16.gmra.mrb[0].mxu0 %v185
  %v499 = vpop.f32.mrb[0].mxu0
  %v500 = vadd.f32 0.0, %v499
  %v501 = vpop.f32.mrb[0].mxu0
  %v502 = vadd.f32 0.0, %v501
  %v503 = vpop.f32.mrb[0].mxu0
  %v504 = vadd.f32 0.0, %v503
  %v505 = vpop.f32.mrb[0].mxu0
  %v506 = vadd.f32 0.0, %v505
  %507 = vmatprep.mubr.bf16.mxu0 %v188
  %508 = vmatmul.mubr.bf16.gmra.mrb[0].mxu0 %v187
  %v509 = vpop.f32.mrb[0].mxu0
  %v510 = vadd.f32 0.0, %v509
  %v511 = vpop.f32.mrb[0].mxu0
  %v512 = vadd.f32 0.0, %v511
  %v513 = vpop.f32.mrb[0].mxu0
  %v514 = vadd.f32 0.0, %v513
  %v515 = vpop.f32.mrb[0].mxu0
  %v516 = vadd.f32 0.0, %v515
  %517 = vmatprep.mubr.bf16.mxu0 %v190
  %518 = vmatmul.mubr.bf16.gmra.mrb[0].mxu0 %v189
  %v519 = vpop.f32.mrb[0].mxu0
  %v520 = vadd.f32 0.0, %v519
  %v521 = vpop.f32.mrb[0].mxu0
  %v522 = vadd.f32 0.0, %v521
  %v523 = vpop.f32.mrb[0].mxu0
  %v524 = vadd.f32 0.0, %v523
  %v525 = vpop.f32.mrb[0].mxu0
  %v526 = vadd.f32 0.0, %v525
  %527 = vmatprep.mubr.bf16.mxu0 %v192
  %528 = vmatmul.mubr.bf16.gmra.mrb[0].mxu0 %v191
  %v529 = vpop.f32.mrb[0].mxu0
  %v530 = vadd.f32 0.0, %v529
  %v531 = vpop.f32.mrb[0].mxu0
  %v532 = vadd.f32 0.0, %v531
  %v533 = vpop.f32.mrb[0].mxu0
  %v534 = vadd.f32 0.0, %v533
  %v535 = vpop.f32.mrb[0].mxu0
  %v536 = vadd.f32 0.0, %v535
  %537 = vmatprep.mubr.bf16.mxu0 %v194
  %538 = vmatmul.mubr.bf16.gmra.mrb[0].mxu0 %v193
  %v539 = vpop.f32.mrb[0].mxu0
  %v540 = vadd.f32 0.0, %v539
  %v541 = vpop.f32.mrb[0].mxu0
  %v542 = vadd.f32 0.0, %v541
  %v543 = vpop.f32.mrb[0].mxu0
  %v544 = vadd.f32 0.0, %v543
  %v545 = vpop.f32.mrb[0].mxu0
  %v546 = vadd.f32 0.0, %v545
  %547 = vmatprep.mubr.bf16.mxu0 %v196
  %548 = vmatmul.mubr.bf16.gmra.mrb[0].mxu0 %v195
  %v549 = vpop.f32.mrb[0].mxu0
  %v550 = vadd.f32 0.0, %v549
  %v551 = vpop.f32.mrb[0].mxu0
  %v552 = vadd.f32 0.0, %v551
  %v553 = vpop.f32.mrb[0].mxu0
  %v554 = vadd.f32 0.0, %v553
  %v555 = vpop.f32.mrb[0].mxu0
  %v556 = vadd.f32 0.0, %v555
  %557 = vmatprep.mubr.bf16.mxu0 %v198
  %558 = vmatmul.mubr.bf16.gmra.mrb[0].mxu0 %v197
  %v559 = vpop.f32.mrb[0].mxu0
  %v560 = vadd.f32 0.0, %v559
  %v561 = vpop.f32.mrb[0].mxu0
  %v562 = vadd.f32 0.0, %v561
  %v563 = vpop.f32.mrb[0].mxu0
  %v564 = vadd.f32 0.0, %v563
  %v565 = vpop.f32.mrb[0].mxu0
  %v566 = vadd.f32 0.0, %v565
  %567 = vmatprep.mubr.bf16.mxu0 %v200
  %568 = vmatmul.mubr.bf16.gmra.mrb[0].mxu0 %v199
  %v569 = vpop.f32.mrb[0].mxu0
  %v570 = vadd.f32 0.0, %v569
  %v571 = vpop.f32.mrb[0].mxu0
  %v572 = vadd.f32 0.0, %v571
  %v573 = vpop.f32.mrb[0].mxu0
  %v574 = vadd.f32 0.0, %v573
  %v575 = vpop.f32.mrb[0].mxu0
  %v576 = vadd.f32 0.0, %v575
  %577 = vmatprep.mubr.bf16.mxu0 %v202
  %578 = vmatmul.mubr.bf16.gmra.mrb[0].mxu0 %v201
  %v579 = vpop.f32.mrb[0].mxu0
  %v580 = vadd.f32 0.0, %v579
  %v581 = vpop.f32.mrb[0].mxu0
  %v582 = vadd.f32 0.0, %v581
  %v583 = vpop.f32.mrb[0].mxu0
  %v584 = vadd.f32 0.0, %v583
  %v585 = vpop.f32.mrb[0].mxu0
  %v586 = vadd.f32 0.0, %v585
  %587 = vdwg.mxu0
  %588 = vst [vmem:[%s2] sm:$0xff] %v430
  %589 = vst [vmem:[%s2 + $0x8] sm:$0xff] %v432
  %590 = vst [vmem:[%s2 + $0x10] sm:$0xff] %v434
  %591 = vst [vmem:[%s2 + $0x18] sm:$0xff] %v436
  %592 = vst [vmem:[%s2 + $0x20] sm:$0xff] %v440
  %593 = vst [vmem:[%s2 + $0x28] sm:$0xff] %v442
  %594 = vst [vmem:[%s2 + $0x30] sm:$0xff] %v444
  %595 = vst [vmem:[%s2 + $0x38] sm:$0xff] %v446
  %596 = vst [vmem:[%s2 + $0x40] sm:$0xff] %v450
  %597 = vst [vmem:[%s2 + $0x48] sm:$0xff] %v452
  %598 = vst [vmem:[%s2 + $0x50] sm:$0xff] %v454
  %599 = vst [vmem:[%s2 + $0x58] sm:$0xff] %v456
  %600 = vst [vmem:[%s2 + $0x60] sm:$0xff] %v460
  %601 = vst [vmem:[%s2 + $0x68] sm:$0xff] %v462
  %602 = vst [vmem:[%s2 + $0x70] sm:$0xff] %v464
  %603 = vst [vmem:[%s2 + $0x78] sm:$0xff] %v466
  %604 = vst [vmem:[%s2 + $0x80] sm:$0xff] %v470
  %605 = vst [vmem:[%s2 + $0x88] sm:$0xff] %v472
  %606 = vst [vmem:[%s2 + $0x90] sm:$0xff] %v474
  %607 = vst [vmem:[%s2 + $0x98] sm:$0xff] %v476
  %608 = vst [vmem:[%s2 + $0xa0] sm:$0xff] %v480
  %609 = vst [vmem:[%s2 + $0xa8] sm:$0xff] %v482
  %610 = vst [vmem:[%s2 + $0xb0] sm:$0xff] %v484
  %611 = vst [vmem:[%s2 + $0xb8] sm:$0xff] %v486
  %612 = vst [vmem:[%s2 + $0xc0] sm:$0xff] %v490
  %613 = vst [vmem:[%s2 + $0xc8] sm:$0xff] %v492
  %614 = vst [vmem:[%s2 + $0xd0] sm:$0xff] %v494
  %615 = vst [vmem:[%s2 + $0xd8] sm:$0xff] %v496
  %616 = vst [vmem:[%s2 + $0xe0] sm:$0xff] %v500
  %617 = vst [vmem:[%s2 + $0xe8] sm:$0xff] %v502
  %618 = vst [vmem:[%s2 + $0xf0] sm:$0xff] %v504
  %619 = vst [vmem:[%s2 + $0xf8] sm:$0xff] %v506
  %620 = vst [vmem:[%s2 + $0x100] sm:$0xff] %v510
  %621 = vst [vmem:[%s2 + $0x108] sm:$0xff] %v512
  %622 = vst [vmem:[%s2 + $0x110] sm:$0xff] %v514
  %623 = vst [vmem:[%s2 + $0x118] sm:$0xff] %v516
  %624 = vst [vmem:[%s2 + $0x120] sm:$0xff] %v520
  %625 = vst [vmem:[%s2 + $0x128] sm:$0xff] %v522
  %626 = vst [vmem:[%s2 + $0x130] sm:$0xff] %v524
  %627 = vst [vmem:[%s2 + $0x138] sm:$0xff] %v526
  %628 = vst [vmem:[%s2 + $0x140] sm:$0xff] %v530
  %629 = vst [vmem:[%s2 + $0x148] sm:$0xff] %v532
  %630 = vst [vmem:[%s2 + $0x150] sm:$0xff] %v534
  %631 = vst [vmem:[%s2 + $0x158] sm:$0xff] %v536
  %632 = vst [vmem:[%s2 + $0x160] sm:$0xff] %v540
  %633 = vst [vmem:[%s2 + $0x168] sm:$0xff] %v542
  %634 = vst [vmem:[%s2 + $0x170] sm:$0xff] %v544
  %635 = vst [vmem:[%s2 + $0x178] sm:$0xff] %v546
  %636 = vst [vmem:[%s2 + $0x180] sm:$0xff] %v550
  %637 = vst [vmem:[%s2 + $0x188] sm:$0xff] %v552
  %638 = vst [vmem:[%s2 + $0x190] sm:$0xff] %v554
  %639 = vst [vmem:[%s2 + $0x198] sm:$0xff] %v556
  %640 = vst [vmem:[%s2 + $0x1a0] sm:$0xff] %v560
  %641 = vst [vmem:[%s2 + $0x1a8] sm:$0xff] %v562
  %642 = vst [vmem:[%s2 + $0x1b0] sm:$0xff] %v564
  %643 = vst [vmem:[%s2 + $0x1b8] sm:$0xff] %v566
  %644 = vst [vmem:[%s2 + $0x1c0] sm:$0xff] %v570
  %645 = vst [vmem:[%s2 + $0x1c8] sm:$0xff] %v572
  %646 = vst [vmem:[%s2 + $0x1d0] sm:$0xff] %v574
  %647 = vst [vmem:[%s2 + $0x1d8] sm:$0xff] %v576
  %648 = vst [vmem:[%s2 + $0x1e0] sm:$0xff] %v580
  %649 = vst [vmem:[%s2 + $0x1e8] sm:$0xff] %v582
  %650 = vst [vmem:[%s2 + $0x1f0] sm:$0xff] %v584
  %651 = vst [vmem:[%s2 + $0x1f8] sm:$0xff] %v586
  // Predicated region
  $region10: #{proto_igcn_forward.7} parent=0 // pred_check
    _
  $region11: #{proto_igcn_forward.7} parent=0 // pred_check_branch
    %653 = sbr.rel (0) target = $region13
  $region12: #{proto_igcn_forward.7} parent=0 // pred_region
    _
  $region13: #{proto_igcn_forward.7} parent=0 // pred_fallthru
    _
  // Predicated region
  $region14: #{proto_igcn_forward.7} parent=0 // pred_check
    _
  $region15: #{proto_igcn_forward.7} parent=0 // pred_check_branch
    %655 = sbr.rel (0) target = $region17
  $region16: #{proto_igcn_forward.7} parent=0 // pred_region
    _
  $region17: #{proto_igcn_forward.7} parent=0 // pred_fallthru
    _

// kernel: proto_igcn_forward.8
$region0: #{proto_igcn_forward.8}
  #allocation0 [shape = 'u32[]', space=smem, size = 0x4, offset = 0x4, fixed_abs, tag = 'smem constant byte address 0x4 - core index']
  #allocation1 [shape = 'u32[144,128]{1,0:T(1,128)}', space=vmem, size = 0x12000, scoped, tag = 'internal scratch']
  %s0 = inlined_call_operand.vmem [shape: bf16[256,256], index: 0, kind: input, shape index: {}]
  %s1 = inlined_call_operand.vmem [shape: bf16[256,128], index: 1, kind: input, shape index: {}]
  %s2 = inlined_call_operand.vmem [shape: f32[256,128], index: 2, kind: output, shape index: {}]
  %s3 = sld [smem:[#allocation0]]
  $region18: #{proto_igcn_forward.8} parent=0
    _
  %s5 = ssub.s32 1, %s3
  %s6 = scalar_select 0, %s5, %s3
  // Predicated region
  $region2: #{proto_igcn_forward.8} parent=0 // pred_check
    _
  $region3: #{proto_igcn_forward.8} parent=0 // pred_check_branch
    %8 = sbr.rel (0) target = $region5
  $region4: #{proto_igcn_forward.8} parent=0 // pred_region
    _
  $region5: #{proto_igcn_forward.8} parent=0 // pred_fallthru
    _
  // Predicated region
  $region6: #{proto_igcn_forward.8} parent=0 // pred_check
    _
  $region7: #{proto_igcn_forward.8} parent=0 // pred_check_branch
    %10 = sbr.rel (0) target = $region9
  $region8: #{proto_igcn_forward.8} parent=0 // pred_region
    _
  $region9: #{proto_igcn_forward.8} parent=0 // pred_fallthru
    _
  %v12 = vld [vmem:[%s0] sm:$0xff]
  %v13 = vld [vmem:[%s0 + $0x8] sm:$0xff]
  %v14 = vld [vmem:[%s0 + $0x10] sm:$0xff]
  %v15 = vld [vmem:[%s0 + $0x18] sm:$0xff]
  %v16 = vld [vmem:[%s0 + $0x20] sm:$0xff]
  %v17 = vld [vmem:[%s0 + $0x28] sm:$0xff]
  %v18 = vld [vmem:[%s0 + $0x30] sm:$0xff]
  %v19 = vld [vmem:[%s0 + $0x38] sm:$0xff]
  %v20 = vld [vmem:[%s0 + $0x40] sm:$0xff]
  %v21 = vld [vmem:[%s0 + $0x48] sm:$0xff]
  %v22 = vld [vmem:[%s0 + $0x50] sm:$0xff]
  %v23 = vld [vmem:[%s0 + $0x58] sm:$0xff]
  %v24 = vld [vmem:[%s0 + $0x60] sm:$0xff]
  %v25 = vld [vmem:[%s0 + $0x68] sm:$0xff]
  %v26 = vld [vmem:[%s0 + $0x70] sm:$0xff]
  %v27 = vld [vmem:[%s0 + $0x78] sm:$0xff]
  %v28 = vld [vmem:[%s0 + $0x80] sm:$0xff]
  %v29 = vld [vmem:[%s0 + $0x88] sm:$0xff]
  %v30 = vld [vmem:[%s0 + $0x90] sm:$0xff]
  %v31 = vld [vmem:[%s0 + $0x98] sm:$0xff]
  %v32 = vld [vmem:[%s0 + $0xa0] sm:$0xff]
  %v33 = vld [vmem:[%s0 + $0xa8] sm:$0xff]
  %v34 = vld [vmem:[%s0 + $0xb0] sm:$0xff]
  %v35 = vld [vmem:[%s0 + $0xb8] sm:$0xff]
  %v36 = vld [vmem:[%s0 + $0xc0] sm:$0xff]
  %v37 = vld [vmem:[%s0 + $0xc8] sm:$0xff]
  %v38 = vld [vmem:[%s0 + $0xd0] sm:$0xff]
  %v39 = vld [vmem:[%s0 + $0xd8] sm:$0xff]
  %v40 = vld [vmem:[%s0 + $0xe0] sm:$0xff]
  %v41 = vld [vmem:[%s0 + $0xe8] sm:$0xff]
  %v42 = vld [vmem:[%s0 + $0xf0] sm:$0xff]
  %v43 = vld [vmem:[%s0 + $0xf8] sm:$0xff]
  %v44 = vld [vmem:[%s1] sm:$0xf]
  %v45 = vld [vmem:[%s1 + $0x4] sm:$0xf]
  %v46 = vld [vmem:[%s1 + $0x8] sm:$0xf]
  %v47 = vld [vmem:[%s1 + $0xc] sm:$0xf]
  %v48 = vld [vmem:[%s1 + $0x10] sm:$0xf]
  %v49 = vld [vmem:[%s1 + $0x14] sm:$0xf]
  %v50 = vld [vmem:[%s1 + $0x18] sm:$0xf]
  %v51 = vld [vmem:[%s1 + $0x1c] sm:$0xf]
  %v52 = vld [vmem:[%s1 + $0x20] sm:$0xf]
  %v53 = vld [vmem:[%s1 + $0x24] sm:$0xf]
  %v54 = vld [vmem:[%s1 + $0x28] sm:$0xf]
  %v55 = vld [vmem:[%s1 + $0x2c] sm:$0xf]
  %v56 = vld [vmem:[%s1 + $0x30] sm:$0xf]
  %v57 = vld [vmem:[%s1 + $0x34] sm:$0xf]
  %v58 = vld [vmem:[%s1 + $0x38] sm:$0xf]
  %v59 = vld [vmem:[%s1 + $0x3c] sm:$0xf]
  %v60 = vld [vmem:[%s1 + $0x40] sm:$0xf]
  %v61 = vld [vmem:[%s1 + $0x44] sm:$0xf]
  %v62 = vld [vmem:[%s1 + $0x48] sm:$0xf]
  %v63 = vld [vmem:[%s1 + $0x4c] sm:$0xf]
  %v64 = vld [vmem:[%s1 + $0x50] sm:$0xf]
  %v65 = vld [vmem:[%s1 + $0x54] sm:$0xf]
  %v66 = vld [vmem:[%s1 + $0x58] sm:$0xf]
  %v67 = vld [vmem:[%s1 + $0x5c] sm:$0xf]
  %v68 = vld [vmem:[%s1 + $0x60] sm:$0xf]
  %v69 = vld [vmem:[%s1 + $0x64] sm:$0xf]
  %v70 = vld [vmem:[%s1 + $0x68] sm:$0xf]
  %v71 = vld [vmem:[%s1 + $0x6c] sm:$0xf]
  %v72 = vld [vmem:[%s1 + $0x70] sm:$0xf]
  %v73 = vld [vmem:[%s1 + $0x74] sm:$0xf]
  %v74 = vld [vmem:[%s1 + $0x78] sm:$0xf]
  %v75 = vld [vmem:[%s1 + $0x7c] sm:$0xf]
  %v108 = vunpack.c.l.b16 %v12
  %v109 = vunpack.c.h.b16 %v12
  %v110 = vunpack.c.l.b16 %v13
  %v111 = vunpack.c.h.b16 %v13
  %v112 = vunpack.c.l.b16 %v14
  %v113 = vunpack.c.h.b16 %v14
  %v114 = vunpack.c.l.b16 %v15
  %v115 = vunpack.c.h.b16 %v15
  %v116 = vunpack.c.l.b16 %v16
  %v117 = vunpack.c.h.b16 %v16
  %v118 = vunpack.c.l.b16 %v17
  %v119 = vunpack.c.h.b16 %v17
  %v120 = vunpack.c.l.b16 %v18
  %v121 = vunpack.c.h.b16 %v18
  %v122 = vunpack.c.l.b16 %v19
  %v123 = vunpack.c.h.b16 %v19
  %v124 = vunpack.c.l.b16 %v20
  %v125 = vunpack.c.h.b16 %v20
  %v126 = vunpack.c.l.b16 %v21
  %v127 = vunpack.c.h.b16 %v21
  %v128 = vunpack.c.l.b16 %v22
  %v129 = vunpack.c.h.b16 %v22
  %v130 = vunpack.c.l.b16 %v23
  %v131 = vunpack.c.h.b16 %v23
  %v132 = vunpack.c.l.b16 %v24
  %v133 = vunpack.c.h.b16 %v24
  %v134 = vunpack.c.l.b16 %v25
  %v135 = vunpack.c.h.b16 %v25
  %v136 = vunpack.c.l.b16 %v26
  %v137 = vunpack.c.h.b16 %v26
  %v138 = vunpack.c.l.b16 %v27
  %v139 = vunpack.c.h.b16 %v27
  %v140 = vunpack.c.l.b16 %v28
  %v141 = vunpack.c.h.b16 %v28
  %v142 = vunpack.c.l.b16 %v29
  %v143 = vunpack.c.h.b16 %v29
  %v144 = vunpack.c.l.b16 %v30
  %v145 = vunpack.c.h.b16 %v30
  %v146 = vunpack.c.l.b16 %v31
  %v147 = vunpack.c.h.b16 %v31
  %v148 = vunpack.c.l.b16 %v32
  %v149 = vunpack.c.h.b16 %v32
  %v150 = vunpack.c.l.b16 %v33
  %v151 = vunpack.c.h.b16 %v33
  %v152 = vunpack.c.l.b16 %v34
  %v153 = vunpack.c.h.b16 %v34
  %v154 = vunpack.c.l.b16 %v35
  %v155 = vunpack.c.h.b16 %v35
  %v156 = vunpack.c.l.b16 %v36
  %v157 = vunpack.c.h.b16 %v36
  %v158 = vunpack.c.l.b16 %v37
  %v159 = vunpack.c.h.b16 %v37
  %v160 = vunpack.c.l.b16 %v38
  %v161 = vunpack.c.h.b16 %v38
  %v162 = vunpack.c.l.b16 %v39
  %v163 = vunpack.c.h.b16 %v39
  %v164 = vunpack.c.l.b16 %v40
  %v165 = vunpack.c.h.b16 %v40
  %v166 = vunpack.c.l.b16 %v41
  %v167 = vunpack.c.h.b16 %v41
  %v168 = vunpack.c.l.b16 %v42
  %v169 = vunpack.c.h.b16 %v42
  %v170 = vunpack.c.l.b16 %v43
  %v171 = vunpack.c.h.b16 %v43
  %v172 = vpack.c.b16 %v110, %v108
  %v173 = vpack.c.b16 %v111, %v109
  %v174 = vpack.c.b16 %v114, %v112
  %v175 = vpack.c.b16 %v115, %v113
  %v176 = vpack.c.b16 %v118, %v116
  %v177 = vpack.c.b16 %v119, %v117
  %v178 = vpack.c.b16 %v122, %v120
  %v179 = vpack.c.b16 %v123, %v121
  %v180 = vpack.c.b16 %v126, %v124
  %v181 = vpack.c.b16 %v127, %v125
  %v182 = vpack.c.b16 %v130, %v128
  %v183 = vpack.c.b16 %v131, %v129
  %v184 = vpack.c.b16 %v134, %v132
  %v185 = vpack.c.b16 %v135, %v133
  %v186 = vpack.c.b16 %v138, %v136
  %v187 = vpack.c.b16 %v139, %v137
  %v188 = vpack.c.b16 %v142, %v140
  %v189 = vpack.c.b16 %v143, %v141
  %v190 = vpack.c.b16 %v146, %v144
  %v191 = vpack.c.b16 %v147, %v145
  %v192 = vpack.c.b16 %v150, %v148
  %v193 = vpack.c.b16 %v151, %v149
  %v194 = vpack.c.b16 %v154, %v152
  %v195 = vpack.c.b16 %v155, %v153
  %v196 = vpack.c.b16 %v158, %v156
  %v197 = vpack.c.b16 %v159, %v157
  %v198 = vpack.c.b16 %v162, %v160
  %v199 = vpack.c.b16 %v163, %v161
  %v200 = vpack.c.b16 %v166, %v164
  %v201 = vpack.c.b16 %v167, %v165
  %v202 = vpack.c.b16 %v170, %v168
  %v203 = vpack.c.b16 %v171, %v169
  %v268 = vunpack.c.l.b16 %v44
  %v269 = vunpack.c.l.b16 %v45
  %v270 = vunpack.c.l.b16 %v46
  %v271 = vunpack.c.l.b16 %v47
  %v272 = vunpack.c.l.b16 %v48
  %v273 = vunpack.c.l.b16 %v49
  %v274 = vunpack.c.l.b16 %v50
  %v275 = vunpack.c.l.b16 %v51
  %v276 = vunpack.c.l.b16 %v52
  %v277 = vunpack.c.l.b16 %v53
  %v278 = vunpack.c.l.b16 %v54
  %v279 = vunpack.c.l.b16 %v55
  %v280 = vunpack.c.l.b16 %v56
  %v281 = vunpack.c.l.b16 %v57
  %v282 = vunpack.c.l.b16 %v58
  %v283 = vunpack.c.l.b16 %v59
  %v284 = vunpack.c.l.b16 %v60
  %v285 = vunpack.c.l.b16 %v61
  %v286 = vunpack.c.l.b16 %v62
  %v287 = vunpack.c.l.b16 %v63
  %v288 = vunpack.c.l.b16 %v64
  %v289 = vunpack.c.l.b16 %v65
  %v290 = vunpack.c.l.b16 %v66
  %v291 = vunpack.c.l.b16 %v67
  %v292 = vunpack.c.l.b16 %v68
  %v293 = vunpack.c.l.b16 %v69
  %v294 = vunpack.c.l.b16 %v70
  %v295 = vunpack.c.l.b16 %v71
  %v296 = vunpack.c.l.b16 %v72
  %v297 = vunpack.c.l.b16 %v73
  %v298 = vunpack.c.l.b16 %v74
  %v299 = vunpack.c.l.b16 %v75
  %v300 = vpack.c.b16 %v269, %v268
  %v301 = vpack.c.b16 %v271, %v270
  %v302 = vpack.c.b16 %v273, %v272
  %v303 = vpack.c.b16 %v275, %v274
  %v304 = vpack.c.b16 %v277, %v276
  %v305 = vpack.c.b16 %v279, %v278
  %v306 = vpack.c.b16 %v281, %v280
  %v307 = vpack.c.b16 %v283, %v282
  %v308 = vpack.c.b16 %v285, %v284
  %v309 = vpack.c.b16 %v287, %v286
  %v310 = vpack.c.b16 %v289, %v288
  %v311 = vpack.c.b16 %v291, %v290
  %v312 = vpack.c.b16 %v293, %v292
  %v313 = vpack.c.b16 %v295, %v294
  %v314 = vpack.c.b16 %v297, %v296
  %v315 = vpack.c.b16 %v299, %v298
  %332 = vmatprep.subr.bf16.mxu0 0
  %333 = vmatpush1.bf16.msra.mxu0 %v300
  %334 = vmatprep.subr.bf16.mxu0 0
  %335 = vmatpush1.bf16.msra.mxu0 %v301
  %336 = vmatprep.subr.bf16.mxu0 0
  %337 = vmatpush1.bf16.msra.mxu0 %v302
  %338 = vmatprep.subr.bf16.mxu0 0
  %339 = vmatpush1.bf16.msra.mxu0 %v303
  %340 = vmatprep.subr.bf16.mxu0 0
  %341 = vmatpush1.bf16.msra.mxu0 %v304
  %342 = vmatprep.subr.bf16.mxu0 0
  %343 = vmatpush1.bf16.msra.mxu0 %v305
  %344 = vmatprep.subr.bf16.mxu0 0
  %345 = vmatpush1.bf16.msra.mxu0 %v306
  %346 = vmatprep.subr.bf16.mxu0 0
  %347 = vmatpush1.bf16.msra.mxu0 %v307
  %348 = vmatprep.subr.bf16.mxu0 0
  %349 = vmatpush1.bf16.msra.mxu0 %v308
  %350 = vmatprep.subr.bf16.mxu0 0
  %351 = vmatpush1.bf16.msra.mxu0 %v309
  %352 = vmatprep.subr.bf16.mxu0 0
  %353 = vmatpush1.bf16.msra.mxu0 %v310
  %354 = vmatprep.subr.bf16.mxu0 0
  %355 = vmatpush1.bf16.msra.mxu0 %v311
  %356 = vmatprep.subr.bf16.mxu0 0
  %357 = vmatpush1.bf16.msra.mxu0 %v312
  %358 = vmatprep.subr.bf16.mxu0 0
  %359 = vmatpush1.bf16.msra.mxu0 %v313
  %360 = vmatprep.subr.bf16.mxu0 0
  %361 = vmatpush1.bf16.msra.mxu0 %v314
  %362 = vmatprep.subr.bf16.mxu0 0
  %363 = vmatpush1.bf16.msra.mxu0 %v315
  %364 = vmatprep.mubr.bf16.mxu0 %v173
  %365 = vmatmul.mubr.bf16.gmra.mrb[0].mxu0 %v172
  %v366 = vpop.f32.mrb[0].mxu0
  %v367 = vadd.f32 0.0, %v366
  %v368 = vpop.f32.mrb[0].mxu0
  %v369 = vpop.f32.mrb[0].mxu0
  %v370 = vadd.f32 0.0, %v369
  %v371 = vpop.f32.mrb[0].mxu0
  %372 = vmatprep.mubr.bf16.mxu0 %v175
  %373 = vmatmul.mubr.bf16.gmra.mrb[0].mxu0 %v174
  %v374 = vpop.f32.mrb[0].mxu0
  %v375 = vadd.f32 0.0, %v374
  %v376 = vpop.f32.mrb[0].mxu0
  %v377 = vpop.f32.mrb[0].mxu0
  %v378 = vadd.f32 0.0, %v377
  %v379 = vpop.f32.mrb[0].mxu0
  %380 = vmatprep.mubr.bf16.mxu0 %v177
  %381 = vmatmul.mubr.bf16.gmra.mrb[0].mxu0 %v176
  %v382 = vpop.f32.mrb[0].mxu0
  %v383 = vadd.f32 0.0, %v382
  %v384 = vpop.f32.mrb[0].mxu0
  %v385 = vpop.f32.mrb[0].mxu0
  %v386 = vadd.f32 0.0, %v385
  %v387 = vpop.f32.mrb[0].mxu0
  %388 = vmatprep.mubr.bf16.mxu0 %v179
  %389 = vmatmul.mubr.bf16.gmra.mrb[0].mxu0 %v178
  %v390 = vpop.f32.mrb[0].mxu0
  %v391 = vadd.f32 0.0, %v390
  %v392 = vpop.f32.mrb[0].mxu0
  %v393 = vpop.f32.mrb[0].mxu0
  %v394 = vadd.f32 0.0, %v393
  %v395 = vpop.f32.mrb[0].mxu0
  %396 = vmatprep.mubr.bf16.mxu0 %v181
  %397 = vmatmul.mubr.bf16.gmra.mrb[0].mxu0 %v180
  %v398 = vpop.f32.mrb[0].mxu0
  %v399 = vadd.f32 0.0, %v398
  %v400 = vpop.f32.mrb[0].mxu0
  %v401 = vpop.f32.mrb[0].mxu0
  %v402 = vadd.f32 0.0, %v401
  %v403 = vpop.f32.mrb[0].mxu0
  %404 = vmatprep.mubr.bf16.mxu0 %v183
  %405 = vmatmul.mubr.bf16.gmra.mrb[0].mxu0 %v182
  %v406 = vpop.f32.mrb[0].mxu0
  %v407 = vadd.f32 0.0, %v406
  %v408 = vpop.f32.mrb[0].mxu0
  %v409 = vpop.f32.mrb[0].mxu0
  %v410 = vadd.f32 0.0, %v409
  %v411 = vpop.f32.mrb[0].mxu0
  %412 = vmatprep.mubr.bf16.mxu0 %v185
  %413 = vmatmul.mubr.bf16.gmra.mrb[0].mxu0 %v184
  %v414 = vpop.f32.mrb[0].mxu0
  %v415 = vadd.f32 0.0, %v414
  %v416 = vpop.f32.mrb[0].mxu0
  %v417 = vpop.f32.mrb[0].mxu0
  %v418 = vadd.f32 0.0, %v417
  %v419 = vpop.f32.mrb[0].mxu0
  %420 = vmatprep.mubr.bf16.mxu0 %v187
  %421 = vmatmul.mubr.bf16.gmra.mrb[0].mxu0 %v186
  %v422 = vpop.f32.mrb[0].mxu0
  %v423 = vadd.f32 0.0, %v422
  %v424 = vpop.f32.mrb[0].mxu0
  %v425 = vpop.f32.mrb[0].mxu0
  %v426 = vadd.f32 0.0, %v425
  %v427 = vpop.f32.mrb[0].mxu0
  %428 = vmatprep.mubr.bf16.mxu0 %v189
  %429 = vmatmul.mubr.bf16.gmra.mrb[0].mxu0 %v188
  %v430 = vpop.f32.mrb[0].mxu0
  %v431 = vadd.f32 0.0, %v430
  %v432 = vpop.f32.mrb[0].mxu0
  %v433 = vpop.f32.mrb[0].mxu0
  %v434 = vadd.f32 0.0, %v433
  %v435 = vpop.f32.mrb[0].mxu0
  %436 = vmatprep.mubr.bf16.mxu0 %v191
  %437 = vmatmul.mubr.bf16.gmra.mrb[0].mxu0 %v190
  %v438 = vpop.f32.mrb[0].mxu0
  %v439 = vadd.f32 0.0, %v438
  %v440 = vpop.f32.mrb[0].mxu0
  %v441 = vpop.f32.mrb[0].mxu0
  %v442 = vadd.f32 0.0, %v441
  %v443 = vpop.f32.mrb[0].mxu0
  %444 = vmatprep.mubr.bf16.mxu0 %v193
  %445 = vmatmul.mubr.bf16.gmra.mrb[0].mxu0 %v192
  %v446 = vpop.f32.mrb[0].mxu0
  %v447 = vadd.f32 0.0, %v446
  %v448 = vpop.f32.mrb[0].mxu0
  %v449 = vpop.f32.mrb[0].mxu0
  %v450 = vadd.f32 0.0, %v449
  %v451 = vpop.f32.mrb[0].mxu0
  %452 = vmatprep.mubr.bf16.mxu0 %v195
  %453 = vmatmul.mubr.bf16.gmra.mrb[0].mxu0 %v194
  %v454 = vpop.f32.mrb[0].mxu0
  %v455 = vadd.f32 0.0, %v454
  %v456 = vpop.f32.mrb[0].mxu0
  %v457 = vpop.f32.mrb[0].mxu0
  %v458 = vadd.f32 0.0, %v457
  %v459 = vpop.f32.mrb[0].mxu0
  %460 = vmatprep.mubr.bf16.mxu0 %v197
  %461 = vmatmul.mubr.bf16.gmra.mrb[0].mxu0 %v196
  %v462 = vpop.f32.mrb[0].mxu0
  %v463 = vadd.f32 0.0, %v462
  %v464 = vpop.f32.mrb[0].mxu0
  %v465 = vpop.f32.mrb[0].mxu0
  %v466 = vadd.f32 0.0, %v465
  %v467 = vpop.f32.mrb[0].mxu0
  %468 = vmatprep.mubr.bf16.mxu0 %v199
  %469 = vmatmul.mubr.bf16.gmra.mrb[0].mxu0 %v198
  %v470 = vpop.f32.mrb[0].mxu0
  %v471 = vadd.f32 0.0, %v470
  %v472 = vpop.f32.mrb[0].mxu0
  %v473 = vpop.f32.mrb[0].mxu0
  %v474 = vadd.f32 0.0, %v473
  %v475 = vpop.f32.mrb[0].mxu0
  %476 = vmatprep.mubr.bf16.mxu0 %v201
  %477 = vmatmul.mubr.bf16.gmra.mrb[0].mxu0 %v200
  %v478 = vpop.f32.mrb[0].mxu0
  %v479 = vadd.f32 0.0, %v478
  %v480 = vpop.f32.mrb[0].mxu0
  %v481 = vpop.f32.mrb[0].mxu0
  %v482 = vadd.f32 0.0, %v481
  %v483 = vpop.f32.mrb[0].mxu0
  %484 = vmatprep.mubr.bf16.mxu0 %v203
  %485 = vmatmul.mubr.bf16.gmra.mrb[0].mxu0 %v202
  %v486 = vpop.f32.mrb[0].mxu0
  %v487 = vadd.f32 0.0, %v486
  %v488 = vpop.f32.mrb[0].mxu0
  %v489 = vpop.f32.mrb[0].mxu0
  %v490 = vadd.f32 0.0, %v489
  %v491 = vpop.f32.mrb[0].mxu0
  %492 = vdwg.mxu0
  %v493 = vmul.f32 %v367, 0.999995
  %v494 = vmul.f32 %v370, 0.999995
  %v495 = vmul.f32 %v375, 0.999995
  %v496 = vmul.f32 %v378, 0.999995
  %v497 = vmul.f32 %v383, 0.999995
  %v498 = vmul.f32 %v386, 0.999995
  %v499 = vmul.f32 %v391, 0.999995
  %v500 = vmul.f32 %v394, 0.999995
  %v501 = vmul.f32 %v399, 0.999995
  %v502 = vmul.f32 %v402, 0.999995
  %v503 = vmul.f32 %v407, 0.999995
  %v504 = vmul.f32 %v410, 0.999995
  %v505 = vmul.f32 %v415, 0.999995
  %v506 = vmul.f32 %v418, 0.999995
  %v507 = vmul.f32 %v423, 0.999995
  %v508 = vmul.f32 %v426, 0.999995
  %v509 = vmul.f32 %v431, 0.999995
  %v510 = vmul.f32 %v434, 0.999995
  %v511 = vmul.f32 %v439, 0.999995
  %v512 = vmul.f32 %v442, 0.999995
  %v513 = vmul.f32 %v447, 0.999995
  %v514 = vmul.f32 %v450, 0.999995
  %v515 = vmul.f32 %v455, 0.999995
  %v516 = vmul.f32 %v458, 0.999995
  %v517 = vmul.f32 %v463, 0.999995
  %v518 = vmul.f32 %v466, 0.999995
  %v519 = vmul.f32 %v471, 0.999995
  %v520 = vmul.f32 %v474, 0.999995
  %v521 = vmul.f32 %v479, 0.999995
  %v522 = vmul.f32 %v482, 0.999995
  %v523 = vmul.f32 %v487, 0.999995
  %v524 = vmul.f32 %v490, 0.999995
  %v525 = vmax.f32 %v493, 0.0
  %v526 = vmax.f32 %v494, 0.0
  %v527 = vmax.f32 %v495, 0.0
  %v528 = vmax.f32 %v496, 0.0
  %v529 = vmax.f32 %v497, 0.0
  %v530 = vmax.f32 %v498, 0.0
  %v531 = vmax.f32 %v499, 0.0
  %v532 = vmax.f32 %v500, 0.0
  %v533 = vmax.f32 %v501, 0.0
  %v534 = vmax.f32 %v502, 0.0
  %v535 = vmax.f32 %v503, 0.0
  %v536 = vmax.f32 %v504, 0.0
  %v537 = vmax.f32 %v505, 0.0
  %v538 = vmax.f32 %v506, 0.0
  %v539 = vmax.f32 %v507, 0.0
  %v540 = vmax.f32 %v508, 0.0
  %v541 = vmax.f32 %v509, 0.0
  %v542 = vmax.f32 %v510, 0.0
  %v543 = vmax.f32 %v511, 0.0
  %v544 = vmax.f32 %v512, 0.0
  %v545 = vmax.f32 %v513, 0.0
  %v546 = vmax.f32 %v514, 0.0
  %v547 = vmax.f32 %v515, 0.0
  %v548 = vmax.f32 %v516, 0.0
  %v549 = vmax.f32 %v517, 0.0
  %v550 = vmax.f32 %v518, 0.0
  %v551 = vmax.f32 %v519, 0.0
  %v552 = vmax.f32 %v520, 0.0
  %v553 = vmax.f32 %v521, 0.0
  %v554 = vmax.f32 %v522, 0.0
  %v555 = vmax.f32 %v523, 0.0
  %v556 = vmax.f32 %v524, 0.0
  %557 = vst [vmem:[%s2] sm:$0xff] %v525
  %558 = vst [vmem:[%s2 + $0x8] sm:$0xff] %v526
  %559 = vst [vmem:[%s2 + $0x10] sm:$0xff] %v527
  %560 = vst [vmem:[%s2 + $0x18] sm:$0xff] %v528
  %561 = vst [vmem:[%s2 + $0x20] sm:$0xff] %v529
  %562 = vst [vmem:[%s2 + $0x28] sm:$0xff] %v530
  %563 = vst [vmem:[%s2 + $0x30] sm:$0xff] %v531
  %564 = vst [vmem:[%s2 + $0x38] sm:$0xff] %v532
  %565 = vst [vmem:[%s2 + $0x40] sm:$0xff] %v533
  %566 = vst [vmem:[%s2 + $0x48] sm:$0xff] %v534
  %567 = vst [vmem:[%s2 + $0x50] sm:$0xff] %v535
  %568 = vst [vmem:[%s2 + $0x58] sm:$0xff] %v536
  %569 = vst [vmem:[%s2 + $0x60] sm:$0xff] %v537
  %570 = vst [vmem:[%s2 + $0x68] sm:$0xff] %v538
  %571 = vst [vmem:[%s2 + $0x70] sm:$0xff] %v539
  %572 = vst [vmem:[%s2 + $0x78] sm:$0xff] %v540
  %573 = vst [vmem:[%s2 + $0x80] sm:$0xff] %v541
  %574 = vst [vmem:[%s2 + $0x88] sm:$0xff] %v542
  %575 = vst [vmem:[%s2 + $0x90] sm:$0xff] %v543
  %576 = vst [vmem:[%s2 + $0x98] sm:$0xff] %v544
  %577 = vst [vmem:[%s2 + $0xa0] sm:$0xff] %v545
  %578 = vst [vmem:[%s2 + $0xa8] sm:$0xff] %v546
  %579 = vst [vmem:[%s2 + $0xb0] sm:$0xff] %v547
  %580 = vst [vmem:[%s2 + $0xb8] sm:$0xff] %v548
  %581 = vst [vmem:[%s2 + $0xc0] sm:$0xff] %v549
  %582 = vst [vmem:[%s2 + $0xc8] sm:$0xff] %v550
  %583 = vst [vmem:[%s2 + $0xd0] sm:$0xff] %v551
  %584 = vst [vmem:[%s2 + $0xd8] sm:$0xff] %v552
  %585 = vst [vmem:[%s2 + $0xe0] sm:$0xff] %v553
  %586 = vst [vmem:[%s2 + $0xe8] sm:$0xff] %v554
  %587 = vst [vmem:[%s2 + $0xf0] sm:$0xff] %v555
  %588 = vst [vmem:[%s2 + $0xf8] sm:$0xff] %v556
  // Predicated region
  $region10: #{proto_igcn_forward.8} parent=0 // pred_check
    _
  $region11: #{proto_igcn_forward.8} parent=0 // pred_check_branch
    %590 = sbr.rel (0) target = $region13
  $region12: #{proto_igcn_forward.8} parent=0 // pred_region
    _
  $region13: #{proto_igcn_forward.8} parent=0 // pred_fallthru
    _
  // Predicated region
  $region14: #{proto_igcn_forward.8} parent=0 // pred_check
    _
  $region15: #{proto_igcn_forward.8} parent=0 // pred_check_branch
    %592 = sbr.rel (0) target = $region17
  $region16: #{proto_igcn_forward.8} parent=0 // pred_region
    _
  $region17: #{proto_igcn_forward.8} parent=0 // pred_fallthru
    _

// kernel: proto_igcn_forward.11
$region0: #{proto_igcn_forward.11}
  #allocation0 [shape = 'u32[]', space=smem, size = 0x4, offset = 0x4, fixed_abs, tag = 'smem constant byte address 0x4 - core index']
  #allocation1 [shape = 'u32[144,128]{1,0:T(1,128)}', space=vmem, size = 0x12000, scoped, tag = 'internal scratch']
  %s0 = inlined_call_operand.vmem [shape: bf16[256,128], index: 0, kind: input, shape index: {}]
  %s1 = inlined_call_operand.vmem [shape: bf16[128,1024], index: 1, kind: input, shape index: {}]
  %s2 = inlined_call_operand.vmem [shape: bf16[256,256], index: 2, kind: input, shape index: {}]
  %s3 = inlined_call_operand.vmem [shape: f32[1,1024], index: 3, kind: input, shape index: {}]
  %s4 = inlined_call_operand.vmem [shape: f32[256,1024], index: 4, kind: output, shape index: {}]
  %s5 = sld [smem:[#allocation0]]
  $region26: #{proto_igcn_forward.11} parent=0
    _
  %s7 = ssub.s32 1, %s5
  %s8 = scalar_select 0, %s7, %s5
  // Predicated region
  $region2: #{proto_igcn_forward.11} parent=0 // pred_check
    _
  $region3: #{proto_igcn_forward.11} parent=0 // pred_check_branch
    %10 = sbr.rel (0) target = $region5
  $region4: #{proto_igcn_forward.11} parent=0 // pred_region
    _
  $region5: #{proto_igcn_forward.11} parent=0 // pred_fallthru
    _
  // Predicated region
  $region6: #{proto_igcn_forward.11} parent=0 // pred_check
    _
  $region7: #{proto_igcn_forward.11} parent=0 // pred_check_branch
    %12 = sbr.rel (0) target = $region9
  $region8: #{proto_igcn_forward.11} parent=0 // pred_region
    _
  $region9: #{proto_igcn_forward.11} parent=0 // pred_fallthru
    _
  // Predicated region
  $region10: #{proto_igcn_forward.11} parent=0 // pred_check
    _
  $region11: #{proto_igcn_forward.11} parent=0 // pred_check_branch
    %14 = sbr.rel (0) target = $region13
  $region12: #{proto_igcn_forward.11} parent=0 // pred_region
    _
  $region13: #{proto_igcn_forward.11} parent=0 // pred_fallthru
    _
  // Predicated region
  $region14: #{proto_igcn_forward.11} parent=0 // pred_check
    _
  $region15: #{proto_igcn_forward.11} parent=0 // pred_check_branch
    %16 = sbr.rel (0) target = $region17
  $region16: #{proto_igcn_forward.11} parent=0 // pred_region
    _
  $region17: #{proto_igcn_forward.11} parent=0 // pred_fallthru
    _
  %v18 = vld [vmem:[%s0] sm:$0xf]
  %v19 = vld [vmem:[%s0 + $0x4] sm:$0xf]
  %v20 = vld [vmem:[%s0 + $0x8] sm:$0xf]
  %v21 = vld [vmem:[%s0 + $0xc] sm:$0xf]
  %v22 = vld [vmem:[%s0 + $0x10] sm:$0xf]
  %v23 = vld [vmem:[%s0 + $0x14] sm:$0xf]
  %v24 = vld [vmem:[%s0 + $0x18] sm:$0xf]
  %v25 = vld [vmem:[%s0 + $0x1c] sm:$0xf]
  %v26 = vld [vmem:[%s0 + $0x20] sm:$0xf]
  %v27 = vld [vmem:[%s0 + $0x24] sm:$0xf]
  %v28 = vld [vmem:[%s0 + $0x28] sm:$0xf]
  %v29 = vld [vmem:[%s0 + $0x2c] sm:$0xf]
  %v30 = vld [vmem:[%s0 + $0x30] sm:$0xf]
  %v31 = vld [vmem:[%s0 + $0x34] sm:$0xf]
  %v32 = vld [vmem:[%s0 + $0x38] sm:$0xf]
  %v33 = vld [vmem:[%s0 + $0x3c] sm:$0xf]
  %v34 = vld [vmem:[%s0 + $0x40] sm:$0xf]
  %v35 = vld [vmem:[%s0 + $0x44] sm:$0xf]
  %v36 = vld [vmem:[%s0 + $0x48] sm:$0xf]
  %v37 = vld [vmem:[%s0 + $0x4c] sm:$0xf]
  %v38 = vld [vmem:[%s0 + $0x50] sm:$0xf]
  %v39 = vld [vmem:[%s0 + $0x54] sm:$0xf]
  %v40 = vld [vmem:[%s0 + $0x58] sm:$0xf]
  %v41 = vld [vmem:[%s0 + $0x5c] sm:$0xf]
  %v42 = vld [vmem:[%s0 + $0x60] sm:$0xf]
  %v43 = vld [vmem:[%s0 + $0x64] sm:$0xf]
  %v44 = vld [vmem:[%s0 + $0x68] sm:$0xf]
  %v45 = vld [vmem:[%s0 + $0x6c] sm:$0xf]
  %v46 = vld [vmem:[%s0 + $0x70] sm:$0xf]
  %v47 = vld [vmem:[%s0 + $0x74] sm:$0xf]
  %v48 = vld [vmem:[%s0 + $0x78] sm:$0xf]
  %v49 = vld [vmem:[%s0 + $0x7c] sm:$0xf]
  %v50 = vld [vmem:[%s1] sm:$0xff]
  %v51 = vld [vmem:[%s1 + $0x8] sm:$0xff]
  %v52 = vld [vmem:[%s1 + $0x10] sm:$0xff]
  %v53 = vld [vmem:[%s1 + $0x18] sm:$0xff]
  %v54 = vld [vmem:[%s1 + $0x20] sm:$0xff]
  %v55 = vld [vmem:[%s1 + $0x28] sm:$0xff]
  %v56 = vld [vmem:[%s1 + $0x30] sm:$0xff]
  %v57 = vld [vmem:[%s1 + $0x38] sm:$0xff]
  %v58 = vld [vmem:[%s1 + $0x40] sm:$0xff]
  %v59 = vld [vmem:[%s1 + $0x48] sm:$0xff]
  %v60 = vld [vmem:[%s1 + $0x50] sm:$0xff]
  %v61 = vld [vmem:[%s1 + $0x58] sm:$0xff]
  %v62 = vld [vmem:[%s1 + $0x60] sm:$0xff]
  %v63 = vld [vmem:[%s1 + $0x68] sm:$0xff]
  %v64 = vld [vmem:[%s1 + $0x70] sm:$0xff]
  %v65 = vld [vmem:[%s1 + $0x78] sm:$0xff]
  %v66 = vld [vmem:[%s1 + $0x80] sm:$0xff]
  %v67 = vld [vmem:[%s1 + $0x88] sm:$0xff]
  %v68 = vld [vmem:[%s1 + $0x90] sm:$0xff]
  %v69 = vld [vmem:[%s1 + $0x98] sm:$0xff]
  %v70 = vld [vmem:[%s1 + $0xa0] sm:$0xff]
  %v71 = vld [vmem:[%s1 + $0xa8] sm:$0xff]
  %v72 = vld [vmem:[%s1 + $0xb0] sm:$0xff]
  %v73 = vld [vmem:[%s1 + $0xb8] sm:$0xff]
  %v74 = vld [vmem:[%s1 + $0xc0] sm:$0xff]
  %v75 = vld [vmem:[%s1 + $0xc8] sm:$0xff]
  %v76 = vld [vmem:[%s1 + $0xd0] sm:$0xff]
  %v77 = vld [vmem:[%s1 + $0xd8] sm:$0xff]
  %v78 = vld [vmem:[%s1 + $0xe0] sm:$0xff]
  %v79 = vld [vmem:[%s1 + $0xe8] sm:$0xff]
  %v80 = vld [vmem:[%s1 + $0xf0] sm:$0xff]
  %v81 = vld [vmem:[%s1 + $0xf8] sm:$0xff]
  %v82 = vld [vmem:[%s1 + $0x100] sm:$0xff]
  %v83 = vld [vmem:[%s1 + $0x108] sm:$0xff]
  %v84 = vld [vmem:[%s1 + $0x110] sm:$0xff]
  %v85 = vld [vmem:[%s1 + $0x118] sm:$0xff]
  %v86 = vld [vmem:[%s1 + $0x120] sm:$0xff]
  %v87 = vld [vmem:[%s1 + $0x128] sm:$0xff]
  %v88 = vld [vmem:[%s1 + $0x130] sm:$0xff]
  %v89 = vld [vmem:[%s1 + $0x138] sm:$0xff]
  %v90 = vld [vmem:[%s1 + $0x140] sm:$0xff]
  %v91 = vld [vmem:[%s1 + $0x148] sm:$0xff]
  %v92 = vld [vmem:[%s1 + $0x150] sm:$0xff]
  %v93 = vld [vmem:[%s1 + $0x158] sm:$0xff]
  %v94 = vld [vmem:[%s1 + $0x160] sm:$0xff]
  %v95 = vld [vmem:[%s1 + $0x168] sm:$0xff]
  %v96 = vld [vmem:[%s1 + $0x170] sm:$0xff]
  %v97 = vld [vmem:[%s1 + $0x178] sm:$0xff]
  %v98 = vld [vmem:[%s1 + $0x180] sm:$0xff]
  %v99 = vld [vmem:[%s1 + $0x188] sm:$0xff]
  %v100 = vld [vmem:[%s1 + $0x190] sm:$0xff]
  %v101 = vld [vmem:[%s1 + $0x198] sm:$0xff]
  %v102 = vld [vmem:[%s1 + $0x1a0] sm:$0xff]
  %v103 = vld [vmem:[%s1 + $0x1a8] sm:$0xff]
  %v104 = vld [vmem:[%s1 + $0x1b0] sm:$0xff]
  %v105 = vld [vmem:[%s1 + $0x1b8] sm:$0xff]
  %v106 = vld [vmem:[%s1 + $0x1c0] sm:$0xff]
  %v107 = vld [vmem:[%s1 + $0x1c8] sm:$0xff]
  %v108 = vld [vmem:[%s1 + $0x1d0] sm:$0xff]
  %v109 = vld [vmem:[%s1 + $0x1d8] sm:$0xff]
  %v110 = vld [vmem:[%s1 + $0x1e0] sm:$0xff]
  %v111 = vld [vmem:[%s1 + $0x1e8] sm:$0xff]
  %v112 = vld [vmem:[%s1 + $0x1f0] sm:$0xff]
  %v113 = vld [vmem:[%s1 + $0x1f8] sm:$0xff]
  %v146 = vunpack.c.l.b16 %v18
  %v147 = vunpack.c.l.b16 %v19
  %v148 = vunpack.c.l.b16 %v20
  %v149 = vunpack.c.l.b16 %v21
  %v150 = vunpack.c.l.b16 %v22
  %v151 = vunpack.c.l.b16 %v23
  %v152 = vunpack.c.l.b16 %v24
  %v153 = vunpack.c.l.b16 %v25
  %v154 = vunpack.c.l.b16 %v26
  %v155 = vunpack.c.l.b16 %v27
  %v156 = vunpack.c.l.b16 %v28
  %v157 = vunpack.c.l.b16 %v29
  %v158 = vunpack.c.l.b16 %v30
  %v159 = vunpack.c.l.b16 %v31
  %v160 = vunpack.c.l.b16 %v32
  %v161 = vunpack.c.l.b16 %v33
  %v162 = vunpack.c.l.b16 %v34
  %v163 = vunpack.c.l.b16 %v35
  %v164 = vunpack.c.l.b16 %v36
  %v165 = vunpack.c.l.b16 %v37
  %v166 = vunpack.c.l.b16 %v38
  %v167 = vunpack.c.l.b16 %v39
  %v168 = vunpack.c.l.b16 %v40
  %v169 = vunpack.c.l.b16 %v41
  %v170 = vunpack.c.l.b16 %v42
  %v171 = vunpack.c.l.b16 %v43
  %v172 = vunpack.c.l.b16 %v44
  %v173 = vunpack.c.l.b16 %v45
  %v174 = vunpack.c.l.b16 %v46
  %v175 = vunpack.c.l.b16 %v47
  %v176 = vunpack.c.l.b16 %v48
  %v177 = vunpack.c.l.b16 %v49
  %v178 = vpack.c.b16 %v147, %v146
  %v179 = vpack.c.b16 %v149, %v148
  %v180 = vpack.c.b16 %v151, %v150
  %v181 = vpack.c.b16 %v153, %v152
  %v182 = vpack.c.b16 %v155, %v154
  %v183 = vpack.c.b16 %v157, %v156
  %v184 = vpack.c.b16 %v159, %v158
  %v185 = vpack.c.b16 %v161, %v160
  %v186 = vpack.c.b16 %v163, %v162
  %v187 = vpack.c.b16 %v165, %v164
  %v188 = vpack.c.b16 %v167, %v166
  %v189 = vpack.c.b16 %v169, %v168
  %v190 = vpack.c.b16 %v171, %v170
  %v191 = vpack.c.b16 %v173, %v172
  %v192 = vpack.c.b16 %v175, %v174
  %v193 = vpack.c.b16 %v177, %v176
  %v274 = vunpack.c.l.b16 %v50
  %v275 = vunpack.c.h.b16 %v50
  %v276 = vunpack.c.l.b16 %v51
  %v277 = vunpack.c.h.b16 %v51
  %v278 = vunpack.c.l.b16 %v52
  %v279 = vunpack.c.h.b16 %v52
  %v280 = vunpack.c.l.b16 %v53
  %v281 = vunpack.c.h.b16 %v53
  %v282 = vunpack.c.l.b16 %v54
  %v283 = vunpack.c.h.b16 %v54
  %v284 = vunpack.c.l.b16 %v55
  %v285 = vunpack.c.h.b16 %v55
  %v286 = vunpack.c.l.b16 %v56
  %v287 = vunpack.c.h.b16 %v56
  %v288 = vunpack.c.l.b16 %v57
  %v289 = vunpack.c.h.b16 %v57
  %v290 = vunpack.c.l.b16 %v58
  %v291 = vunpack.c.h.b16 %v58
  %v292 = vunpack.c.l.b16 %v59
  %v293 = vunpack.c.h.b16 %v59
  %v294 = vunpack.c.l.b16 %v60
  %v295 = vunpack.c.h.b16 %v60
  %v296 = vunpack.c.l.b16 %v61
  %v297 = vunpack.c.h.b16 %v61
  %v298 = vunpack.c.l.b16 %v62
  %v299 = vunpack.c.h.b16 %v62
  %v300 = vunpack.c.l.b16 %v63
  %v301 = vunpack.c.h.b16 %v63
  %v302 = vunpack.c.l.b16 %v64
  %v303 = vunpack.c.h.b16 %v64
  %v304 = vunpack.c.l.b16 %v65
  %v305 = vunpack.c.h.b16 %v65
  %v306 = vunpack.c.l.b16 %v66
  %v307 = vunpack.c.h.b16 %v66
  %v308 = vunpack.c.l.b16 %v67
  %v309 = vunpack.c.h.b16 %v67
  %v310 = vunpack.c.l.b16 %v68
  %v311 = vunpack.c.h.b16 %v68
  %v312 = vunpack.c.l.b16 %v69
  %v313 = vunpack.c.h.b16 %v69
  %v314 = vunpack.c.l.b16 %v70
  %v315 = vunpack.c.h.b16 %v70
  %v316 = vunpack.c.l.b16 %v71
  %v317 = vunpack.c.h.b16 %v71
  %v318 = vunpack.c.l.b16 %v72
  %v319 = vunpack.c.h.b16 %v72
  %v320 = vunpack.c.l.b16 %v73
  %v321 = vunpack.c.h.b16 %v73
  %v322 = vunpack.c.l.b16 %v74
  %v323 = vunpack.c.h.b16 %v74
  %v324 = vunpack.c.l.b16 %v75
  %v325 = vunpack.c.h.b16 %v75
  %v326 = vunpack.c.l.b16 %v76
  %v327 = vunpack.c.h.b16 %v76
  %v328 = vunpack.c.l.b16 %v77
  %v329 = vunpack.c.h.b16 %v77
  %v330 = vunpack.c.l.b16 %v78
  %v331 = vunpack.c.h.b16 %v78
  %v332 = vunpack.c.l.b16 %v79
  %v333 = vunpack.c.h.b16 %v79
  %v334 = vunpack.c.l.b16 %v80
  %v335 = vunpack.c.h.b16 %v80
  %v336 = vunpack.c.l.b16 %v81
  %v337 = vunpack.c.h.b16 %v81
  %v338 = vunpack.c.l.b16 %v82
  %v339 = vunpack.c.h.b16 %v82
  %v340 = vunpack.c.l.b16 %v83
  %v341 = vunpack.c.h.b16 %v83
  %v342 = vunpack.c.l.b16 %v84
  %v343 = vunpack.c.h.b16 %v84
  %v344 = vunpack.c.l.b16 %v85
  %v345 = vunpack.c.h.b16 %v85
  %v346 = vunpack.c.l.b16 %v86
  %v347 = vunpack.c.h.b16 %v86
  %v348 = vunpack.c.l.b16 %v87
  %v349 = vunpack.c.h.b16 %v87
  %v350 = vunpack.c.l.b16 %v88
  %v351 = vunpack.c.h.b16 %v88
  %v352 = vunpack.c.l.b16 %v89
  %v353 = vunpack.c.h.b16 %v89
  %v354 = vunpack.c.l.b16 %v90
  %v355 = vunpack.c.h.b16 %v90
  %v356 = vunpack.c.l.b16 %v91
  %v357 = vunpack.c.h.b16 %v91
  %v358 = vunpack.c.l.b16 %v92
  %v359 = vunpack.c.h.b16 %v92
  %v360 = vunpack.c.l.b16 %v93
  %v361 = vunpack.c.h.b16 %v93
  %v362 = vunpack.c.l.b16 %v94
  %v363 = vunpack.c.h.b16 %v94
  %v364 = vunpack.c.l.b16 %v95
  %v365 = vunpack.c.h.b16 %v95
  %v366 = vunpack.c.l.b16 %v96
  %v367 = vunpack.c.h.b16 %v96
  %v368 = vunpack.c.l.b16 %v97
  %v369 = vunpack.c.h.b16 %v97
  %v370 = vunpack.c.l.b16 %v98
  %v371 = vunpack.c.h.b16 %v98
  %v372 = vunpack.c.l.b16 %v99
  %v373 = vunpack.c.h.b16 %v99
  %v374 = vunpack.c.l.b16 %v100
  %v375 = vunpack.c.h.b16 %v100
  %v376 = vunpack.c.l.b16 %v101
  %v377 = vunpack.c.h.b16 %v101
  %v378 = vunpack.c.l.b16 %v102
  %v379 = vunpack.c.h.b16 %v102
  %v380 = vunpack.c.l.b16 %v103
  %v381 = vunpack.c.h.b16 %v103
  %v382 = vunpack.c.l.b16 %v104
  %v383 = vunpack.c.h.b16 %v104
  %v384 = vunpack.c.l.b16 %v105
  %v385 = vunpack.c.h.b16 %v105
  %v386 = vunpack.c.l.b16 %v106
  %v387 = vunpack.c.h.b16 %v106
  %v388 = vunpack.c.l.b16 %v107
  %v389 = vunpack.c.h.b16 %v107
  %v390 = vunpack.c.l.b16 %v108
  %v391 = vunpack.c.h.b16 %v108
  %v392 = vunpack.c.l.b16 %v109
  %v393 = vunpack.c.h.b16 %v109
  %v394 = vunpack.c.l.b16 %v110
  %v395 = vunpack.c.h.b16 %v110
  %v396 = vunpack.c.l.b16 %v111
  %v397 = vunpack.c.h.b16 %v111
  %v398 = vunpack.c.l.b16 %v112
  %v399 = vunpack.c.h.b16 %v112
  %v400 = vunpack.c.l.b16 %v113
  %v401 = vunpack.c.h.b16 %v113
  %v402 = vpack.c.b16 %v282, %v274
  %v403 = vpack.c.b16 %v283, %v275
  %v404 = vpack.c.b16 %v284, %v276
  %v405 = vpack.c.b16 %v285, %v277
  %v406 = vpack.c.b16 %v286, %v278
  %v407 = vpack.c.b16 %v287, %v279
  %v408 = vpack.c.b16 %v288, %v280
  %v409 = vpack.c.b16 %v289, %v281
  %v410 = vpack.c.b16 %v298, %v290
  %v411 = vpack.c.b16 %v299, %v291
  %v412 = vpack.c.b16 %v300, %v292
  %v413 = vpack.c.b16 %v301, %v293
  %v414 = vpack.c.b16 %v302, %v294
  %v415 = vpack.c.b16 %v303, %v295
  %v416 = vpack.c.b16 %v304, %v296
  %v417 = vpack.c.b16 %v305, %v297
  %v418 = vpack.c.b16 %v314, %v306
  %v419 = vpack.c.b16 %v315, %v307
  %v420 = vpack.c.b16 %v316, %v308
  %v421 = vpack.c.b16 %v317, %v309
  %v422 = vpack.c.b16 %v318, %v310
  %v423 = vpack.c.b16 %v319, %v311
  %v424 = vpack.c.b16 %v320, %v312
  %v425 = vpack.c.b16 %v321, %v313
  %v426 = vpack.c.b16 %v330, %v322
  %v427 = vpack.c.b16 %v331, %v323
  %v428 = vpack.c.b16 %v332, %v324
  %v429 = vpack.c.b16 %v333, %v325
  %v430 = vpack.c.b16 %v334, %v326
  %v431 = vpack.c.b16 %v335, %v327
  %v432 = vpack.c.b16 %v336, %v328
  %v433 = vpack.c.b16 %v337, %v329
  %v434 = vpack.c.b16 %v346, %v338
  %v435 = vpack.c.b16 %v347, %v339
  %v436 = vpack.c.b16 %v348, %v340
  %v437 = vpack.c.b16 %v349, %v341
  %v438 = vpack.c.b16 %v350, %v342
  %v439 = vpack.c.b16 %v351, %v343
  %v440 = vpack.c.b16 %v352, %v344
  %v441 = vpack.c.b16 %v353, %v345
  %v442 = vpack.c.b16 %v362, %v354
  %v443 = vpack.c.b16 %v363, %v355
  %v444 = vpack.c.b16 %v364, %v356
  %v445 = vpack.c.b16 %v365, %v357
  %v446 = vpack.c.b16 %v366, %v358
  %v447 = vpack.c.b16 %v367, %v359
  %v448 = vpack.c.b16 %v368, %v360
  %v449 = vpack.c.b16 %v369, %v361
  %v450 = vpack.c.b16 %v378, %v370
  %v451 = vpack.c.b16 %v379, %v371
  %v452 = vpack.c.b16 %v380, %v372
  %v453 = vpack.c.b16 %v381, %v373
  %v454 = vpack.c.b16 %v382, %v374
  %v455 = vpack.c.b16 %v383, %v375
  %v456 = vpack.c.b16 %v384, %v376
  %v457 = vpack.c.b16 %v385, %v377
  %v458 = vpack.c.b16 %v394, %v386
  %v459 = vpack.c.b16 %v395, %v387
  %v460 = vpack.c.b16 %v396, %v388
  %v461 = vpack.c.b16 %v397, %v389
  %v462 = vpack.c.b16 %v398, %v390
  %v463 = vpack.c.b16 %v399, %v391
  %v464 = vpack.c.b16 %v400, %v392
  %v465 = vpack.c.b16 %v401, %v393
  %530 = vmatprep.subr.bf16.mxu0 %v403
  %531 = vmatpush1.bf16.msra.mxu0 %v402
  %532 = vmatprep.subr.bf16.mxu0 %v411
  %533 = vmatpush1.bf16.msra.mxu0 %v410
  %534 = vmatprep.subr.bf16.mxu0 %v419
  %535 = vmatpush1.bf16.msra.mxu0 %v418
  %536 = vmatprep.subr.bf16.mxu0 %v427
  %537 = vmatpush1.bf16.msra.mxu0 %v426
  %538 = vmatprep.subr.bf16.mxu0 %v435
  %539 = vmatpush1.bf16.msra.mxu0 %v434
  %540 = vmatprep.subr.bf16.mxu0 %v443
  %541 = vmatpush1.bf16.msra.mxu0 %v442
  %542 = vmatprep.subr.bf16.mxu0 %v451
  %543 = vmatpush1.bf16.msra.mxu0 %v450
  %544 = vmatprep.subr.bf16.mxu0 %v459
  %545 = vmatpush1.bf16.msra.mxu0 %v458
  %546 = vmatprep.subr.bf16.mxu0 0
  %547 = vmatpush1.bf16.msra.mxu0 0
  %548 = vmatprep.subr.bf16.mxu0 0
  %549 = vmatpush1.bf16.msra.mxu0 0
  %550 = vmatprep.subr.bf16.mxu0 0
  %551 = vmatpush1.bf16.msra.mxu0 0
  %552 = vmatprep.subr.bf16.mxu0 0
  %553 = vmatpush1.bf16.msra.mxu0 0
  %554 = vmatprep.subr.bf16.mxu0 0
  %555 = vmatpush1.bf16.msra.mxu0 0
  %556 = vmatprep.subr.bf16.mxu0 0
  %557 = vmatpush1.bf16.msra.mxu0 0
  %558 = vmatprep.subr.bf16.mxu0 0
  %559 = vmatpush1.bf16.msra.mxu0 0
  %560 = vmatprep.subr.bf16.mxu0 0
  %561 = vmatpush1.bf16.msra.mxu0 0
  %562 = vmatprep.mubr.bf16.mxu0 0
  %563 = vmatmul.mubr.bf16.gmra.mrb[0].mxu0 %v178
  %v564 = vpop.f32.mrb[0].mxu0
  %v565 = vadd.f32 0.0, %v564
  %v566 = vpop.f32.mrb[0].mxu0
  %v567 = vadd.f32 0.0, %v566
  %v568 = vpop.f32.mrb[0].mxu0
  %v569 = vadd.f32 0.0, %v568
  %v570 = vpop.f32.mrb[0].mxu0
  %v571 = vadd.f32 0.0, %v570
  %572 = vmatprep.mubr.bf16.mxu0 0
  %573 = vmatmul.mubr.bf16.gmra.mrb[0].mxu0 %v179
  %v574 = vpop.f32.mrb[0].mxu0
  %v575 = vadd.f32 0.0, %v574
  %v576 = vpop.f32.mrb[0].mxu0
  %v577 = vadd.f32 0.0, %v576
  %v578 = vpop.f32.mrb[0].mxu0
  %v579 = vadd.f32 0.0, %v578
  %v580 = vpop.f32.mrb[0].mxu0
  %v581 = vadd.f32 0.0, %v580
  %582 = vmatprep.mubr.bf16.mxu0 0
  %583 = vmatmul.mubr.bf16.gmra.mrb[0].mxu0 %v180
  %v584 = vpop.f32.mrb[0].mxu0
  %v585 = vadd.f32 0.0, %v584
  %v586 = vpop.f32.mrb[0].mxu0
  %v587 = vadd.f32 0.0, %v586
  %v588 = vpop.f32.mrb[0].mxu0
  %v589 = vadd.f32 0.0, %v588
  %v590 = vpop.f32.mrb[0].mxu0
  %v591 = vadd.f32 0.0, %v590
  %592 = vmatprep.mubr.bf16.mxu0 0
  %593 = vmatmul.mubr.bf16.gmra.mrb[0].mxu0 %v181
  %v594 = vpop.f32.mrb[0].mxu0
  %v595 = vadd.f32 0.0, %v594
  %v596 = vpop.f32.mrb[0].mxu0
  %v597 = vadd.f32 0.0, %v596
  %v598 = vpop.f32.mrb[0].mxu0
  %v599 = vadd.f32 0.0, %v598
  %v600 = vpop.f32.mrb[0].mxu0
  %v601 = vadd.f32 0.0, %v600
  %602 = vmatprep.mubr.bf16.mxu0 0
  %603 = vmatmul.mubr.bf16.gmra.mrb[0].mxu0 %v182
  %v604 = vpop.f32.mrb[0].mxu0
  %v605 = vadd.f32 0.0, %v604
  %v606 = vpop.f32.mrb[0].mxu0
  %v607 = vadd.f32 0.0, %v606
  %v608 = vpop.f32.mrb[0].mxu0
  %v609 = vadd.f32 0.0, %v608
  %v610 = vpop.f32.mrb[0].mxu0
  %v611 = vadd.f32 0.0, %v610
  %612 = vmatprep.mubr.bf16.mxu0 0
  %613 = vmatmul.mubr.bf16.gmra.mrb[0].mxu0 %v183
  %v614 = vpop.f32.mrb[0].mxu0
  %v615 = vadd.f32 0.0, %v614
  %v616 = vpop.f32.mrb[0].mxu0
  %v617 = vadd.f32 0.0, %v616
  %v618 = vpop.f32.mrb[0].mxu0
  %v619 = vadd.f32 0.0, %v618
  %v620 = vpop.f32.mrb[0].mxu0
  %v621 = vadd.f32 0.0, %v620
  %622 = vmatprep.mubr.bf16.mxu0 0
  %623 = vmatmul.mubr.bf16.gmra.mrb[0].mxu0 %v184
  %v624 = vpop.f32.mrb[0].mxu0
  %v625 = vadd.f32 0.0, %v624
  %v626 = vpop.f32.mrb[0].mxu0
  %v627 = vadd.f32 0.0, %v626
  %v628 = vpop.f32.mrb[0].mxu0
  %v629 = vadd.f32 0.0, %v628
  %v630 = vpop.f32.mrb[0].mxu0
  %v631 = vadd.f32 0.0, %v630
  %632 = vmatprep.mubr.bf16.mxu0 0
  %633 = vmatmul.mubr.bf16.gmra.mrb[0].mxu0 %v185
  %v634 = vpop.f32.mrb[0].mxu0
  %v635 = vadd.f32 0.0, %v634
  %v636 = vpop.f32.mrb[0].mxu0
  %v637 = vadd.f32 0.0, %v636
  %v638 = vpop.f32.mrb[0].mxu0
  %v639 = vadd.f32 0.0, %v638
  %v640 = vpop.f32.mrb[0].mxu0
  %v641 = vadd.f32 0.0, %v640
  %642 = vmatprep.mubr.bf16.mxu0 0
  %643 = vmatmul.mubr.bf16.gmra.mrb[0].mxu0 %v186
  %v644 = vpop.f32.mrb[0].mxu0
  %v645 = vadd.f32 0.0, %v644
  %v646 = vpop.f32.mrb[0].mxu0
  %v647 = vadd.f32 0.0, %v646
  %v648 = vpop.f32.mrb[0].mxu0
  %v649 = vadd.f32 0.0, %v648
  %v650 = vpop.f32.mrb[0].mxu0
  %v651 = vadd.f32 0.0, %v650
  %652 = vmatprep.mubr.bf16.mxu0 0
  %653 = vmatmul.mubr.bf16.gmra.mrb[0].mxu0 %v187
  %v654 = vpop.f32.mrb[0].mxu0
  %v655 = vadd.f32 0.0, %v654
  %v656 = vpop.f32.mrb[0].mxu0
  %v657 = vadd.f32 0.0, %v656
  %v658 = vpop.f32.mrb[0].mxu0
  %v659 = vadd.f32 0.0, %v658
  %v660 = vpop.f32.mrb[0].mxu0
  %v661 = vadd.f32 0.0, %v660
  %662 = vmatprep.mubr.bf16.mxu0 0
  %663 = vmatmul.mubr.bf16.gmra.mrb[0].mxu0 %v188
  %v664 = vpop.f32.mrb[0].mxu0
  %v665 = vadd.f32 0.0, %v664
  %v666 = vpop.f32.mrb[0].mxu0
  %v667 = vadd.f32 0.0, %v666
  %v668 = vpop.f32.mrb[0].mxu0
  %v669 = vadd.f32 0.0, %v668
  %v670 = vpop.f32.mrb[0].mxu0
  %v671 = vadd.f32 0.0, %v670
  %672 = vmatprep.mubr.bf16.mxu0 0
  %673 = vmatmul.mubr.bf16.gmra.mrb[0].mxu0 %v189
  %v674 = vpop.f32.mrb[0].mxu0
  %v675 = vadd.f32 0.0, %v674
  %v676 = vpop.f32.mrb[0].mxu0
  %v677 = vadd.f32 0.0, %v676
  %v678 = vpop.f32.mrb[0].mxu0
  %v679 = vadd.f32 0.0, %v678
  %v680 = vpop.f32.mrb[0].mxu0
  %v681 = vadd.f32 0.0, %v680
  %682 = vmatprep.mubr.bf16.mxu0 0
  %683 = vmatmul.mubr.bf16.gmra.mrb[0].mxu0 %v190
  %v684 = vpop.f32.mrb[0].mxu0
  %v685 = vadd.f32 0.0, %v684
  %v686 = vpop.f32.mrb[0].mxu0
  %v687 = vadd.f32 0.0, %v686
  %v688 = vpop.f32.mrb[0].mxu0
  %v689 = vadd.f32 0.0, %v688
  %v690 = vpop.f32.mrb[0].mxu0
  %v691 = vadd.f32 0.0, %v690
  %692 = vmatprep.mubr.bf16.mxu0 0
  %693 = vmatmul.mubr.bf16.gmra.mrb[0].mxu0 %v191
  %v694 = vpop.f32.mrb[0].mxu0
  %v695 = vadd.f32 0.0, %v694
  %v696 = vpop.f32.mrb[0].mxu0
  %v697 = vadd.f32 0.0, %v696
  %v698 = vpop.f32.mrb[0].mxu0
  %v699 = vadd.f32 0.0, %v698
  %v700 = vpop.f32.mrb[0].mxu0
  %v701 = vadd.f32 0.0, %v700
  %702 = vmatprep.mubr.bf16.mxu0 0
  %703 = vmatmul.mubr.bf16.gmra.mrb[0].mxu0 %v192
  %v704 = vpop.f32.mrb[0].mxu0
  %v705 = vadd.f32 0.0, %v704
  %v706 = vpop.f32.mrb[0].mxu0
  %v707 = vadd.f32 0.0, %v706
  %v708 = vpop.f32.mrb[0].mxu0
  %v709 = vadd.f32 0.0, %v708
  %v710 = vpop.f32.mrb[0].mxu0
  %v711 = vadd.f32 0.0, %v710
  %712 = vmatprep.mubr.bf16.mxu0 0
  %713 = vmatmul.mubr.bf16.gmra.mrb[0].mxu0 %v193
  %v714 = vpop.f32.mrb[0].mxu0
  %v715 = vadd.f32 0.0, %v714
  %v716 = vpop.f32.mrb[0].mxu0
  %v717 = vadd.f32 0.0, %v716
  %v718 = vpop.f32.mrb[0].mxu0
  %v719 = vadd.f32 0.0, %v718
  %v720 = vpop.f32.mrb[0].mxu0
  %v721 = vadd.f32 0.0, %v720
  %722 = vdwg.mxu0
  %723 = vmatprep.subr.bf16.mxu0 %v405
  %724 = vmatpush1.bf16.msra.mxu0 %v404
  %725 = vmatprep.subr.bf16.mxu0 %v413
  %726 = vmatpush1.bf16.msra.mxu0 %v412
  %727 = vmatprep.subr.bf16.mxu0 %v421
  %728 = vmatpush1.bf16.msra.mxu0 %v420
  %729 = vmatprep.subr.bf16.mxu0 %v429
  %730 = vmatpush1.bf16.msra.mxu0 %v428
  %731 = vmatprep.subr.bf16.mxu0 %v437
  %732 = vmatpush1.bf16.msra.mxu0 %v436
  %733 = vmatprep.subr.bf16.mxu0 %v445
  %734 = vmatpush1.bf16.msra.mxu0 %v444
  %735 = vmatprep.subr.bf16.mxu0 %v453
  %736 = vmatpush1.bf16.msra.mxu0 %v452
  %737 = vmatprep.subr.bf16.mxu0 %v461
  %738 = vmatpush1.bf16.msra.mxu0 %v460
  %739 = vmatprep.subr.bf16.mxu0 0
  %740 = vmatpush1.bf16.msra.mxu0 0
  %741 = vmatprep.subr.bf16.mxu0 0
  %742 = vmatpush1.bf16.msra.mxu0 0
  %743 = vmatprep.subr.bf16.mxu0 0
  %744 = vmatpush1.bf16.msra.mxu0 0
  %745 = vmatprep.subr.bf16.mxu0 0
  %746 = vmatpush1.bf16.msra.mxu0 0
  %747 = vmatprep.subr.bf16.mxu0 0
  %748 = vmatpush1.bf16.msra.mxu0 0
  %749 = vmatprep.subr.bf16.mxu0 0
  %750 = vmatpush1.bf16.msra.mxu0 0
  %751 = vmatprep.subr.bf16.mxu0 0
  %752 = vmatpush1.bf16.msra.mxu0 0
  %753 = vmatprep.subr.bf16.mxu0 0
  %754 = vmatpush1.bf16.msra.mxu0 0
  %755 = vmatprep.mubr.bf16.mxu0 0
  %756 = vmatmul.mubr.bf16.gmra.mrb[0].mxu0 %v178
  %v757 = vpop.f32.mrb[0].mxu0
  %v758 = vadd.f32 0.0, %v757
  %v759 = vpop.f32.mrb[0].mxu0
  %v760 = vadd.f32 0.0, %v759
  %v761 = vpop.f32.mrb[0].mxu0
  %v762 = vadd.f32 0.0, %v761
  %v763 = vpop.f32.mrb[0].mxu0
  %v764 = vadd.f32 0.0, %v763
  %765 = vmatprep.mubr.bf16.mxu0 0
  %766 = vmatmul.mubr.bf16.gmra.mrb[0].mxu0 %v179
  %v767 = vpop.f32.mrb[0].mxu0
  %v768 = vadd.f32 0.0, %v767
  %v769 = vpop.f32.mrb[0].mxu0
  %v770 = vadd.f32 0.0, %v769
  %v771 = vpop.f32.mrb[0].mxu0
  %v772 = vadd.f32 0.0, %v771
  %v773 = vpop.f32.mrb[0].mxu0
  %v774 = vadd.f32 0.0, %v773
  %775 = vmatprep.mubr.bf16.mxu0 0
  %776 = vmatmul.mubr.bf16.gmra.mrb[0].mxu0 %v180
  %v777 = vpop.f32.mrb[0].mxu0
  %v778 = vadd.f32 0.0, %v777
  %v779 = vpop.f32.mrb[0].mxu0
  %v780 = vadd.f32 0.0, %v779
  %v781 = vpop.f32.mrb[0].mxu0
  %v782 = vadd.f32 0.0, %v781
  %v783 = vpop.f32.mrb[0].mxu0
  %v784 = vadd.f32 0.0, %v783
  %785 = vmatprep.mubr.bf16.mxu0 0
  %786 = vmatmul.mubr.bf16.gmra.mrb[0].mxu0 %v181
  %v787 = vpop.f32.mrb[0].mxu0
  %v788 = vadd.f32 0.0, %v787
  %v789 = vpop.f32.mrb[0].mxu0
  %v790 = vadd.f32 0.0, %v789
  %v791 = vpop.f32.mrb[0].mxu0
  %v792 = vadd.f32 0.0, %v791
  %v793 = vpop.f32.mrb[0].mxu0
  %v794 = vadd.f32 0.0, %v793
  %795 = vmatprep.mubr.bf16.mxu0 0
  %796 = vmatmul.mubr.bf16.gmra.mrb[0].mxu0 %v182
  %v797 = vpop.f32.mrb[0].mxu0
  %v798 = vadd.f32 0.0, %v797
  %v799 = vpop.f32.mrb[0].mxu0
  %v800 = vadd.f32 0.0, %v799
  %v801 = vpop.f32.mrb[0].mxu0
  %v802 = vadd.f32 0.0, %v801
  %v803 = vpop.f32.mrb[0].mxu0
  %v804 = vadd.f32 0.0, %v803
  %805 = vmatprep.mubr.bf16.mxu0 0
  %806 = vmatmul.mubr.bf16.gmra.mrb[0].mxu0 %v183
  %v807 = vpop.f32.mrb[0].mxu0
  %v808 = vadd.f32 0.0, %v807
  %v809 = vpop.f32.mrb[0].mxu0
  %v810 = vadd.f32 0.0, %v809
  %v811 = vpop.f32.mrb[0].mxu0
  %v812 = vadd.f32 0.0, %v811
  %v813 = vpop.f32.mrb[0].mxu0
  %v814 = vadd.f32 0.0, %v813
  %815 = vmatprep.mubr.bf16.mxu0 0
  %816 = vmatmul.mubr.bf16.gmra.mrb[0].mxu0 %v184
  %v817 = vpop.f32.mrb[0].mxu0
  %v818 = vadd.f32 0.0, %v817
  %v819 = vpop.f32.mrb[0].mxu0
  %v820 = vadd.f32 0.0, %v819
  %v821 = vpop.f32.mrb[0].mxu0
  %v822 = vadd.f32 0.0, %v821
  %v823 = vpop.f32.mrb[0].mxu0
  %v824 = vadd.f32 0.0, %v823
  %825 = vmatprep.mubr.bf16.mxu0 0
  %826 = vmatmul.mubr.bf16.gmra.mrb[0].mxu0 %v185
  %v827 = vpop.f32.mrb[0].mxu0
  %v828 = vadd.f32 0.0, %v827
  %v829 = vpop.f32.mrb[0].mxu0
  %v830 = vadd.f32 0.0, %v829
  %v831 = vpop.f32.mrb[0].mxu0
  %v832 = vadd.f32 0.0, %v831
  %v833 = vpop.f32.mrb[0].mxu0
  %v834 = vadd.f32 0.0, %v833
  %835 = vmatprep.mubr.bf16.mxu0 0
  %836 = vmatmul.mubr.bf16.gmra.mrb[0].mxu0 %v186
  %v837 = vpop.f32.mrb[0].mxu0
  %v838 = vadd.f32 0.0, %v837
  %v839 = vpop.f32.mrb[0].mxu0
  %v840 = vadd.f32 0.0, %v839
  %v841 = vpop.f32.mrb[0].mxu0
  %v842 = vadd.f32 0.0, %v841
  %v843 = vpop.f32.mrb[0].mxu0
  %v844 = vadd.f32 0.0, %v843
  %845 = vmatprep.mubr.bf16.mxu0 0
  %846 = vmatmul.mubr.bf16.gmra.mrb[0].mxu0 %v187
  %v847 = vpop.f32.mrb[0].mxu0
  %v848 = vadd.f32 0.0, %v847
  %v849 = vpop.f32.mrb[0].mxu0
  %v850 = vadd.f32 0.0, %v849
  %v851 = vpop.f32.mrb[0].mxu0
  %v852 = vadd.f32 0.0, %v851
  %v853 = vpop.f32.mrb[0].mxu0
  %v854 = vadd.f32 0.0, %v853
  %855 = vmatprep.mubr.bf16.mxu0 0
  %856 = vmatmul.mubr.bf16.gmra.mrb[0].mxu0 %v188
  %v857 = vpop.f32.mrb[0].mxu0
  %v858 = vadd.f32 0.0, %v857
  %v859 = vpop.f32.mrb[0].mxu0
  %v860 = vadd.f32 0.0, %v859
  %v861 = vpop.f32.mrb[0].mxu0
  %v862 = vadd.f32 0.0, %v861
  %v863 = vpop.f32.mrb[0].mxu0
  %v864 = vadd.f32 0.0, %v863
  %865 = vmatprep.mubr.bf16.mxu0 0
  %866 = vmatmul.mubr.bf16.gmra.mrb[0].mxu0 %v189
  %v867 = vpop.f32.mrb[0].mxu0
  %v868 = vadd.f32 0.0, %v867
  %v869 = vpop.f32.mrb[0].mxu0
  %v870 = vadd.f32 0.0, %v869
  %v871 = vpop.f32.mrb[0].mxu0
  %v872 = vadd.f32 0.0, %v871
  %v873 = vpop.f32.mrb[0].mxu0
  %v874 = vadd.f32 0.0, %v873
  %875 = vmatprep.mubr.bf16.mxu0 0
  %876 = vmatmul.mubr.bf16.gmra.mrb[0].mxu0 %v190
  %v877 = vpop.f32.mrb[0].mxu0
  %v878 = vadd.f32 0.0, %v877
  %v879 = vpop.f32.mrb[0].mxu0
  %v880 = vadd.f32 0.0, %v879
  %v881 = vpop.f32.mrb[0].mxu0
  %v882 = vadd.f32 0.0, %v881
  %v883 = vpop.f32.mrb[0].mxu0
  %v884 = vadd.f32 0.0, %v883
  %885 = vmatprep.mubr.bf16.mxu0 0
  %886 = vmatmul.mubr.bf16.gmra.mrb[0].mxu0 %v191
  %v887 = vpop.f32.mrb[0].mxu0
  %v888 = vadd.f32 0.0, %v887
  %v889 = vpop.f32.mrb[0].mxu0
  %v890 = vadd.f32 0.0, %v889
  %v891 = vpop.f32.mrb[0].mxu0
  %v892 = vadd.f32 0.0, %v891
  %v893 = vpop.f32.mrb[0].mxu0
  %v894 = vadd.f32 0.0, %v893
  %895 = vmatprep.mubr.bf16.mxu0 0
  %896 = vmatmul.mubr.bf16.gmra.mrb[0].mxu0 %v192
  %v897 = vpop.f32.mrb[0].mxu0
  %v898 = vadd.f32 0.0, %v897
  %v899 = vpop.f32.mrb[0].mxu0
  %v900 = vadd.f32 0.0, %v899
  %v901 = vpop.f32.mrb[0].mxu0
  %v902 = vadd.f32 0.0, %v901
  %v903 = vpop.f32.mrb[0].mxu0
  %v904 = vadd.f32 0.0, %v903
  %905 = vmatprep.mubr.bf16.mxu0 0
  %906 = vmatmul.mubr.bf16.gmra.mrb[0].mxu0 %v193
  %v907 = vpop.f32.mrb[0].mxu0
  %v908 = vadd.f32 0.0, %v907
  %v909 = vpop.f32.mrb[0].mxu0
  %v910 = vadd.f32 0.0, %v909
  %v911 = vpop.f32.mrb[0].mxu0
  %v912 = vadd.f32 0.0, %v911
  %v913 = vpop.f32.mrb[0].mxu0
  %v914 = vadd.f32 0.0, %v913
  %915 = vdwg.mxu0
  %916 = vmatprep.subr.bf16.mxu0 %v407
  %917 = vmatpush1.bf16.msra.mxu0 %v406
  %918 = vmatprep.subr.bf16.mxu0 %v415
  %919 = vmatpush1.bf16.msra.mxu0 %v414
  %920 = vmatprep.subr.bf16.mxu0 %v423
  %921 = vmatpush1.bf16.msra.mxu0 %v422
  %922 = vmatprep.subr.bf16.mxu0 %v431
  %923 = vmatpush1.bf16.msra.mxu0 %v430
  %924 = vmatprep.subr.bf16.mxu0 %v439
  %925 = vmatpush1.bf16.msra.mxu0 %v438
  %926 = vmatprep.subr.bf16.mxu0 %v447
  %927 = vmatpush1.bf16.msra.mxu0 %v446
  %928 = vmatprep.subr.bf16.mxu0 %v455
  %929 = vmatpush1.bf16.msra.mxu0 %v454
  %930 = vmatprep.subr.bf16.mxu0 %v463
  %931 = vmatpush1.bf16.msra.mxu0 %v462
  %932 = vmatprep.subr.bf16.mxu0 0
  %933 = vmatpush1.bf16.msra.mxu0 0
  %934 = vmatprep.subr.bf16.mxu0 0
  %935 = vmatpush1.bf16.msra.mxu0 0
  %936 = vmatprep.subr.bf16.mxu0 0
  %937 = vmatpush1.bf16.msra.mxu0 0
  %938 = vmatprep.subr.bf16.mxu0 0
  %939 = vmatpush1.bf16.msra.mxu0 0
  %940 = vmatprep.subr.bf16.mxu0 0
  %941 = vmatpush1.bf16.msra.mxu0 0
  %942 = vmatprep.subr.bf16.mxu0 0
  %943 = vmatpush1.bf16.msra.mxu0 0
  %944 = vmatprep.subr.bf16.mxu0 0
  %945 = vmatpush1.bf16.msra.mxu0 0
  %946 = vmatprep.subr.bf16.mxu0 0
  %947 = vmatpush1.bf16.msra.mxu0 0
  %948 = vmatprep.mubr.bf16.mxu0 0
  %949 = vmatmul.mubr.bf16.gmra.mrb[0].mxu0 %v178
  %v950 = vpop.f32.mrb[0].mxu0
  %v951 = vadd.f32 0.0, %v950
  %v952 = vpop.f32.mrb[0].mxu0
  %v953 = vadd.f32 0.0, %v952
  %v954 = vpop.f32.mrb[0].mxu0
  %v955 = vadd.f32 0.0, %v954
  %v956 = vpop.f32.mrb[0].mxu0
  %v957 = vadd.f32 0.0, %v956
  %958 = vmatprep.mubr.bf16.mxu0 0
  %959 = vmatmul.mubr.bf16.gmra.mrb[0].mxu0 %v179
  %v960 = vpop.f32.mrb[0].mxu0
  %v961 = vadd.f32 0.0, %v960
  %v962 = vpop.f32.mrb[0].mxu0
  %v963 = vadd.f32 0.0, %v962
  %v964 = vpop.f32.mrb[0].mxu0
  %v965 = vadd.f32 0.0, %v964
  %v966 = vpop.f32.mrb[0].mxu0
  %v967 = vadd.f32 0.0, %v966
  %968 = vmatprep.mubr.bf16.mxu0 0
  %969 = vmatmul.mubr.bf16.gmra.mrb[0].mxu0 %v180
  %v970 = vpop.f32.mrb[0].mxu0
  %v971 = vadd.f32 0.0, %v970
  %v972 = vpop.f32.mrb[0].mxu0
  %v973 = vadd.f32 0.0, %v972
  %v974 = vpop.f32.mrb[0].mxu0
  %v975 = vadd.f32 0.0, %v974
  %v976 = vpop.f32.mrb[0].mxu0
  %v977 = vadd.f32 0.0, %v976
  %978 = vmatprep.mubr.bf16.mxu0 0
  %979 = vmatmul.mubr.bf16.gmra.mrb[0].mxu0 %v181
  %v980 = vpop.f32.mrb[0].mxu0
  %v981 = vadd.f32 0.0, %v980
  %v982 = vpop.f32.mrb[0].mxu0
  %v983 = vadd.f32 0.0, %v982
  %v984 = vpop.f32.mrb[0].mxu0
  %v985 = vadd.f32 0.0, %v984
  %v986 = vpop.f32.mrb[0].mxu0
  %v987 = vadd.f32 0.0, %v986
  %988 = vmatprep.mubr.bf16.mxu0 0
  %989 = vmatmul.mubr.bf16.gmra.mrb[0].mxu0 %v182
  %v990 = vpop.f32.mrb[0].mxu0
  %v991 = vadd.f32 0.0, %v990
  %v992 = vpop.f32.mrb[0].mxu0
  %v993 = vadd.f32 0.0, %v992
  %v994 = vpop.f32.mrb[0].mxu0
  %v995 = vadd.f32 0.0, %v994
  %v996 = vpop.f32.mrb[0].mxu0
  %v997 = vadd.f32 0.0, %v996
  %998 = vmatprep.mubr.bf16.mxu0 0
  %999 = vmatmul.mubr.bf16.gmra.mrb[0].mxu0 %v183
  %v1000 = vpop.f32.mrb[0].mxu0
  %v1001 = vadd.f32 0.0, %v1000
  %v1002 = vpop.f32.mrb[0].mxu0
  %v1003 = vadd.f32 0.0, %v1002
  %v1004 = vpop.f32.mrb[0].mxu0
  %v1005 = vadd.f32 0.0, %v1004
  %v1006 = vpop.f32.mrb[0].mxu0
  %v1007 = vadd.f32 0.0, %v1006
  %1008 = vmatprep.mubr.bf16.mxu0 0
  %1009 = vmatmul.mubr.bf16.gmra.mrb[0].mxu0 %v184
  %v1010 = vpop.f32.mrb[0].mxu0
  %v1011 = vadd.f32 0.0, %v1010
  %v1012 = vpop.f32.mrb[0].mxu0
  %v1013 = vadd.f32 0.0, %v1012
  %v1014 = vpop.f32.mrb[0].mxu0
  %v1015 = vadd.f32 0.0, %v1014
  %v1016 = vpop.f32.mrb[0].mxu0
  %v1017 = vadd.f32 0.0, %v1016
  %1018 = vmatprep.mubr.bf16.mxu0 0
  %1019 = vmatmul.mubr.bf16.gmra.mrb[0].mxu0 %v185
  %v1020 = vpop.f32.mrb[0].mxu0
  %v1021 = vadd.f32 0.0, %v1020
  %v1022 = vpop.f32.mrb[0].mxu0
  %v1023 = vadd.f32 0.0, %v1022
  %v1024 = vpop.f32.mrb[0].mxu0
  %v1025 = vadd.f32 0.0, %v1024
  %v1026 = vpop.f32.mrb[0].mxu0
  %v1027 = vadd.f32 0.0, %v1026
  %1028 = vmatprep.mubr.bf16.mxu0 0
  %1029 = vmatmul.mubr.bf16.gmra.mrb[0].mxu0 %v186
  %v1030 = vpop.f32.mrb[0].mxu0
  %v1031 = vadd.f32 0.0, %v1030
  %v1032 = vpop.f32.mrb[0].mxu0
  %v1033 = vadd.f32 0.0, %v1032
  %v1034 = vpop.f32.mrb[0].mxu0
  %v1035 = vadd.f32 0.0, %v1034
  %v1036 = vpop.f32.mrb[0].mxu0
  %v1037 = vadd.f32 0.0, %v1036
  %1038 = vmatprep.mubr.bf16.mxu0 0
  %1039 = vmatmul.mubr.bf16.gmra.mrb[0].mxu0 %v187
  %v1040 = vpop.f32.mrb[0].mxu0
  %v1041 = vadd.f32 0.0, %v1040
  %v1042 = vpop.f32.mrb[0].mxu0
  %v1043 = vadd.f32 0.0, %v1042
  %v1044 = vpop.f32.mrb[0].mxu0
  %v1045 = vadd.f32 0.0, %v1044
  %v1046 = vpop.f32.mrb[0].mxu0
  %v1047 = vadd.f32 0.0, %v1046
  %1048 = vmatprep.mubr.bf16.mxu0 0
  %1049 = vmatmul.mubr.bf16.gmra.mrb[0].mxu0 %v188
  %v1050 = vpop.f32.mrb[0].mxu0
  %v1051 = vadd.f32 0.0, %v1050
  %v1052 = vpop.f32.mrb[0].mxu0
  %v1053 = vadd.f32 0.0, %v1052
  %v1054 = vpop.f32.mrb[0].mxu0
  %v1055 = vadd.f32 0.0, %v1054
  %v1056 = vpop.f32.mrb[0].mxu0
  %v1057 = vadd.f32 0.0, %v1056
  %1058 = vmatprep.mubr.bf16.mxu0 0
  %1059 = vmatmul.mubr.bf16.gmra.mrb[0].mxu0 %v189
  %v1060 = vpop.f32.mrb[0].mxu0
  %v1061 = vadd.f32 0.0, %v1060
  %v1062 = vpop.f32.mrb[0].mxu0
  %v1063 = vadd.f32 0.0, %v1062
  %v1064 = vpop.f32.mrb[0].mxu0
  %v1065 = vadd.f32 0.0, %v1064
  %v1066 = vpop.f32.mrb[0].mxu0
  %v1067 = vadd.f32 0.0, %v1066
  %1068 = vmatprep.mubr.bf16.mxu0 0
  %1069 = vmatmul.mubr.bf16.gmra.mrb[0].mxu0 %v190
  %v1070 = vpop.f32.mrb[0].mxu0
  %v1071 = vadd.f32 0.0, %v1070
  %v1072 = vpop.f32.mrb[0].mxu0
  %v1073 = vadd.f32 0.0, %v1072
  %v1074 = vpop.f32.mrb[0].mxu0
  %v1075 = vadd.f32 0.0, %v1074
  %v1076 = vpop.f32.mrb[0].mxu0
  %v1077 = vadd.f32 0.0, %v1076
  %1078 = vmatprep.mubr.bf16.mxu0 0
  %1079 = vmatmul.mubr.bf16.gmra.mrb[0].mxu0 %v191
  %v1080 = vpop.f32.mrb[0].mxu0
  %v1081 = vadd.f32 0.0, %v1080
  %v1082 = vpop.f32.mrb[0].mxu0
  %v1083 = vadd.f32 0.0, %v1082
  %v1084 = vpop.f32.mrb[0].mxu0
  %v1085 = vadd.f32 0.0, %v1084
  %v1086 = vpop.f32.mrb[0].mxu0
  %v1087 = vadd.f32 0.0, %v1086
  %1088 = vmatprep.mubr.bf16.mxu0 0
  %1089 = vmatmul.mubr.bf16.gmra.mrb[0].mxu0 %v192
  %v1090 = vpop.f32.mrb[0].mxu0
  %v1091 = vadd.f32 0.0, %v1090
  %v1092 = vpop.f32.mrb[0].mxu0
  %v1093 = vadd.f32 0.0, %v1092
  %v1094 = vpop.f32.mrb[0].mxu0
  %v1095 = vadd.f32 0.0, %v1094
  %v1096 = vpop.f32.mrb[0].mxu0
  %v1097 = vadd.f32 0.0, %v1096
  %1098 = vmatprep.mubr.bf16.mxu0 0
  %1099 = vmatmul.mubr.bf16.gmra.mrb[0].mxu0 %v193
  %v1100 = vpop.f32.mrb[0].mxu0
  %v1101 = vadd.f32 0.0, %v1100
  %v1102 = vpop.f32.mrb[0].mxu0
  %v1103 = vadd.f32 0.0, %v1102
  %v1104 = vpop.f32.mrb[0].mxu0
  %v1105 = vadd.f32 0.0, %v1104
  %v1106 = vpop.f32.mrb[0].mxu0
  %v1107 = vadd.f32 0.0, %v1106
  %1108 = vdwg.mxu0
  %1109 = vmatprep.subr.bf16.mxu0 %v409
  %1110 = vmatpush1.bf16.msra.mxu0 %v408
  %1111 = vmatprep.subr.bf16.mxu0 %v417
  %1112 = vmatpush1.bf16.msra.mxu0 %v416
  %1113 = vmatprep.subr.bf16.mxu0 %v425
  %1114 = vmatpush1.bf16.msra.mxu0 %v424
  %1115 = vmatprep.subr.bf16.mxu0 %v433
  %1116 = vmatpush1.bf16.msra.mxu0 %v432
  %1117 = vmatprep.subr.bf16.mxu0 %v441
  %1118 = vmatpush1.bf16.msra.mxu0 %v440
  %1119 = vmatprep.subr.bf16.mxu0 %v449
  %1120 = vmatpush1.bf16.msra.mxu0 %v448
  %1121 = vmatprep.subr.bf16.mxu0 %v457
  %1122 = vmatpush1.bf16.msra.mxu0 %v456
  %1123 = vmatprep.subr.bf16.mxu0 %v465
  %1124 = vmatpush1.bf16.msra.mxu0 %v464
  %1125 = vmatprep.subr.bf16.mxu0 0
  %1126 = vmatpush1.bf16.msra.mxu0 0
  %1127 = vmatprep.subr.bf16.mxu0 0
  %1128 = vmatpush1.bf16.msra.mxu0 0
  %1129 = vmatprep.subr.bf16.mxu0 0
  %1130 = vmatpush1.bf16.msra.mxu0 0
  %1131 = vmatprep.subr.bf16.mxu0 0
  %1132 = vmatpush1.bf16.msra.mxu0 0
  %1133 = vmatprep.subr.bf16.mxu0 0
  %1134 = vmatpush1.bf16.msra.mxu0 0
  %1135 = vmatprep.subr.bf16.mxu0 0
  %1136 = vmatpush1.bf16.msra.mxu0 0
  %1137 = vmatprep.subr.bf16.mxu0 0
  %1138 = vmatpush1.bf16.msra.mxu0 0
  %1139 = vmatprep.subr.bf16.mxu0 0
  %1140 = vmatpush1.bf16.msra.mxu0 0
  %1141 = vmatprep.mubr.bf16.mxu0 0
  %1142 = vmatmul.mubr.bf16.gmra.mrb[0].mxu0 %v178
  %v1143 = vpop.f32.mrb[0].mxu0
  %v1144 = vadd.f32 0.0, %v1143
  %v1145 = vpop.f32.mrb[0].mxu0
  %v1146 = vadd.f32 0.0, %v1145
  %v1147 = vpop.f32.mrb[0].mxu0
  %v1148 = vadd.f32 0.0, %v1147
  %v1149 = vpop.f32.mrb[0].mxu0
  %v1150 = vadd.f32 0.0, %v1149
  %1151 = vmatprep.mubr.bf16.mxu0 0
  %1152 = vmatmul.mubr.bf16.gmra.mrb[0].mxu0 %v179
  %v1153 = vpop.f32.mrb[0].mxu0
  %v1154 = vadd.f32 0.0, %v1153
  %v1155 = vpop.f32.mrb[0].mxu0
  %v1156 = vadd.f32 0.0, %v1155
  %v1157 = vpop.f32.mrb[0].mxu0
  %v1158 = vadd.f32 0.0, %v1157
  %v1159 = vpop.f32.mrb[0].mxu0
  %v1160 = vadd.f32 0.0, %v1159
  %1161 = vmatprep.mubr.bf16.mxu0 0
  %1162 = vmatmul.mubr.bf16.gmra.mrb[0].mxu0 %v180
  %v1163 = vpop.f32.mrb[0].mxu0
  %v1164 = vadd.f32 0.0, %v1163
  %v1165 = vpop.f32.mrb[0].mxu0
  %v1166 = vadd.f32 0.0, %v1165
  %v1167 = vpop.f32.mrb[0].mxu0
  %v1168 = vadd.f32 0.0, %v1167
  %v1169 = vpop.f32.mrb[0].mxu0
  %v1170 = vadd.f32 0.0, %v1169
  %1171 = vmatprep.mubr.bf16.mxu0 0
  %1172 = vmatmul.mubr.bf16.gmra.mrb[0].mxu0 %v181
  %v1173 = vpop.f32.mrb[0].mxu0
  %v1174 = vadd.f32 0.0, %v1173
  %v1175 = vpop.f32.mrb[0].mxu0
  %v1176 = vadd.f32 0.0, %v1175
  %v1177 = vpop.f32.mrb[0].mxu0
  %v1178 = vadd.f32 0.0, %v1177
  %v1179 = vpop.f32.mrb[0].mxu0
  %v1180 = vadd.f32 0.0, %v1179
  %1181 = vmatprep.mubr.bf16.mxu0 0
  %1182 = vmatmul.mubr.bf16.gmra.mrb[0].mxu0 %v182
  %v1183 = vpop.f32.mrb[0].mxu0
  %v1184 = vadd.f32 0.0, %v1183
  %v1185 = vpop.f32.mrb[0].mxu0
  %v1186 = vadd.f32 0.0, %v1185
  %v1187 = vpop.f32.mrb[0].mxu0
  %v1188 = vadd.f32 0.0, %v1187
  %v1189 = vpop.f32.mrb[0].mxu0
  %v1190 = vadd.f32 0.0, %v1189
  %1191 = vmatprep.mubr.bf16.mxu0 0
  %1192 = vmatmul.mubr.bf16.gmra.mrb[0].mxu0 %v183
  %v1193 = vpop.f32.mrb[0].mxu0
  %v1194 = vadd.f32 0.0, %v1193
  %v1195 = vpop.f32.mrb[0].mxu0
  %v1196 = vadd.f32 0.0, %v1195
  %v1197 = vpop.f32.mrb[0].mxu0
  %v1198 = vadd.f32 0.0, %v1197
  %v1199 = vpop.f32.mrb[0].mxu0
  %v1200 = vadd.f32 0.0, %v1199
  %1201 = vmatprep.mubr.bf16.mxu0 0
  %1202 = vmatmul.mubr.bf16.gmra.mrb[0].mxu0 %v184
  %v1203 = vpop.f32.mrb[0].mxu0
  %v1204 = vadd.f32 0.0, %v1203
  %v1205 = vpop.f32.mrb[0].mxu0
  %v1206 = vadd.f32 0.0, %v1205
  %v1207 = vpop.f32.mrb[0].mxu0
  %v1208 = vadd.f32 0.0, %v1207
  %v1209 = vpop.f32.mrb[0].mxu0
  %v1210 = vadd.f32 0.0, %v1209
  %1211 = vmatprep.mubr.bf16.mxu0 0
  %1212 = vmatmul.mubr.bf16.gmra.mrb[0].mxu0 %v185
  %v1213 = vpop.f32.mrb[0].mxu0
  %v1214 = vadd.f32 0.0, %v1213
  %v1215 = vpop.f32.mrb[0].mxu0
  %v1216 = vadd.f32 0.0, %v1215
  %v1217 = vpop.f32.mrb[0].mxu0
  %v1218 = vadd.f32 0.0, %v1217
  %v1219 = vpop.f32.mrb[0].mxu0
  %v1220 = vadd.f32 0.0, %v1219
  %1221 = vmatprep.mubr.bf16.mxu0 0
  %1222 = vmatmul.mubr.bf16.gmra.mrb[0].mxu0 %v186
  %v1223 = vpop.f32.mrb[0].mxu0
  %v1224 = vadd.f32 0.0, %v1223
  %v1225 = vpop.f32.mrb[0].mxu0
  %v1226 = vadd.f32 0.0, %v1225
  %v1227 = vpop.f32.mrb[0].mxu0
  %v1228 = vadd.f32 0.0, %v1227
  %v1229 = vpop.f32.mrb[0].mxu0
  %v1230 = vadd.f32 0.0, %v1229
  %1231 = vmatprep.mubr.bf16.mxu0 0
  %1232 = vmatmul.mubr.bf16.gmra.mrb[0].mxu0 %v187
  %v1233 = vpop.f32.mrb[0].mxu0
  %v1234 = vadd.f32 0.0, %v1233
  %v1235 = vpop.f32.mrb[0].mxu0
  %v1236 = vadd.f32 0.0, %v1235
  %v1237 = vpop.f32.mrb[0].mxu0
  %v1238 = vadd.f32 0.0, %v1237
  %v1239 = vpop.f32.mrb[0].mxu0
  %v1240 = vadd.f32 0.0, %v1239
  %1241 = vmatprep.mubr.bf16.mxu0 0
  %1242 = vmatmul.mubr.bf16.gmra.mrb[0].mxu0 %v188
  %v1243 = vpop.f32.mrb[0].mxu0
  %v1244 = vadd.f32 0.0, %v1243
  %v1245 = vpop.f32.mrb[0].mxu0
  %v1246 = vadd.f32 0.0, %v1245
  %v1247 = vpop.f32.mrb[0].mxu0
  %v1248 = vadd.f32 0.0, %v1247
  %v1249 = vpop.f32.mrb[0].mxu0
  %v1250 = vadd.f32 0.0, %v1249
  %1251 = vmatprep.mubr.bf16.mxu0 0
  %1252 = vmatmul.mubr.bf16.gmra.mrb[0].mxu0 %v189
  %v1253 = vpop.f32.mrb[0].mxu0
  %v1254 = vadd.f32 0.0, %v1253
  %v1255 = vpop.f32.mrb[0].mxu0
  %v1256 = vadd.f32 0.0, %v1255
  %v1257 = vpop.f32.mrb[0].mxu0
  %v1258 = vadd.f32 0.0, %v1257
  %v1259 = vpop.f32.mrb[0].mxu0
  %v1260 = vadd.f32 0.0, %v1259
  %1261 = vmatprep.mubr.bf16.mxu0 0
  %1262 = vmatmul.mubr.bf16.gmra.mrb[0].mxu0 %v190
  %v1263 = vpop.f32.mrb[0].mxu0
  %v1264 = vadd.f32 0.0, %v1263
  %v1265 = vpop.f32.mrb[0].mxu0
  %v1266 = vadd.f32 0.0, %v1265
  %v1267 = vpop.f32.mrb[0].mxu0
  %v1268 = vadd.f32 0.0, %v1267
  %v1269 = vpop.f32.mrb[0].mxu0
  %v1270 = vadd.f32 0.0, %v1269
  %1271 = vmatprep.mubr.bf16.mxu0 0
  %1272 = vmatmul.mubr.bf16.gmra.mrb[0].mxu0 %v191
  %v1273 = vpop.f32.mrb[0].mxu0
  %v1274 = vadd.f32 0.0, %v1273
  %v1275 = vpop.f32.mrb[0].mxu0
  %v1276 = vadd.f32 0.0, %v1275
  %v1277 = vpop.f32.mrb[0].mxu0
  %v1278 = vadd.f32 0.0, %v1277
  %v1279 = vpop.f32.mrb[0].mxu0
  %v1280 = vadd.f32 0.0, %v1279
  %1281 = vmatprep.mubr.bf16.mxu0 0
  %1282 = vmatmul.mubr.bf16.gmra.mrb[0].mxu0 %v192
  %v1283 = vpop.f32.mrb[0].mxu0
  %v1284 = vadd.f32 0.0, %v1283
  %v1285 = vpop.f32.mrb[0].mxu0
  %v1286 = vadd.f32 0.0, %v1285
  %v1287 = vpop.f32.mrb[0].mxu0
  %v1288 = vadd.f32 0.0, %v1287
  %v1289 = vpop.f32.mrb[0].mxu0
  %v1290 = vadd.f32 0.0, %v1289
  %1291 = vmatprep.mubr.bf16.mxu0 0
  %1292 = vmatmul.mubr.bf16.gmra.mrb[0].mxu0 %v193
  %v1293 = vpop.f32.mrb[0].mxu0
  %v1294 = vadd.f32 0.0, %v1293
  %v1295 = vpop.f32.mrb[0].mxu0
  %v1296 = vadd.f32 0.0, %v1295
  %v1297 = vpop.f32.mrb[0].mxu0
  %v1298 = vadd.f32 0.0, %v1297
  %v1299 = vpop.f32.mrb[0].mxu0
  %v1300 = vadd.f32 0.0, %v1299
  %1301 = vdwg.mxu0
  %v1302 = vpack.c.bf16 %v569, %v565
  %v1303 = vpack.c.bf16 %v571, %v567
  %v1304 = vpack.c.bf16 %v762, %v758
  %v1305 = vpack.c.bf16 %v764, %v760
  %v1306 = vpack.c.bf16 %v955, %v951
  %v1307 = vpack.c.bf16 %v957, %v953
  %v1308 = vpack.c.bf16 %v1148, %v1144
  %v1309 = vpack.c.bf16 %v1150, %v1146
  %v1310 = vpack.c.bf16 %v579, %v575
  %v1311 = vpack.c.bf16 %v581, %v577
  %v1312 = vpack.c.bf16 %v772, %v768
  %v1313 = vpack.c.bf16 %v774, %v770
  %v1314 = vpack.c.bf16 %v965, %v961
  %v1315 = vpack.c.bf16 %v967, %v963
  %v1316 = vpack.c.bf16 %v1158, %v1154
  %v1317 = vpack.c.bf16 %v1160, %v1156
  %v1318 = vpack.c.bf16 %v589, %v585
  %v1319 = vpack.c.bf16 %v591, %v587
  %v1320 = vpack.c.bf16 %v782, %v778
  %v1321 = vpack.c.bf16 %v784, %v780
  %v1322 = vpack.c.bf16 %v975, %v971
  %v1323 = vpack.c.bf16 %v977, %v973
  %v1324 = vpack.c.bf16 %v1168, %v1164
  %v1325 = vpack.c.bf16 %v1170, %v1166
  %v1326 = vpack.c.bf16 %v599, %v595
  %v1327 = vpack.c.bf16 %v601, %v597
  %v1328 = vpack.c.bf16 %v792, %v788
  %v1329 = vpack.c.bf16 %v794, %v790
  %v1330 = vpack.c.bf16 %v985, %v981
  %v1331 = vpack.c.bf16 %v987, %v983
  %v1332 = vpack.c.bf16 %v1178, %v1174
  %v1333 = vpack.c.bf16 %v1180, %v1176
  %v1334 = vpack.c.bf16 %v609, %v605
  %v1335 = vpack.c.bf16 %v611, %v607
  %v1336 = vpack.c.bf16 %v802, %v798
  %v1337 = vpack.c.bf16 %v804, %v800
  %v1338 = vpack.c.bf16 %v995, %v991
  %v1339 = vpack.c.bf16 %v997, %v993
  %v1340 = vpack.c.bf16 %v1188, %v1184
  %v1341 = vpack.c.bf16 %v1190, %v1186
  %v1342 = vpack.c.bf16 %v619, %v615
  %v1343 = vpack.c.bf16 %v621, %v617
  %v1344 = vpack.c.bf16 %v812, %v808
  %v1345 = vpack.c.bf16 %v814, %v810
  %v1346 = vpack.c.bf16 %v1005, %v1001
  %v1347 = vpack.c.bf16 %v1007, %v1003
  %v1348 = vpack.c.bf16 %v1198, %v1194
  %v1349 = vpack.c.bf16 %v1200, %v1196
  %v1350 = vpack.c.bf16 %v629, %v625
  %v1351 = vpack.c.bf16 %v631, %v627
  %v1352 = vpack.c.bf16 %v822, %v818
  %v1353 = vpack.c.bf16 %v824, %v820
  %v1354 = vpack.c.bf16 %v1015, %v1011
  %v1355 = vpack.c.bf16 %v1017, %v1013
  %v1356 = vpack.c.bf16 %v1208, %v1204
  %v1357 = vpack.c.bf16 %v1210, %v1206
  %v1358 = vpack.c.bf16 %v639, %v635
  %v1359 = vpack.c.bf16 %v641, %v637
  %v1360 = vpack.c.bf16 %v832, %v828
  %v1361 = vpack.c.bf16 %v834, %v830
  %v1362 = vpack.c.bf16 %v1025, %v1021
  %v1363 = vpack.c.bf16 %v1027, %v1023
  %v1364 = vpack.c.bf16 %v1218, %v1214
  %v1365 = vpack.c.bf16 %v1220, %v1216
  %v1366 = vpack.c.bf16 %v649, %v645
  %v1367 = vpack.c.bf16 %v651, %v647
  %v1368 = vpack.c.bf16 %v842, %v838
  %v1369 = vpack.c.bf16 %v844, %v840
  %v1370 = vpack.c.bf16 %v1035, %v1031
  %v1371 = vpack.c.bf16 %v1037, %v1033
  %v1372 = vpack.c.bf16 %v1228, %v1224
  %v1373 = vpack.c.bf16 %v1230, %v1226
  %v1374 = vpack.c.bf16 %v659, %v655
  %v1375 = vpack.c.bf16 %v661, %v657
  %v1376 = vpack.c.bf16 %v852, %v848
  %v1377 = vpack.c.bf16 %v854, %v850
  %v1378 = vpack.c.bf16 %v1045, %v1041
  %v1379 = vpack.c.bf16 %v1047, %v1043
  %v1380 = vpack.c.bf16 %v1238, %v1234
  %v1381 = vpack.c.bf16 %v1240, %v1236
  %v1382 = vpack.c.bf16 %v669, %v665
  %v1383 = vpack.c.bf16 %v671, %v667
  %v1384 = vpack.c.bf16 %v862, %v858
  %v1385 = vpack.c.bf16 %v864, %v860
  %v1386 = vpack.c.bf16 %v1055, %v1051
  %v1387 = vpack.c.bf16 %v1057, %v1053
  %v1388 = vpack.c.bf16 %v1248, %v1244
  %v1389 = vpack.c.bf16 %v1250, %v1246
  %v1390 = vpack.c.bf16 %v679, %v675
  %v1391 = vpack.c.bf16 %v681, %v677
  %v1392 = vpack.c.bf16 %v872, %v868
  %v1393 = vpack.c.bf16 %v874, %v870
  %v1394 = vpack.c.bf16 %v1065, %v1061
  %v1395 = vpack.c.bf16 %v1067, %v1063
  %v1396 = vpack.c.bf16 %v1258, %v1254
  %v1397 = vpack.c.bf16 %v1260, %v1256
  %v1398 = vpack.c.bf16 %v689, %v685
  %v1399 = vpack.c.bf16 %v691, %v687
  %v1400 = vpack.c.bf16 %v882, %v878
  %v1401 = vpack.c.bf16 %v884, %v880
  %v1402 = vpack.c.bf16 %v1075, %v1071
  %v1403 = vpack.c.bf16 %v1077, %v1073
  %v1404 = vpack.c.bf16 %v1268, %v1264
  %v1405 = vpack.c.bf16 %v1270, %v1266
  %v1406 = vpack.c.bf16 %v699, %v695
  %v1407 = vpack.c.bf16 %v701, %v697
  %v1408 = vpack.c.bf16 %v892, %v888
  %v1409 = vpack.c.bf16 %v894, %v890
  %v1410 = vpack.c.bf16 %v1085, %v1081
  %v1411 = vpack.c.bf16 %v1087, %v1083
  %v1412 = vpack.c.bf16 %v1278, %v1274
  %v1413 = vpack.c.bf16 %v1280, %v1276
  %v1414 = vpack.c.bf16 %v709, %v705
  %v1415 = vpack.c.bf16 %v711, %v707
  %v1416 = vpack.c.bf16 %v902, %v898
  %v1417 = vpack.c.bf16 %v904, %v900
  %v1418 = vpack.c.bf16 %v1095, %v1091
  %v1419 = vpack.c.bf16 %v1097, %v1093
  %v1420 = vpack.c.bf16 %v1288, %v1284
  %v1421 = vpack.c.bf16 %v1290, %v1286
  %v1422 = vpack.c.bf16 %v719, %v715
  %v1423 = vpack.c.bf16 %v721, %v717
  %v1424 = vpack.c.bf16 %v912, %v908
  %v1425 = vpack.c.bf16 %v914, %v910
  %v1426 = vpack.c.bf16 %v1105, %v1101
  %v1427 = vpack.c.bf16 %v1107, %v1103
  %v1428 = vpack.c.bf16 %v1298, %v1294
  %v1429 = vpack.c.bf16 %v1300, %v1296
  %v1430 = vld [vmem:[%s2] sm:$0xff]
  %v1431 = vld [vmem:[%s2 + $0x8] sm:$0xff]
  %v1432 = vld [vmem:[%s2 + $0x10] sm:$0xff]
  %v1433 = vld [vmem:[%s2 + $0x18] sm:$0xff]
  %v1434 = vld [vmem:[%s2 + $0x20] sm:$0xff]
  %v1435 = vld [vmem:[%s2 + $0x28] sm:$0xff]
  %v1436 = vld [vmem:[%s2 + $0x30] sm:$0xff]
  %v1437 = vld [vmem:[%s2 + $0x38] sm:$0xff]
  %v1438 = vld [vmem:[%s2 + $0x40] sm:$0xff]
  %v1439 = vld [vmem:[%s2 + $0x48] sm:$0xff]
  %v1440 = vld [vmem:[%s2 + $0x50] sm:$0xff]
  %v1441 = vld [vmem:[%s2 + $0x58] sm:$0xff]
  %v1442 = vld [vmem:[%s2 + $0x60] sm:$0xff]
  %v1443 = vld [vmem:[%s2 + $0x68] sm:$0xff]
  %v1444 = vld [vmem:[%s2 + $0x70] sm:$0xff]
  %v1445 = vld [vmem:[%s2 + $0x78] sm:$0xff]
  %v1446 = vld [vmem:[%s2 + $0x80] sm:$0xff]
  %v1447 = vld [vmem:[%s2 + $0x88] sm:$0xff]
  %v1448 = vld [vmem:[%s2 + $0x90] sm:$0xff]
  %v1449 = vld [vmem:[%s2 + $0x98] sm:$0xff]
  %v1450 = vld [vmem:[%s2 + $0xa0] sm:$0xff]
  %v1451 = vld [vmem:[%s2 + $0xa8] sm:$0xff]
  %v1452 = vld [vmem:[%s2 + $0xb0] sm:$0xff]
  %v1453 = vld [vmem:[%s2 + $0xb8] sm:$0xff]
  %v1454 = vld [vmem:[%s2 + $0xc0] sm:$0xff]
  %v1455 = vld [vmem:[%s2 + $0xc8] sm:$0xff]
  %v1456 = vld [vmem:[%s2 + $0xd0] sm:$0xff]
  %v1457 = vld [vmem:[%s2 + $0xd8] sm:$0xff]
  %v1458 = vld [vmem:[%s2 + $0xe0] sm:$0xff]
  %v1459 = vld [vmem:[%s2 + $0xe8] sm:$0xff]
  %v1460 = vld [vmem:[%s2 + $0xf0] sm:$0xff]
  %v1461 = vld [vmem:[%s2 + $0xf8] sm:$0xff]
  %v1462 = vld [vmem:[%s3] sm:$0xff]
  %v1464 = vlaneseq
  %v1465 = vshrl.u32 %v1464, 7
  %v1466 = vsub.s32 0, %v1465
  %v1467 = vrot.slane %v1462, %v1466
  %v1468 = vlaneseq
  %v1469 = vshrl.u32 %v1468, 7
  %v1470 = vsub.s32 1, %v1469
  %v1471 = vrot.slane %v1462, %v1470
  %v1472 = vlaneseq
  %v1473 = vshrl.u32 %v1472, 7
  %v1474 = vsub.s32 2, %v1473
  %v1475 = vrot.slane %v1462, %v1474
  %v1476 = vlaneseq
  %v1477 = vshrl.u32 %v1476, 7
  %v1478 = vsub.s32 3, %v1477
  %v1479 = vrot.slane %v1462, %v1478
  %v1480 = vlaneseq
  %v1481 = vshrl.u32 %v1480, 7
  %v1482 = vsub.s32 4, %v1481
  %v1483 = vrot.slane %v1462, %v1482
  %v1484 = vlaneseq
  %v1485 = vshrl.u32 %v1484, 7
  %v1486 = vsub.s32 5, %v1485
  %v1487 = vrot.slane %v1462, %v1486
  %v1488 = vlaneseq
  %v1489 = vshrl.u32 %v1488, 7
  %v1490 = vsub.s32 6, %v1489
  %v1491 = vrot.slane %v1462, %v1490
  %v1492 = vlaneseq
  %v1493 = vshrl.u32 %v1492, 7
  %v1494 = vsub.s32 7, %v1493
  %v1495 = vrot.slane %v1462, %v1494
  %v1536 = vunpack.c.l.b16 %v1430
  %v1537 = vunpack.c.h.b16 %v1430
  %v1538 = vunpack.c.l.b16 %v1431
  %v1539 = vunpack.c.h.b16 %v1431
  %v1540 = vunpack.c.l.b16 %v1432
  %v1541 = vunpack.c.h.b16 %v1432
  %v1542 = vunpack.c.l.b16 %v1433
  %v1543 = vunpack.c.h.b16 %v1433
  %v1544 = vunpack.c.l.b16 %v1434
  %v1545 = vunpack.c.h.b16 %v1434
  %v1546 = vunpack.c.l.b16 %v1435
  %v1547 = vunpack.c.h.b16 %v1435
  %v1548 = vunpack.c.l.b16 %v1436
  %v1549 = vunpack.c.h.b16 %v1436
  %v1550 = vunpack.c.l.b16 %v1437
  %v1551 = vunpack.c.h.b16 %v1437
  %v1552 = vunpack.c.l.b16 %v1438
  %v1553 = vunpack.c.h.b16 %v1438
  %v1554 = vunpack.c.l.b16 %v1439
  %v1555 = vunpack.c.h.b16 %v1439
  %v1556 = vunpack.c.l.b16 %v1440
  %v1557 = vunpack.c.h.b16 %v1440
  %v1558 = vunpack.c.l.b16 %v1441
  %v1559 = vunpack.c.h.b16 %v1441
  %v1560 = vunpack.c.l.b16 %v1442
  %v1561 = vunpack.c.h.b16 %v1442
  %v1562 = vunpack.c.l.b16 %v1443
  %v1563 = vunpack.c.h.b16 %v1443
  %v1564 = vunpack.c.l.b16 %v1444
  %v1565 = vunpack.c.h.b16 %v1444
  %v1566 = vunpack.c.l.b16 %v1445
  %v1567 = vunpack.c.h.b16 %v1445
  %v1568 = vunpack.c.l.b16 %v1446
  %v1569 = vunpack.c.h.b16 %v1446
  %v1570 = vunpack.c.l.b16 %v1447
  %v1571 = vunpack.c.h.b16 %v1447
  %v1572 = vunpack.c.l.b16 %v1448
  %v1573 = vunpack.c.h.b16 %v1448
  %v1574 = vunpack.c.l.b16 %v1449
  %v1575 = vunpack.c.h.b16 %v1449
  %v1576 = vunpack.c.l.b16 %v1450
  %v1577 = vunpack.c.h.b16 %v1450
  %v1578 = vunpack.c.l.b16 %v1451
  %v1579 = vunpack.c.h.b16 %v1451
  %v1580 = vunpack.c.l.b16 %v1452
  %v1581 = vunpack.c.h.b16 %v1452
  %v1582 = vunpack.c.l.b16 %v1453
  %v1583 = vunpack.c.h.b16 %v1453
  %v1584 = vunpack.c.l.b16 %v1454
  %v1585 = vunpack.c.h.b16 %v1454
  %v1586 = vunpack.c.l.b16 %v1455
  %v1587 = vunpack.c.h.b16 %v1455
  %v1588 = vunpack.c.l.b16 %v1456
  %v1589 = vunpack.c.h.b16 %v1456
  %v1590 = vunpack.c.l.b16 %v1457
  %v1591 = vunpack.c.h.b16 %v1457
  %v1592 = vunpack.c.l.b16 %v1458
  %v1593 = vunpack.c.h.b16 %v1458
  %v1594 = vunpack.c.l.b16 %v1459
  %v1595 = vunpack.c.h.b16 %v1459
  %v1596 = vunpack.c.l.b16 %v1460
  %v1597 = vunpack.c.h.b16 %v1460
  %v1598 = vunpack.c.l.b16 %v1461
  %v1599 = vunpack.c.h.b16 %v1461
  %v1600 = vpack.c.b16 %v1538, %v1536
  %v1601 = vpack.c.b16 %v1539, %v1537
  %v1602 = vpack.c.b16 %v1542, %v1540
  %v1603 = vpack.c.b16 %v1543, %v1541
  %v1604 = vpack.c.b16 %v1546, %v1544
  %v1605 = vpack.c.b16 %v1547, %v1545
  %v1606 = vpack.c.b16 %v1550, %v1548
  %v1607 = vpack.c.b16 %v1551, %v1549
  %v1608 = vpack.c.b16 %v1554, %v1552
  %v1609 = vpack.c.b16 %v1555, %v1553
  %v1610 = vpack.c.b16 %v1558, %v1556
  %v1611 = vpack.c.b16 %v1559, %v1557
  %v1612 = vpack.c.b16 %v1562, %v1560
  %v1613 = vpack.c.b16 %v1563, %v1561
  %v1614 = vpack.c.b16 %v1566, %v1564
  %v1615 = vpack.c.b16 %v1567, %v1565
  %v1616 = vpack.c.b16 %v1570, %v1568
  %v1617 = vpack.c.b16 %v1571, %v1569
  %v1618 = vpack.c.b16 %v1574, %v1572
  %v1619 = vpack.c.b16 %v1575, %v1573
  %v1620 = vpack.c.b16 %v1578, %v1576
  %v1621 = vpack.c.b16 %v1579, %v1577
  %v1622 = vpack.c.b16 %v1582, %v1580
  %v1623 = vpack.c.b16 %v1583, %v1581
  %v1624 = vpack.c.b16 %v1586, %v1584
  %v1625 = vpack.c.b16 %v1587, %v1585
  %v1626 = vpack.c.b16 %v1590, %v1588
  %v1627 = vpack.c.b16 %v1591, %v1589
  %v1628 = vpack.c.b16 %v1594, %v1592
  %v1629 = vpack.c.b16 %v1595, %v1593
  %v1630 = vpack.c.b16 %v1598, %v1596
  %v1631 = vpack.c.b16 %v1599, %v1597
  %1664 = vmatprep.subr.bf16.mxu0 %v1303
  %1665 = vmatpush1.bf16.msra.mxu0 %v1302
  %1666 = vmatprep.subr.bf16.mxu0 %v1311
  %1667 = vmatpush1.bf16.msra.mxu0 %v1310
  %1668 = vmatprep.subr.bf16.mxu0 %v1319
  %1669 = vmatpush1.bf16.msra.mxu0 %v1318
  %1670 = vmatprep.subr.bf16.mxu0 %v1327
  %1671 = vmatpush1.bf16.msra.mxu0 %v1326
  %1672 = vmatprep.subr.bf16.mxu0 %v1335
  %1673 = vmatpush1.bf16.msra.mxu0 %v1334
  %1674 = vmatprep.subr.bf16.mxu0 %v1343
  %1675 = vmatpush1.bf16.msra.mxu0 %v1342
  %1676 = vmatprep.subr.bf16.mxu0 %v1351
  %1677 = vmatpush1.bf16.msra.mxu0 %v1350
  %1678 = vmatprep.subr.bf16.mxu0 %v1359
  %1679 = vmatpush1.bf16.msra.mxu0 %v1358
  %1680 = vmatprep.subr.bf16.mxu0 %v1367
  %1681 = vmatpush1.bf16.msra.mxu0 %v1366
  %1682 = vmatprep.subr.bf16.mxu0 %v1375
  %1683 = vmatpush1.bf16.msra.mxu0 %v1374
  %1684 = vmatprep.subr.bf16.mxu0 %v1383
  %1685 = vmatpush1.bf16.msra.mxu0 %v1382
  %1686 = vmatprep.subr.bf16.mxu0 %v1391
  %1687 = vmatpush1.bf16.msra.mxu0 %v1390
  %1688 = vmatprep.subr.bf16.mxu0 %v1399
  %1689 = vmatpush1.bf16.msra.mxu0 %v1398
  %1690 = vmatprep.subr.bf16.mxu0 %v1407
  %1691 = vmatpush1.bf16.msra.mxu0 %v1406
  %1692 = vmatprep.subr.bf16.mxu0 %v1415
  %1693 = vmatpush1.bf16.msra.mxu0 %v1414
  %1694 = vmatprep.subr.bf16.mxu0 %v1423
  %1695 = vmatpush1.bf16.msra.mxu0 %v1422
  %1696 = vmatprep.mubr.bf16.mxu0 %v1601
  %1697 = vmatmul.mubr.bf16.gmra.mrb[0].mxu0 %v1600
  %v1698 = vpop.f32.mrb[0].mxu0
  %v1699 = vadd.f32 %v1467, %v1698
  %v1700 = vpop.f32.mrb[0].mxu0
  %v1701 = vadd.f32 %v1471, %v1700
  %v1702 = vpop.f32.mrb[0].mxu0
  %v1703 = vadd.f32 %v1467, %v1702
  %v1704 = vpop.f32.mrb[0].mxu0
  %v1705 = vadd.f32 %v1471, %v1704
  %1706 = vmatprep.mubr.bf16.mxu0 %v1603
  %1707 = vmatmul.mubr.bf16.gmra.mrb[0].mxu0 %v1602
  %v1708 = vpop.f32.mrb[0].mxu0
  %v1709 = vadd.f32 %v1467, %v1708
  %v1710 = vpop.f32.mrb[0].mxu0
  %v1711 = vadd.f32 %v1471, %v1710
  %v1712 = vpop.f32.mrb[0].mxu0
  %v1713 = vadd.f32 %v1467, %v1712
  %v1714 = vpop.f32.mrb[0].mxu0
  %v1715 = vadd.f32 %v1471, %v1714
  %1716 = vmatprep.mubr.bf16.mxu0 %v1605
  %1717 = vmatmul.mubr.bf16.gmra.mrb[0].mxu0 %v1604
  %v1718 = vpop.f32.mrb[0].mxu0
  %v1719 = vadd.f32 %v1467, %v1718
  %v1720 = vpop.f32.mrb[0].mxu0
  %v1721 = vadd.f32 %v1471, %v1720
  %v1722 = vpop.f32.mrb[0].mxu0
  %v1723 = vadd.f32 %v1467, %v1722
  %v1724 = vpop.f32.mrb[0].mxu0
  %v1725 = vadd.f32 %v1471, %v1724
  %1726 = vmatprep.mubr.bf16.mxu0 %v1607
  %1727 = vmatmul.mubr.bf16.gmra.mrb[0].mxu0 %v1606
  %v1728 = vpop.f32.mrb[0].mxu0
  %v1729 = vadd.f32 %v1467, %v1728
  %v1730 = vpop.f32.mrb[0].mxu0
  %v1731 = vadd.f32 %v1471, %v1730
  %v1732 = vpop.f32.mrb[0].mxu0
  %v1733 = vadd.f32 %v1467, %v1732
  %v1734 = vpop.f32.mrb[0].mxu0
  %v1735 = vadd.f32 %v1471, %v1734
  %1736 = vmatprep.mubr.bf16.mxu0 %v1609
  %1737 = vmatmul.mubr.bf16.gmra.mrb[0].mxu0 %v1608
  %v1738 = vpop.f32.mrb[0].mxu0
  %v1739 = vadd.f32 %v1467, %v1738
  %v1740 = vpop.f32.mrb[0].mxu0
  %v1741 = vadd.f32 %v1471, %v1740
  %v1742 = vpop.f32.mrb[0].mxu0
  %v1743 = vadd.f32 %v1467, %v1742
  %v1744 = vpop.f32.mrb[0].mxu0
  %v1745 = vadd.f32 %v1471, %v1744
  %1746 = vmatprep.mubr.bf16.mxu0 %v1611
  %1747 = vmatmul.mubr.bf16.gmra.mrb[0].mxu0 %v1610
  %v1748 = vpop.f32.mrb[0].mxu0
  %v1749 = vadd.f32 %v1467, %v1748
  %v1750 = vpop.f32.mrb[0].mxu0
  %v1751 = vadd.f32 %v1471, %v1750
  %v1752 = vpop.f32.mrb[0].mxu0
  %v1753 = vadd.f32 %v1467, %v1752
  %v1754 = vpop.f32.mrb[0].mxu0
  %v1755 = vadd.f32 %v1471, %v1754
  %1756 = vmatprep.mubr.bf16.mxu0 %v1613
  %1757 = vmatmul.mubr.bf16.gmra.mrb[0].mxu0 %v1612
  %v1758 = vpop.f32.mrb[0].mxu0
  %v1759 = vadd.f32 %v1467, %v1758
  %v1760 = vpop.f32.mrb[0].mxu0
  %v1761 = vadd.f32 %v1471, %v1760
  %v1762 = vpop.f32.mrb[0].mxu0
  %v1763 = vadd.f32 %v1467, %v1762
  %v1764 = vpop.f32.mrb[0].mxu0
  %v1765 = vadd.f32 %v1471, %v1764
  %1766 = vmatprep.mubr.bf16.mxu0 %v1615
  %1767 = vmatmul.mubr.bf16.gmra.mrb[0].mxu0 %v1614
  %v1768 = vpop.f32.mrb[0].mxu0
  %v1769 = vadd.f32 %v1467, %v1768
  %v1770 = vpop.f32.mrb[0].mxu0
  %v1771 = vadd.f32 %v1471, %v1770
  %v1772 = vpop.f32.mrb[0].mxu0
  %v1773 = vadd.f32 %v1467, %v1772
  %v1774 = vpop.f32.mrb[0].mxu0
  %v1775 = vadd.f32 %v1471, %v1774
  %1776 = vmatprep.mubr.bf16.mxu0 %v1617
  %1777 = vmatmul.mubr.bf16.gmra.mrb[0].mxu0 %v1616
  %v1778 = vpop.f32.mrb[0].mxu0
  %v1779 = vadd.f32 %v1467, %v1778
  %v1780 = vpop.f32.mrb[0].mxu0
  %v1781 = vadd.f32 %v1471, %v1780
  %v1782 = vpop.f32.mrb[0].mxu0
  %v1783 = vadd.f32 %v1467, %v1782
  %v1784 = vpop.f32.mrb[0].mxu0
  %v1785 = vadd.f32 %v1471, %v1784
  %1786 = vmatprep.mubr.bf16.mxu0 %v1619
  %1787 = vmatmul.mubr.bf16.gmra.mrb[0].mxu0 %v1618
  %v1788 = vpop.f32.mrb[0].mxu0
  %v1789 = vadd.f32 %v1467, %v1788
  %v1790 = vpop.f32.mrb[0].mxu0
  %v1791 = vadd.f32 %v1471, %v1790
  %v1792 = vpop.f32.mrb[0].mxu0
  %v1793 = vadd.f32 %v1467, %v1792
  %v1794 = vpop.f32.mrb[0].mxu0
  %v1795 = vadd.f32 %v1471, %v1794
  %1796 = vmatprep.mubr.bf16.mxu0 %v1621
  %1797 = vmatmul.mubr.bf16.gmra.mrb[0].mxu0 %v1620
  %v1798 = vpop.f32.mrb[0].mxu0
  %v1799 = vadd.f32 %v1467, %v1798
  %v1800 = vpop.f32.mrb[0].mxu0
  %v1801 = vadd.f32 %v1471, %v1800
  %v1802 = vpop.f32.mrb[0].mxu0
  %v1803 = vadd.f32 %v1467, %v1802
  %v1804 = vpop.f32.mrb[0].mxu0
  %v1805 = vadd.f32 %v1471, %v1804
  %1806 = vmatprep.mubr.bf16.mxu0 %v1623
  %1807 = vmatmul.mubr.bf16.gmra.mrb[0].mxu0 %v1622
  %v1808 = vpop.f32.mrb[0].mxu0
  %v1809 = vadd.f32 %v1467, %v1808
  %v1810 = vpop.f32.mrb[0].mxu0
  %v1811 = vadd.f32 %v1471, %v1810
  %v1812 = vpop.f32.mrb[0].mxu0
  %v1813 = vadd.f32 %v1467, %v1812
  %v1814 = vpop.f32.mrb[0].mxu0
  %v1815 = vadd.f32 %v1471, %v1814
  %1816 = vmatprep.mubr.bf16.mxu0 %v1625
  %1817 = vmatmul.mubr.bf16.gmra.mrb[0].mxu0 %v1624
  %v1818 = vpop.f32.mrb[0].mxu0
  %v1819 = vadd.f32 %v1467, %v1818
  %v1820 = vpop.f32.mrb[0].mxu0
  %v1821 = vadd.f32 %v1471, %v1820
  %v1822 = vpop.f32.mrb[0].mxu0
  %v1823 = vadd.f32 %v1467, %v1822
  %v1824 = vpop.f32.mrb[0].mxu0
  %v1825 = vadd.f32 %v1471, %v1824
  %1826 = vmatprep.mubr.bf16.mxu0 %v1627
  %1827 = vmatmul.mubr.bf16.gmra.mrb[0].mxu0 %v1626
  %v1828 = vpop.f32.mrb[0].mxu0
  %v1829 = vadd.f32 %v1467, %v1828
  %v1830 = vpop.f32.mrb[0].mxu0
  %v1831 = vadd.f32 %v1471, %v1830
  %v1832 = vpop.f32.mrb[0].mxu0
  %v1833 = vadd.f32 %v1467, %v1832
  %v1834 = vpop.f32.mrb[0].mxu0
  %v1835 = vadd.f32 %v1471, %v1834
  %1836 = vmatprep.mubr.bf16.mxu0 %v1629
  %1837 = vmatmul.mubr.bf16.gmra.mrb[0].mxu0 %v1628
  %v1838 = vpop.f32.mrb[0].mxu0
  %v1839 = vadd.f32 %v1467, %v1838
  %v1840 = vpop.f32.mrb[0].mxu0
  %v1841 = vadd.f32 %v1471, %v1840
  %v1842 = vpop.f32.mrb[0].mxu0
  %v1843 = vadd.f32 %v1467, %v1842
  %v1844 = vpop.f32.mrb[0].mxu0
  %v1845 = vadd.f32 %v1471, %v1844
  %1846 = vmatprep.mubr.bf16.mxu0 %v1631
  %1847 = vmatmul.mubr.bf16.gmra.mrb[0].mxu0 %v1630
  %v1848 = vpop.f32.mrb[0].mxu0
  %v1849 = vadd.f32 %v1467, %v1848
  %v1850 = vpop.f32.mrb[0].mxu0
  %v1851 = vadd.f32 %v1471, %v1850
  %v1852 = vpop.f32.mrb[0].mxu0
  %v1853 = vadd.f32 %v1467, %v1852
  %v1854 = vpop.f32.mrb[0].mxu0
  %v1855 = vadd.f32 %v1471, %v1854
  %1856 = vdwg.mxu0
  %1857 = vmatprep.subr.bf16.mxu0 %v1305
  %1858 = vmatpush1.bf16.msra.mxu0 %v1304
  %1859 = vmatprep.subr.bf16.mxu0 %v1313
  %1860 = vmatpush1.bf16.msra.mxu0 %v1312
  %1861 = vmatprep.subr.bf16.mxu0 %v1321
  %1862 = vmatpush1.bf16.msra.mxu0 %v1320
  %1863 = vmatprep.subr.bf16.mxu0 %v1329
  %1864 = vmatpush1.bf16.msra.mxu0 %v1328
  %1865 = vmatprep.subr.bf16.mxu0 %v1337
  %1866 = vmatpush1.bf16.msra.mxu0 %v1336
  %1867 = vmatprep.subr.bf16.mxu0 %v1345
  %1868 = vmatpush1.bf16.msra.mxu0 %v1344
  %1869 = vmatprep.subr.bf16.mxu0 %v1353
  %1870 = vmatpush1.bf16.msra.mxu0 %v1352
  %1871 = vmatprep.subr.bf16.mxu0 %v1361
  %1872 = vmatpush1.bf16.msra.mxu0 %v1360
  %1873 = vmatprep.subr.bf16.mxu0 %v1369
  %1874 = vmatpush1.bf16.msra.mxu0 %v1368
  %1875 = vmatprep.subr.bf16.mxu0 %v1377
  %1876 = vmatpush1.bf16.msra.mxu0 %v1376
  %1877 = vmatprep.subr.bf16.mxu0 %v1385
  %1878 = vmatpush1.bf16.msra.mxu0 %v1384
  %1879 = vmatprep.subr.bf16.mxu0 %v1393
  %1880 = vmatpush1.bf16.msra.mxu0 %v1392
  %1881 = vmatprep.subr.bf16.mxu0 %v1401
  %1882 = vmatpush1.bf16.msra.mxu0 %v1400
  %1883 = vmatprep.subr.bf16.mxu0 %v1409
  %1884 = vmatpush1.bf16.msra.mxu0 %v1408
  %1885 = vmatprep.subr.bf16.mxu0 %v1417
  %1886 = vmatpush1.bf16.msra.mxu0 %v1416
  %1887 = vmatprep.subr.bf16.mxu0 %v1425
  %1888 = vmatpush1.bf16.msra.mxu0 %v1424
  %1889 = vmatprep.mubr.bf16.mxu0 %v1601
  %1890 = vmatmul.mubr.bf16.gmra.mrb[0].mxu0 %v1600
  %v1891 = vpop.f32.mrb[0].mxu0
  %v1892 = vadd.f32 %v1475, %v1891
  %v1893 = vpop.f32.mrb[0].mxu0
  %v1894 = vadd.f32 %v1479, %v1893
  %v1895 = vpop.f32.mrb[0].mxu0
  %v1896 = vadd.f32 %v1475, %v1895
  %v1897 = vpop.f32.mrb[0].mxu0
  %v1898 = vadd.f32 %v1479, %v1897
  %1899 = vmatprep.mubr.bf16.mxu0 %v1603
  %1900 = vmatmul.mubr.bf16.gmra.mrb[0].mxu0 %v1602
  %v1901 = vpop.f32.mrb[0].mxu0
  %v1902 = vadd.f32 %v1475, %v1901
  %v1903 = vpop.f32.mrb[0].mxu0
  %v1904 = vadd.f32 %v1479, %v1903
  %v1905 = vpop.f32.mrb[0].mxu0
  %v1906 = vadd.f32 %v1475, %v1905
  %v1907 = vpop.f32.mrb[0].mxu0
  %v1908 = vadd.f32 %v1479, %v1907
  %1909 = vmatprep.mubr.bf16.mxu0 %v1605
  %1910 = vmatmul.mubr.bf16.gmra.mrb[0].mxu0 %v1604
  %v1911 = vpop.f32.mrb[0].mxu0
  %v1912 = vadd.f32 %v1475, %v1911
  %v1913 = vpop.f32.mrb[0].mxu0
  %v1914 = vadd.f32 %v1479, %v1913
  %v1915 = vpop.f32.mrb[0].mxu0
  %v1916 = vadd.f32 %v1475, %v1915
  %v1917 = vpop.f32.mrb[0].mxu0
  %v1918 = vadd.f32 %v1479, %v1917
  %1919 = vmatprep.mubr.bf16.mxu0 %v1607
  %1920 = vmatmul.mubr.bf16.gmra.mrb[0].mxu0 %v1606
  %v1921 = vpop.f32.mrb[0].mxu0
  %v1922 = vadd.f32 %v1475, %v1921
  %v1923 = vpop.f32.mrb[0].mxu0
  %v1924 = vadd.f32 %v1479, %v1923
  %v1925 = vpop.f32.mrb[0].mxu0
  %v1926 = vadd.f32 %v1475, %v1925
  %v1927 = vpop.f32.mrb[0].mxu0
  %v1928 = vadd.f32 %v1479, %v1927
  %1929 = vmatprep.mubr.bf16.mxu0 %v1609
  %1930 = vmatmul.mubr.bf16.gmra.mrb[0].mxu0 %v1608
  %v1931 = vpop.f32.mrb[0].mxu0
  %v1932 = vadd.f32 %v1475, %v1931
  %v1933 = vpop.f32.mrb[0].mxu0
  %v1934 = vadd.f32 %v1479, %v1933
  %v1935 = vpop.f32.mrb[0].mxu0
  %v1936 = vadd.f32 %v1475, %v1935
  %v1937 = vpop.f32.mrb[0].mxu0
  %v1938 = vadd.f32 %v1479, %v1937
  %1939 = vmatprep.mubr.bf16.mxu0 %v1611
  %1940 = vmatmul.mubr.bf16.gmra.mrb[0].mxu0 %v1610
  %v1941 = vpop.f32.mrb[0].mxu0
  %v1942 = vadd.f32 %v1475, %v1941
  %v1943 = vpop.f32.mrb[0].mxu0
  %v1944 = vadd.f32 %v1479, %v1943
  %v1945 = vpop.f32.mrb[0].mxu0
  %v1946 = vadd.f32 %v1475, %v1945
  %v1947 = vpop.f32.mrb[0].mxu0
  %v1948 = vadd.f32 %v1479, %v1947
  %1949 = vmatprep.mubr.bf16.mxu0 %v1613
  %1950 = vmatmul.mubr.bf16.gmra.mrb[0].mxu0 %v1612
  %v1951 = vpop.f32.mrb[0].mxu0
  %v1952 = vadd.f32 %v1475, %v1951
  %v1953 = vpop.f32.mrb[0].mxu0
  %v1954 = vadd.f32 %v1479, %v1953
  %v1955 = vpop.f32.mrb[0].mxu0
  %v1956 = vadd.f32 %v1475, %v1955
  %v1957 = vpop.f32.mrb[0].mxu0
  %v1958 = vadd.f32 %v1479, %v1957
  %1959 = vmatprep.mubr.bf16.mxu0 %v1615
  %1960 = vmatmul.mubr.bf16.gmra.mrb[0].mxu0 %v1614
  %v1961 = vpop.f32.mrb[0].mxu0
  %v1962 = vadd.f32 %v1475, %v1961
  %v1963 = vpop.f32.mrb[0].mxu0
  %v1964 = vadd.f32 %v1479, %v1963
  %v1965 = vpop.f32.mrb[0].mxu0
  %v1966 = vadd.f32 %v1475, %v1965
  %v1967 = vpop.f32.mrb[0].mxu0
  %v1968 = vadd.f32 %v1479, %v1967
  %1969 = vmatprep.mubr.bf16.mxu0 %v1617
  %1970 = vmatmul.mubr.bf16.gmra.mrb[0].mxu0 %v1616
  %v1971 = vpop.f32.mrb[0].mxu0
  %v1972 = vadd.f32 %v1475, %v1971
  %v1973 = vpop.f32.mrb[0].mxu0
  %v1974 = vadd.f32 %v1479, %v1973
  %v1975 = vpop.f32.mrb[0].mxu0
  %v1976 = vadd.f32 %v1475, %v1975
  %v1977 = vpop.f32.mrb[0].mxu0
  %v1978 = vadd.f32 %v1479, %v1977
  %1979 = vmatprep.mubr.bf16.mxu0 %v1619
  %1980 = vmatmul.mubr.bf16.gmra.mrb[0].mxu0 %v1618
  %v1981 = vpop.f32.mrb[0].mxu0
  %v1982 = vadd.f32 %v1475, %v1981
  %v1983 = vpop.f32.mrb[0].mxu0
  %v1984 = vadd.f32 %v1479, %v1983
  %v1985 = vpop.f32.mrb[0].mxu0
  %v1986 = vadd.f32 %v1475, %v1985
  %v1987 = vpop.f32.mrb[0].mxu0
  %v1988 = vadd.f32 %v1479, %v1987
  %1989 = vmatprep.mubr.bf16.mxu0 %v1621
  %1990 = vmatmul.mubr.bf16.gmra.mrb[0].mxu0 %v1620
  %v1991 = vpop.f32.mrb[0].mxu0
  %v1992 = vadd.f32 %v1475, %v1991
  %v1993 = vpop.f32.mrb[0].mxu0
  %v1994 = vadd.f32 %v1479, %v1993
  %v1995 = vpop.f32.mrb[0].mxu0
  %v1996 = vadd.f32 %v1475, %v1995
  %v1997 = vpop.f32.mrb[0].mxu0
  %v1998 = vadd.f32 %v1479, %v1997
  %1999 = vmatprep.mubr.bf16.mxu0 %v1623
  %2000 = vmatmul.mubr.bf16.gmra.mrb[0].mxu0 %v1622
  %v2001 = vpop.f32.mrb[0].mxu0
  %v2002 = vadd.f32 %v1475, %v2001
  %v2003 = vpop.f32.mrb[0].mxu0
  %v2004 = vadd.f32 %v1479, %v2003
  %v2005 = vpop.f32.mrb[0].mxu0
  %v2006 = vadd.f32 %v1475, %v2005
  %v2007 = vpop.f32.mrb[0].mxu0
  %v2008 = vadd.f32 %v1479, %v2007
  %2009 = vmatprep.mubr.bf16.mxu0 %v1625
  %2010 = vmatmul.mubr.bf16.gmra.mrb[0].mxu0 %v1624
  %v2011 = vpop.f32.mrb[0].mxu0
  %v2012 = vadd.f32 %v1475, %v2011
  %v2013 = vpop.f32.mrb[0].mxu0
  %v2014 = vadd.f32 %v1479, %v2013
  %v2015 = vpop.f32.mrb[0].mxu0
  %v2016 = vadd.f32 %v1475, %v2015
  %v2017 = vpop.f32.mrb[0].mxu0
  %v2018 = vadd.f32 %v1479, %v2017
  %2019 = vmatprep.mubr.bf16.mxu0 %v1627
  %2020 = vmatmul.mubr.bf16.gmra.mrb[0].mxu0 %v1626
  %v2021 = vpop.f32.mrb[0].mxu0
  %v2022 = vadd.f32 %v1475, %v2021
  %v2023 = vpop.f32.mrb[0].mxu0
  %v2024 = vadd.f32 %v1479, %v2023
  %v2025 = vpop.f32.mrb[0].mxu0
  %v2026 = vadd.f32 %v1475, %v2025
  %v2027 = vpop.f32.mrb[0].mxu0
  %v2028 = vadd.f32 %v1479, %v2027
  %2029 = vmatprep.mubr.bf16.mxu0 %v1629
  %2030 = vmatmul.mubr.bf16.gmra.mrb[0].mxu0 %v1628
  %v2031 = vpop.f32.mrb[0].mxu0
  %v2032 = vadd.f32 %v1475, %v2031
  %v2033 = vpop.f32.mrb[0].mxu0
  %v2034 = vadd.f32 %v1479, %v2033
  %v2035 = vpop.f32.mrb[0].mxu0
  %v2036 = vadd.f32 %v1475, %v2035
  %v2037 = vpop.f32.mrb[0].mxu0
  %v2038 = vadd.f32 %v1479, %v2037
  %2039 = vmatprep.mubr.bf16.mxu0 %v1631
  %2040 = vmatmul.mubr.bf16.gmra.mrb[0].mxu0 %v1630
  %v2041 = vpop.f32.mrb[0].mxu0
  %v2042 = vadd.f32 %v1475, %v2041
  %v2043 = vpop.f32.mrb[0].mxu0
  %v2044 = vadd.f32 %v1479, %v2043
  %v2045 = vpop.f32.mrb[0].mxu0
  %v2046 = vadd.f32 %v1475, %v2045
  %v2047 = vpop.f32.mrb[0].mxu0
  %v2048 = vadd.f32 %v1479, %v2047
  %2049 = vdwg.mxu0
  %2050 = vmatprep.subr.bf16.mxu0 %v1307
  %2051 = vmatpush1.bf16.msra.mxu0 %v1306
  %2052 = vmatprep.subr.bf16.mxu0 %v1315
  %2053 = vmatpush1.bf16.msra.mxu0 %v1314
  %2054 = vmatprep.subr.bf16.mxu0 %v1323
  %2055 = vmatpush1.bf16.msra.mxu0 %v1322
  %2056 = vmatprep.subr.bf16.mxu0 %v1331
  %2057 = vmatpush1.bf16.msra.mxu0 %v1330
  %2058 = vmatprep.subr.bf16.mxu0 %v1339
  %2059 = vmatpush1.bf16.msra.mxu0 %v1338
  %2060 = vmatprep.subr.bf16.mxu0 %v1347
  %2061 = vmatpush1.bf16.msra.mxu0 %v1346
  %2062 = vmatprep.subr.bf16.mxu0 %v1355
  %2063 = vmatpush1.bf16.msra.mxu0 %v1354
  %2064 = vmatprep.subr.bf16.mxu0 %v1363
  %2065 = vmatpush1.bf16.msra.mxu0 %v1362
  %2066 = vmatprep.subr.bf16.mxu0 %v1371
  %2067 = vmatpush1.bf16.msra.mxu0 %v1370
  %2068 = vmatprep.subr.bf16.mxu0 %v1379
  %2069 = vmatpush1.bf16.msra.mxu0 %v1378
  %2070 = vmatprep.subr.bf16.mxu0 %v1387
  %2071 = vmatpush1.bf16.msra.mxu0 %v1386
  %2072 = vmatprep.subr.bf16.mxu0 %v1395
  %2073 = vmatpush1.bf16.msra.mxu0 %v1394
  %2074 = vmatprep.subr.bf16.mxu0 %v1403
  %2075 = vmatpush1.bf16.msra.mxu0 %v1402
  %2076 = vmatprep.subr.bf16.mxu0 %v1411
  %2077 = vmatpush1.bf16.msra.mxu0 %v1410
  %2078 = vmatprep.subr.bf16.mxu0 %v1419
  %2079 = vmatpush1.bf16.msra.mxu0 %v1418
  %2080 = vmatprep.subr.bf16.mxu0 %v1427
  %2081 = vmatpush1.bf16.msra.mxu0 %v1426
  %2082 = vmatprep.mubr.bf16.mxu0 %v1601
  %2083 = vmatmul.mubr.bf16.gmra.mrb[0].mxu0 %v1600
  %v2084 = vpop.f32.mrb[0].mxu0
  %v2085 = vadd.f32 %v1483, %v2084
  %v2086 = vpop.f32.mrb[0].mxu0
  %v2087 = vadd.f32 %v1487, %v2086
  %v2088 = vpop.f32.mrb[0].mxu0
  %v2089 = vadd.f32 %v1483, %v2088
  %v2090 = vpop.f32.mrb[0].mxu0
  %v2091 = vadd.f32 %v1487, %v2090
  %2092 = vmatprep.mubr.bf16.mxu0 %v1603
  %2093 = vmatmul.mubr.bf16.gmra.mrb[0].mxu0 %v1602
  %v2094 = vpop.f32.mrb[0].mxu0
  %v2095 = vadd.f32 %v1483, %v2094
  %v2096 = vpop.f32.mrb[0].mxu0
  %v2097 = vadd.f32 %v1487, %v2096
  %v2098 = vpop.f32.mrb[0].mxu0
  %v2099 = vadd.f32 %v1483, %v2098
  %v2100 = vpop.f32.mrb[0].mxu0
  %v2101 = vadd.f32 %v1487, %v2100
  %2102 = vmatprep.mubr.bf16.mxu0 %v1605
  %2103 = vmatmul.mubr.bf16.gmra.mrb[0].mxu0 %v1604
  %v2104 = vpop.f32.mrb[0].mxu0
  %v2105 = vadd.f32 %v1483, %v2104
  %v2106 = vpop.f32.mrb[0].mxu0
  %v2107 = vadd.f32 %v1487, %v2106
  %v2108 = vpop.f32.mrb[0].mxu0
  %v2109 = vadd.f32 %v1483, %v2108
  %v2110 = vpop.f32.mrb[0].mxu0
  %v2111 = vadd.f32 %v1487, %v2110
  %2112 = vmatprep.mubr.bf16.mxu0 %v1607
  %2113 = vmatmul.mubr.bf16.gmra.mrb[0].mxu0 %v1606
  %v2114 = vpop.f32.mrb[0].mxu0
  %v2115 = vadd.f32 %v1483, %v2114
  %v2116 = vpop.f32.mrb[0].mxu0
  %v2117 = vadd.f32 %v1487, %v2116
  %v2118 = vpop.f32.mrb[0].mxu0
  %v2119 = vadd.f32 %v1483, %v2118
  %v2120 = vpop.f32.mrb[0].mxu0
  %v2121 = vadd.f32 %v1487, %v2120
  %2122 = vmatprep.mubr.bf16.mxu0 %v1609
  %2123 = vmatmul.mubr.bf16.gmra.mrb[0].mxu0 %v1608
  %v2124 = vpop.f32.mrb[0].mxu0
  %v2125 = vadd.f32 %v1483, %v2124
  %v2126 = vpop.f32.mrb[0].mxu0
  %v2127 = vadd.f32 %v1487, %v2126
  %v2128 = vpop.f32.mrb[0].mxu0
  %v2129 = vadd.f32 %v1483, %v2128
  %v2130 = vpop.f32.mrb[0].mxu0
  %v2131 = vadd.f32 %v1487, %v2130
  %2132 = vmatprep.mubr.bf16.mxu0 %v1611
  %2133 = vmatmul.mubr.bf16.gmra.mrb[0].mxu0 %v1610
  %v2134 = vpop.f32.mrb[0].mxu0
  %v2135 = vadd.f32 %v1483, %v2134
  %v2136 = vpop.f32.mrb[0].mxu0
  %v2137 = vadd.f32 %v1487, %v2136
  %v2138 = vpop.f32.mrb[0].mxu0
  %v2139 = vadd.f32 %v1483, %v2138
  %v2140 = vpop.f32.mrb[0].mxu0
  %v2141 = vadd.f32 %v1487, %v2140
  %2142 = vmatprep.mubr.bf16.mxu0 %v1613
  %2143 = vmatmul.mubr.bf16.gmra.mrb[0].mxu0 %v1612
  %v2144 = vpop.f32.mrb[0].mxu0
  %v2145 = vadd.f32 %v1483, %v2144
  %v2146 = vpop.f32.mrb[0].mxu0
  %v2147 = vadd.f32 %v1487, %v2146
  %v2148 = vpop.f32.mrb[0].mxu0
  %v2149 = vadd.f32 %v1483, %v2148
  %v2150 = vpop.f32.mrb[0].mxu0
  %v2151 = vadd.f32 %v1487, %v2150
  %2152 = vmatprep.mubr.bf16.mxu0 %v1615
  %2153 = vmatmul.mubr.bf16.gmra.mrb[0].mxu0 %v1614
  %v2154 = vpop.f32.mrb[0].mxu0
  %v2155 = vadd.f32 %v1483, %v2154
  %v2156 = vpop.f32.mrb[0].mxu0
  %v2157 = vadd.f32 %v1487, %v2156
  %v2158 = vpop.f32.mrb[0].mxu0
  %v2159 = vadd.f32 %v1483, %v2158
  %v2160 = vpop.f32.mrb[0].mxu0
  %v2161 = vadd.f32 %v1487, %v2160
  %2162 = vmatprep.mubr.bf16.mxu0 %v1617
  %2163 = vmatmul.mubr.bf16.gmra.mrb[0].mxu0 %v1616
  %v2164 = vpop.f32.mrb[0].mxu0
  %v2165 = vadd.f32 %v1483, %v2164
  %v2166 = vpop.f32.mrb[0].mxu0
  %v2167 = vadd.f32 %v1487, %v2166
  %v2168 = vpop.f32.mrb[0].mxu0
  %v2169 = vadd.f32 %v1483, %v2168
  %v2170 = vpop.f32.mrb[0].mxu0
  %v2171 = vadd.f32 %v1487, %v2170
  %2172 = vmatprep.mubr.bf16.mxu0 %v1619
  %2173 = vmatmul.mubr.bf16.gmra.mrb[0].mxu0 %v1618
  %v2174 = vpop.f32.mrb[0].mxu0
  %v2175 = vadd.f32 %v1483, %v2174
  %v2176 = vpop.f32.mrb[0].mxu0
  %v2177 = vadd.f32 %v1487, %v2176
  %v2178 = vpop.f32.mrb[0].mxu0
  %v2179 = vadd.f32 %v1483, %v2178
  %v2180 = vpop.f32.mrb[0].mxu0
  %v2181 = vadd.f32 %v1487, %v2180
  %2182 = vmatprep.mubr.bf16.mxu0 %v1621
  %2183 = vmatmul.mubr.bf16.gmra.mrb[0].mxu0 %v1620
  %v2184 = vpop.f32.mrb[0].mxu0
  %v2185 = vadd.f32 %v1483, %v2184
  %v2186 = vpop.f32.mrb[0].mxu0
  %v2187 = vadd.f32 %v1487, %v2186
  %v2188 = vpop.f32.mrb[0].mxu0
  %v2189 = vadd.f32 %v1483, %v2188
  %v2190 = vpop.f32.mrb[0].mxu0
  %v2191 = vadd.f32 %v1487, %v2190
  %2192 = vmatprep.mubr.bf16.mxu0 %v1623
  %2193 = vmatmul.mubr.bf16.gmra.mrb[0].mxu0 %v1622
  %v2194 = vpop.f32.mrb[0].mxu0
  %v2195 = vadd.f32 %v1483, %v2194
  %v2196 = vpop.f32.mrb[0].mxu0
  %v2197 = vadd.f32 %v1487, %v2196
  %v2198 = vpop.f32.mrb[0].mxu0
  %v2199 = vadd.f32 %v1483, %v2198
  %v2200 = vpop.f32.mrb[0].mxu0
  %v2201 = vadd.f32 %v1487, %v2200
  %2202 = vmatprep.mubr.bf16.mxu0 %v1625
  %2203 = vmatmul.mubr.bf16.gmra.mrb[0].mxu0 %v1624
  %v2204 = vpop.f32.mrb[0].mxu0
  %v2205 = vadd.f32 %v1483, %v2204
  %v2206 = vpop.f32.mrb[0].mxu0
  %v2207 = vadd.f32 %v1487, %v2206
  %v2208 = vpop.f32.mrb[0].mxu0
  %v2209 = vadd.f32 %v1483, %v2208
  %v2210 = vpop.f32.mrb[0].mxu0
  %v2211 = vadd.f32 %v1487, %v2210
  %2212 = vmatprep.mubr.bf16.mxu0 %v1627
  %2213 = vmatmul.mubr.bf16.gmra.mrb[0].mxu0 %v1626
  %v2214 = vpop.f32.mrb[0].mxu0
  %v2215 = vadd.f32 %v1483, %v2214
  %v2216 = vpop.f32.mrb[0].mxu0
  %v2217 = vadd.f32 %v1487, %v2216
  %v2218 = vpop.f32.mrb[0].mxu0
  %v2219 = vadd.f32 %v1483, %v2218
  %v2220 = vpop.f32.mrb[0].mxu0
  %v2221 = vadd.f32 %v1487, %v2220
  %2222 = vmatprep.mubr.bf16.mxu0 %v1629
  %2223 = vmatmul.mubr.bf16.gmra.mrb[0].mxu0 %v1628
  %v2224 = vpop.f32.mrb[0].mxu0
  %v2225 = vadd.f32 %v1483, %v2224
  %v2226 = vpop.f32.mrb[0].mxu0
  %v2227 = vadd.f32 %v1487, %v2226
  %v2228 = vpop.f32.mrb[0].mxu0
  %v2229 = vadd.f32 %v1483, %v2228
  %v2230 = vpop.f32.mrb[0].mxu0
  %v2231 = vadd.f32 %v1487, %v2230
  %2232 = vmatprep.mubr.bf16.mxu0 %v1631
  %2233 = vmatmul.mubr.bf16.gmra.mrb[0].mxu0 %v1630
  %v2234 = vpop.f32.mrb[0].mxu0
  %v2235 = vadd.f32 %v1483, %v2234
  %v2236 = vpop.f32.mrb[0].mxu0
  %v2237 = vadd.f32 %v1487, %v2236
  %v2238 = vpop.f32.mrb[0].mxu0
  %v2239 = vadd.f32 %v1483, %v2238
  %v2240 = vpop.f32.mrb[0].mxu0
  %v2241 = vadd.f32 %v1487, %v2240
  %2242 = vdwg.mxu0
  %2243 = vmatprep.subr.bf16.mxu0 %v1309
  %2244 = vmatpush1.bf16.msra.mxu0 %v1308
  %2245 = vmatprep.subr.bf16.mxu0 %v1317
  %2246 = vmatpush1.bf16.msra.mxu0 %v1316
  %2247 = vmatprep.subr.bf16.mxu0 %v1325
  %2248 = vmatpush1.bf16.msra.mxu0 %v1324
  %2249 = vmatprep.subr.bf16.mxu0 %v1333
  %2250 = vmatpush1.bf16.msra.mxu0 %v1332
  %2251 = vmatprep.subr.bf16.mxu0 %v1341
  %2252 = vmatpush1.bf16.msra.mxu0 %v1340
  %2253 = vmatprep.subr.bf16.mxu0 %v1349
  %2254 = vmatpush1.bf16.msra.mxu0 %v1348
  %2255 = vmatprep.subr.bf16.mxu0 %v1357
  %2256 = vmatpush1.bf16.msra.mxu0 %v1356
  %2257 = vmatprep.subr.bf16.mxu0 %v1365
  %2258 = vmatpush1.bf16.msra.mxu0 %v1364
  %2259 = vmatprep.subr.bf16.mxu0 %v1373
  %2260 = vmatpush1.bf16.msra.mxu0 %v1372
  %2261 = vmatprep.subr.bf16.mxu0 %v1381
  %2262 = vmatpush1.bf16.msra.mxu0 %v1380
  %2263 = vmatprep.subr.bf16.mxu0 %v1389
  %2264 = vmatpush1.bf16.msra.mxu0 %v1388
  %2265 = vmatprep.subr.bf16.mxu0 %v1397
  %2266 = vmatpush1.bf16.msra.mxu0 %v1396
  %2267 = vmatprep.subr.bf16.mxu0 %v1405
  %2268 = vmatpush1.bf16.msra.mxu0 %v1404
  %2269 = vmatprep.subr.bf16.mxu0 %v1413
  %2270 = vmatpush1.bf16.msra.mxu0 %v1412
  %2271 = vmatprep.subr.bf16.mxu0 %v1421
  %2272 = vmatpush1.bf16.msra.mxu0 %v1420
  %2273 = vmatprep.subr.bf16.mxu0 %v1429
  %2274 = vmatpush1.bf16.msra.mxu0 %v1428
  %2275 = vmatprep.mubr.bf16.mxu0 %v1601
  %2276 = vmatmul.mubr.bf16.gmra.mrb[0].mxu0 %v1600
  %v2277 = vpop.f32.mrb[0].mxu0
  %v2278 = vadd.f32 %v1491, %v2277
  %v2279 = vpop.f32.mrb[0].mxu0
  %v2280 = vadd.f32 %v1495, %v2279
  %v2281 = vpop.f32.mrb[0].mxu0
  %v2282 = vadd.f32 %v1491, %v2281
  %v2283 = vpop.f32.mrb[0].mxu0
  %v2284 = vadd.f32 %v1495, %v2283
  %2285 = vmatprep.mubr.bf16.mxu0 %v1603
  %2286 = vmatmul.mubr.bf16.gmra.mrb[0].mxu0 %v1602
  %v2287 = vpop.f32.mrb[0].mxu0
  %v2288 = vadd.f32 %v1491, %v2287
  %v2289 = vpop.f32.mrb[0].mxu0
  %v2290 = vadd.f32 %v1495, %v2289
  %v2291 = vpop.f32.mrb[0].mxu0
  %v2292 = vadd.f32 %v1491, %v2291
  %v2293 = vpop.f32.mrb[0].mxu0
  %v2294 = vadd.f32 %v1495, %v2293
  %2295 = vmatprep.mubr.bf16.mxu0 %v1605
  %2296 = vmatmul.mubr.bf16.gmra.mrb[0].mxu0 %v1604
  %v2297 = vpop.f32.mrb[0].mxu0
  %v2298 = vadd.f32 %v1491, %v2297
  %v2299 = vpop.f32.mrb[0].mxu0
  %v2300 = vadd.f32 %v1495, %v2299
  %v2301 = vpop.f32.mrb[0].mxu0
  %v2302 = vadd.f32 %v1491, %v2301
  %v2303 = vpop.f32.mrb[0].mxu0
  %v2304 = vadd.f32 %v1495, %v2303
  %2305 = vmatprep.mubr.bf16.mxu0 %v1607
  %2306 = vmatmul.mubr.bf16.gmra.mrb[0].mxu0 %v1606
  %v2307 = vpop.f32.mrb[0].mxu0
  %v2308 = vadd.f32 %v1491, %v2307
  %v2309 = vpop.f32.mrb[0].mxu0
  %v2310 = vadd.f32 %v1495, %v2309
  %v2311 = vpop.f32.mrb[0].mxu0
  %v2312 = vadd.f32 %v1491, %v2311
  %v2313 = vpop.f32.mrb[0].mxu0
  %v2314 = vadd.f32 %v1495, %v2313
  %2315 = vmatprep.mubr.bf16.mxu0 %v1609
  %2316 = vmatmul.mubr.bf16.gmra.mrb[0].mxu0 %v1608
  %v2317 = vpop.f32.mrb[0].mxu0
  %v2318 = vadd.f32 %v1491, %v2317
  %v2319 = vpop.f32.mrb[0].mxu0
  %v2320 = vadd.f32 %v1495, %v2319
  %v2321 = vpop.f32.mrb[0].mxu0
  %v2322 = vadd.f32 %v1491, %v2321
  %v2323 = vpop.f32.mrb[0].mxu0
  %v2324 = vadd.f32 %v1495, %v2323
  %2325 = vmatprep.mubr.bf16.mxu0 %v1611
  %2326 = vmatmul.mubr.bf16.gmra.mrb[0].mxu0 %v1610
  %v2327 = vpop.f32.mrb[0].mxu0
  %v2328 = vadd.f32 %v1491, %v2327
  %v2329 = vpop.f32.mrb[0].mxu0
  %v2330 = vadd.f32 %v1495, %v2329
  %v2331 = vpop.f32.mrb[0].mxu0
  %v2332 = vadd.f32 %v1491, %v2331
  %v2333 = vpop.f32.mrb[0].mxu0
  %v2334 = vadd.f32 %v1495, %v2333
  %2335 = vmatprep.mubr.bf16.mxu0 %v1613
  %2336 = vmatmul.mubr.bf16.gmra.mrb[0].mxu0 %v1612
  %v2337 = vpop.f32.mrb[0].mxu0
  %v2338 = vadd.f32 %v1491, %v2337
  %v2339 = vpop.f32.mrb[0].mxu0
  %v2340 = vadd.f32 %v1495, %v2339
  %v2341 = vpop.f32.mrb[0].mxu0
  %v2342 = vadd.f32 %v1491, %v2341
  %v2343 = vpop.f32.mrb[0].mxu0
  %v2344 = vadd.f32 %v1495, %v2343
  %2345 = vmatprep.mubr.bf16.mxu0 %v1615
  %2346 = vmatmul.mubr.bf16.gmra.mrb[0].mxu0 %v1614
  %v2347 = vpop.f32.mrb[0].mxu0
  %v2348 = vadd.f32 %v1491, %v2347
  %v2349 = vpop.f32.mrb[0].mxu0
  %v2350 = vadd.f32 %v1495, %v2349
  %v2351 = vpop.f32.mrb[0].mxu0
  %v2352 = vadd.f32 %v1491, %v2351
  %v2353 = vpop.f32.mrb[0].mxu0
  %v2354 = vadd.f32 %v1495, %v2353
  %2355 = vmatprep.mubr.bf16.mxu0 %v1617
  %2356 = vmatmul.mubr.bf16.gmra.mrb[0].mxu0 %v1616
  %v2357 = vpop.f32.mrb[0].mxu0
  %v2358 = vadd.f32 %v1491, %v2357
  %v2359 = vpop.f32.mrb[0].mxu0
  %v2360 = vadd.f32 %v1495, %v2359
  %v2361 = vpop.f32.mrb[0].mxu0
  %v2362 = vadd.f32 %v1491, %v2361
  %v2363 = vpop.f32.mrb[0].mxu0
  %v2364 = vadd.f32 %v1495, %v2363
  %2365 = vmatprep.mubr.bf16.mxu0 %v1619
  %2366 = vmatmul.mubr.bf16.gmra.mrb[0].mxu0 %v1618
  %v2367 = vpop.f32.mrb[0].mxu0
  %v2368 = vadd.f32 %v1491, %v2367
  %v2369 = vpop.f32.mrb[0].mxu0
  %v2370 = vadd.f32 %v1495, %v2369
  %v2371 = vpop.f32.mrb[0].mxu0
  %v2372 = vadd.f32 %v1491, %v2371
  %v2373 = vpop.f32.mrb[0].mxu0
  %v2374 = vadd.f32 %v1495, %v2373
  %2375 = vmatprep.mubr.bf16.mxu0 %v1621
  %2376 = vmatmul.mubr.bf16.gmra.mrb[0].mxu0 %v1620
  %v2377 = vpop.f32.mrb[0].mxu0
  %v2378 = vadd.f32 %v1491, %v2377
  %v2379 = vpop.f32.mrb[0].mxu0
  %v2380 = vadd.f32 %v1495, %v2379
  %v2381 = vpop.f32.mrb[0].mxu0
  %v2382 = vadd.f32 %v1491, %v2381
  %v2383 = vpop.f32.mrb[0].mxu0
  %v2384 = vadd.f32 %v1495, %v2383
  %2385 = vmatprep.mubr.bf16.mxu0 %v1623
  %2386 = vmatmul.mubr.bf16.gmra.mrb[0].mxu0 %v1622
  %v2387 = vpop.f32.mrb[0].mxu0
  %v2388 = vadd.f32 %v1491, %v2387
  %v2389 = vpop.f32.mrb[0].mxu0
  %v2390 = vadd.f32 %v1495, %v2389
  %v2391 = vpop.f32.mrb[0].mxu0
  %v2392 = vadd.f32 %v1491, %v2391
  %v2393 = vpop.f32.mrb[0].mxu0
  %v2394 = vadd.f32 %v1495, %v2393
  %2395 = vmatprep.mubr.bf16.mxu0 %v1625
  %2396 = vmatmul.mubr.bf16.gmra.mrb[0].mxu0 %v1624
  %v2397 = vpop.f32.mrb[0].mxu0
  %v2398 = vadd.f32 %v1491, %v2397
  %v2399 = vpop.f32.mrb[0].mxu0
  %v2400 = vadd.f32 %v1495, %v2399
  %v2401 = vpop.f32.mrb[0].mxu0
  %v2402 = vadd.f32 %v1491, %v2401
  %v2403 = vpop.f32.mrb[0].mxu0
  %v2404 = vadd.f32 %v1495, %v2403
  %2405 = vmatprep.mubr.bf16.mxu0 %v1627
  %2406 = vmatmul.mubr.bf16.gmra.mrb[0].mxu0 %v1626
  %v2407 = vpop.f32.mrb[0].mxu0
  %v2408 = vadd.f32 %v1491, %v2407
  %v2409 = vpop.f32.mrb[0].mxu0
  %v2410 = vadd.f32 %v1495, %v2409
  %v2411 = vpop.f32.mrb[0].mxu0
  %v2412 = vadd.f32 %v1491, %v2411
  %v2413 = vpop.f32.mrb[0].mxu0
  %v2414 = vadd.f32 %v1495, %v2413
  %2415 = vmatprep.mubr.bf16.mxu0 %v1629
  %2416 = vmatmul.mubr.bf16.gmra.mrb[0].mxu0 %v1628
  %v2417 = vpop.f32.mrb[0].mxu0
  %v2418 = vadd.f32 %v1491, %v2417
  %v2419 = vpop.f32.mrb[0].mxu0
  %v2420 = vadd.f32 %v1495, %v2419
  %v2421 = vpop.f32.mrb[0].mxu0
  %v2422 = vadd.f32 %v1491, %v2421
  %v2423 = vpop.f32.mrb[0].mxu0
  %v2424 = vadd.f32 %v1495, %v2423
  %2425 = vmatprep.mubr.bf16.mxu0 %v1631
  %2426 = vmatmul.mubr.bf16.gmra.mrb[0].mxu0 %v1630
  %v2427 = vpop.f32.mrb[0].mxu0
  %v2428 = vadd.f32 %v1491, %v2427
  %v2429 = vpop.f32.mrb[0].mxu0
  %v2430 = vadd.f32 %v1495, %v2429
  %v2431 = vpop.f32.mrb[0].mxu0
  %v2432 = vadd.f32 %v1491, %v2431
  %v2433 = vpop.f32.mrb[0].mxu0
  %v2434 = vadd.f32 %v1495, %v2433
  %2435 = vdwg.mxu0
  %v2436 = vmul.f32 %v1699, 0.999995
  %v2437 = vmul.f32 %v1701, 0.999995
  %v2438 = vmul.f32 %v1892, 0.999995
  %v2439 = vmul.f32 %v1894, 0.999995
  %v2440 = vmul.f32 %v2085, 0.999995
  %v2441 = vmul.f32 %v2087, 0.999995
  %v2442 = vmul.f32 %v2278, 0.999995
  %v2443 = vmul.f32 %v2280, 0.999995
  %v2444 = vmul.f32 %v1703, 0.999995
  %v2445 = vmul.f32 %v1705, 0.999995
  %v2446 = vmul.f32 %v1896, 0.999995
  %v2447 = vmul.f32 %v1898, 0.999995
  %v2448 = vmul.f32 %v2089, 0.999995
  %v2449 = vmul.f32 %v2091, 0.999995
  %v2450 = vmul.f32 %v2282, 0.999995
  %v2451 = vmul.f32 %v2284, 0.999995
  %v2452 = vmul.f32 %v1709, 0.999995
  %v2453 = vmul.f32 %v1711, 0.999995
  %v2454 = vmul.f32 %v1902, 0.999995
  %v2455 = vmul.f32 %v1904, 0.999995
  %v2456 = vmul.f32 %v2095, 0.999995
  %v2457 = vmul.f32 %v2097, 0.999995
  %v2458 = vmul.f32 %v2288, 0.999995
  %v2459 = vmul.f32 %v2290, 0.999995
  %v2460 = vmul.f32 %v1713, 0.999995
  %v2461 = vmul.f32 %v1715, 0.999995
  %v2462 = vmul.f32 %v1906, 0.999995
  %v2463 = vmul.f32 %v1908, 0.999995
  %v2464 = vmul.f32 %v2099, 0.999995
  %v2465 = vmul.f32 %v2101, 0.999995
  %v2466 = vmul.f32 %v2292, 0.999995
  %v2467 = vmul.f32 %v2294, 0.999995
  %v2468 = vmul.f32 %v1719, 0.999995
  %v2469 = vmul.f32 %v1721, 0.999995
  %v2470 = vmul.f32 %v1912, 0.999995
  %v2471 = vmul.f32 %v1914, 0.999995
  %v2472 = vmul.f32 %v2105, 0.999995
  %v2473 = vmul.f32 %v2107, 0.999995
  %v2474 = vmul.f32 %v2298, 0.999995
  %v2475 = vmul.f32 %v2300, 0.999995
  %v2476 = vmul.f32 %v1723, 0.999995
  %v2477 = vmul.f32 %v1725, 0.999995
  %v2478 = vmul.f32 %v1916, 0.999995
  %v2479 = vmul.f32 %v1918, 0.999995
  %v2480 = vmul.f32 %v2109, 0.999995
  %v2481 = vmul.f32 %v2111, 0.999995
  %v2482 = vmul.f32 %v2302, 0.999995
  %v2483 = vmul.f32 %v2304, 0.999995
  %v2484 = vmul.f32 %v1729, 0.999995
  %v2485 = vmul.f32 %v1731, 0.999995
  %v2486 = vmul.f32 %v1922, 0.999995
  %v2487 = vmul.f32 %v1924, 0.999995
  %v2488 = vmul.f32 %v2115, 0.999995
  %v2489 = vmul.f32 %v2117, 0.999995
  %v2490 = vmul.f32 %v2308, 0.999995
  %v2491 = vmul.f32 %v2310, 0.999995
  %v2492 = vmul.f32 %v1733, 0.999995
  %v2493 = vmul.f32 %v1735, 0.999995
  %v2494 = vmul.f32 %v1926, 0.999995
  %v2495 = vmul.f32 %v1928, 0.999995
  %v2496 = vmul.f32 %v2119, 0.999995
  %v2497 = vmul.f32 %v2121, 0.999995
  %v2498 = vmul.f32 %v2312, 0.999995
  %v2499 = vmul.f32 %v2314, 0.999995
  %v2500 = vmul.f32 %v1739, 0.999995
  %v2501 = vmul.f32 %v1741, 0.999995
  %v2502 = vmul.f32 %v1932, 0.999995
  %v2503 = vmul.f32 %v1934, 0.999995
  %v2504 = vmul.f32 %v2125, 0.999995
  %v2505 = vmul.f32 %v2127, 0.999995
  %v2506 = vmul.f32 %v2318, 0.999995
  %v2507 = vmul.f32 %v2320, 0.999995
  %v2508 = vmul.f32 %v1743, 0.999995
  %v2509 = vmul.f32 %v1745, 0.999995
  %v2510 = vmul.f32 %v1936, 0.999995
  %v2511 = vmul.f32 %v1938, 0.999995
  %v2512 = vmul.f32 %v2129, 0.999995
  %v2513 = vmul.f32 %v2131, 0.999995
  %v2514 = vmul.f32 %v2322, 0.999995
  %v2515 = vmul.f32 %v2324, 0.999995
  %v2516 = vmul.f32 %v1749, 0.999995
  %v2517 = vmul.f32 %v1751, 0.999995
  %v2518 = vmul.f32 %v1942, 0.999995
  %v2519 = vmul.f32 %v1944, 0.999995
  %v2520 = vmul.f32 %v2135, 0.999995
  %v2521 = vmul.f32 %v2137, 0.999995
  %v2522 = vmul.f32 %v2328, 0.999995
  %v2523 = vmul.f32 %v2330, 0.999995
  %v2524 = vmul.f32 %v1753, 0.999995
  %v2525 = vmul.f32 %v1755, 0.999995
  %v2526 = vmul.f32 %v1946, 0.999995
  %v2527 = vmul.f32 %v1948, 0.999995
  %v2528 = vmul.f32 %v2139, 0.999995
  %v2529 = vmul.f32 %v2141, 0.999995
  %v2530 = vmul.f32 %v2332, 0.999995
  %v2531 = vmul.f32 %v2334, 0.999995
  %v2532 = vmul.f32 %v1759, 0.999995
  %v2533 = vmul.f32 %v1761, 0.999995
  %v2534 = vmul.f32 %v1952, 0.999995
  %v2535 = vmul.f32 %v1954, 0.999995
  %v2536 = vmul.f32 %v2145, 0.999995
  %v2537 = vmul.f32 %v2147, 0.999995
  %v2538 = vmul.f32 %v2338, 0.999995
  %v2539 = vmul.f32 %v2340, 0.999995
  %v2540 = vmul.f32 %v1763, 0.999995
  %v2541 = vmul.f32 %v1765, 0.999995
  %v2542 = vmul.f32 %v1956, 0.999995
  %v2543 = vmul.f32 %v1958, 0.999995
  %v2544 = vmul.f32 %v2149, 0.999995
  %v2545 = vmul.f32 %v2151, 0.999995
  %v2546 = vmul.f32 %v2342, 0.999995
  %v2547 = vmul.f32 %v2344, 0.999995
  %v2548 = vmul.f32 %v1769, 0.999995
  %v2549 = vmul.f32 %v1771, 0.999995
  %v2550 = vmul.f32 %v1962, 0.999995
  %v2551 = vmul.f32 %v1964, 0.999995
  %v2552 = vmul.f32 %v2155, 0.999995
  %v2553 = vmul.f32 %v2157, 0.999995
  %v2554 = vmul.f32 %v2348, 0.999995
  %v2555 = vmul.f32 %v2350, 0.999995
  %v2556 = vmul.f32 %v1773, 0.999995
  %v2557 = vmul.f32 %v1775, 0.999995
  %v2558 = vmul.f32 %v1966, 0.999995
  %v2559 = vmul.f32 %v1968, 0.999995
  %v2560 = vmul.f32 %v2159, 0.999995
  %v2561 = vmul.f32 %v2161, 0.999995
  %v2562 = vmul.f32 %v2352, 0.999995
  %v2563 = vmul.f32 %v2354, 0.999995
  %v2564 = vmul.f32 %v1779, 0.999995
  %v2565 = vmul.f32 %v1781, 0.999995
  %v2566 = vmul.f32 %v1972, 0.999995
  %v2567 = vmul.f32 %v1974, 0.999995
  %v2568 = vmul.f32 %v2165, 0.999995
  %v2569 = vmul.f32 %v2167, 0.999995
  %v2570 = vmul.f32 %v2358, 0.999995
  %v2571 = vmul.f32 %v2360, 0.999995
  %v2572 = vmul.f32 %v1783, 0.999995
  %v2573 = vmul.f32 %v1785, 0.999995
  %v2574 = vmul.f32 %v1976, 0.999995
  %v2575 = vmul.f32 %v1978, 0.999995
  %v2576 = vmul.f32 %v2169, 0.999995
  %v2577 = vmul.f32 %v2171, 0.999995
  %v2578 = vmul.f32 %v2362, 0.999995
  %v2579 = vmul.f32 %v2364, 0.999995
  %v2580 = vmul.f32 %v1789, 0.999995
  %v2581 = vmul.f32 %v1791, 0.999995
  %v2582 = vmul.f32 %v1982, 0.999995
  %v2583 = vmul.f32 %v1984, 0.999995
  %v2584 = vmul.f32 %v2175, 0.999995
  %v2585 = vmul.f32 %v2177, 0.999995
  %v2586 = vmul.f32 %v2368, 0.999995
  %v2587 = vmul.f32 %v2370, 0.999995
  %v2588 = vmul.f32 %v1793, 0.999995
  %v2589 = vmul.f32 %v1795, 0.999995
  %v2590 = vmul.f32 %v1986, 0.999995
  %v2591 = vmul.f32 %v1988, 0.999995
  %v2592 = vmul.f32 %v2179, 0.999995
  %v2593 = vmul.f32 %v2181, 0.999995
  %v2594 = vmul.f32 %v2372, 0.999995
  %v2595 = vmul.f32 %v2374, 0.999995
  %v2596 = vmul.f32 %v1799, 0.999995
  %v2597 = vmul.f32 %v1801, 0.999995
  %v2598 = vmul.f32 %v1992, 0.999995
  %v2599 = vmul.f32 %v1994, 0.999995
  %v2600 = vmul.f32 %v2185, 0.999995
  %v2601 = vmul.f32 %v2187, 0.999995
  %v2602 = vmul.f32 %v2378, 0.999995
  %v2603 = vmul.f32 %v2380, 0.999995
  %v2604 = vmul.f32 %v1803, 0.999995
  %v2605 = vmul.f32 %v1805, 0.999995
  %v2606 = vmul.f32 %v1996, 0.999995
  %v2607 = vmul.f32 %v1998, 0.999995
  %v2608 = vmul.f32 %v2189, 0.999995
  %v2609 = vmul.f32 %v2191, 0.999995
  %v2610 = vmul.f32 %v2382, 0.999995
  %v2611 = vmul.f32 %v2384, 0.999995
  %v2612 = vmul.f32 %v1809, 0.999995
  %v2613 = vmul.f32 %v1811, 0.999995
  %v2614 = vmul.f32 %v2002, 0.999995
  %v2615 = vmul.f32 %v2004, 0.999995
  %v2616 = vmul.f32 %v2195, 0.999995
  %v2617 = vmul.f32 %v2197, 0.999995
  %v2618 = vmul.f32 %v2388, 0.999995
  %v2619 = vmul.f32 %v2390, 0.999995
  %v2620 = vmul.f32 %v1813, 0.999995
  %v2621 = vmul.f32 %v1815, 0.999995
  %v2622 = vmul.f32 %v2006, 0.999995
  %v2623 = vmul.f32 %v2008, 0.999995
  %v2624 = vmul.f32 %v2199, 0.999995
  %v2625 = vmul.f32 %v2201, 0.999995
  %v2626 = vmul.f32 %v2392, 0.999995
  %v2627 = vmul.f32 %v2394, 0.999995
  %v2628 = vmul.f32 %v1819, 0.999995
  %v2629 = vmul.f32 %v1821, 0.999995
  %v2630 = vmul.f32 %v2012, 0.999995
  %v2631 = vmul.f32 %v2014, 0.999995
  %v2632 = vmul.f32 %v2205, 0.999995
  %v2633 = vmul.f32 %v2207, 0.999995
  %v2634 = vmul.f32 %v2398, 0.999995
  %v2635 = vmul.f32 %v2400, 0.999995
  %v2636 = vmul.f32 %v1823, 0.999995
  %v2637 = vmul.f32 %v1825, 0.999995
  %v2638 = vmul.f32 %v2016, 0.999995
  %v2639 = vmul.f32 %v2018, 0.999995
  %v2640 = vmul.f32 %v2209, 0.999995
  %v2641 = vmul.f32 %v2211, 0.999995
  %v2642 = vmul.f32 %v2402, 0.999995
  %v2643 = vmul.f32 %v2404, 0.999995
  %v2644 = vmul.f32 %v1829, 0.999995
  %v2645 = vmul.f32 %v1831, 0.999995
  %v2646 = vmul.f32 %v2022, 0.999995
  %v2647 = vmul.f32 %v2024, 0.999995
  %v2648 = vmul.f32 %v2215, 0.999995
  %v2649 = vmul.f32 %v2217, 0.999995
  %v2650 = vmul.f32 %v2408, 0.999995
  %v2651 = vmul.f32 %v2410, 0.999995
  %v2652 = vmul.f32 %v1833, 0.999995
  %v2653 = vmul.f32 %v1835, 0.999995
  %v2654 = vmul.f32 %v2026, 0.999995
  %v2655 = vmul.f32 %v2028, 0.999995
  %v2656 = vmul.f32 %v2219, 0.999995
  %v2657 = vmul.f32 %v2221, 0.999995
  %v2658 = vmul.f32 %v2412, 0.999995
  %v2659 = vmul.f32 %v2414, 0.999995
  %v2660 = vmul.f32 %v1839, 0.999995
  %v2661 = vmul.f32 %v1841, 0.999995
  %v2662 = vmul.f32 %v2032, 0.999995
  %v2663 = vmul.f32 %v2034, 0.999995
  %v2664 = vmul.f32 %v2225, 0.999995
  %v2665 = vmul.f32 %v2227, 0.999995
  %v2666 = vmul.f32 %v2418, 0.999995
  %v2667 = vmul.f32 %v2420, 0.999995
  %v2668 = vmul.f32 %v1843, 0.999995
  %v2669 = vmul.f32 %v1845, 0.999995
  %v2670 = vmul.f32 %v2036, 0.999995
  %v2671 = vmul.f32 %v2038, 0.999995
  %v2672 = vmul.f32 %v2229, 0.999995
  %v2673 = vmul.f32 %v2231, 0.999995
  %v2674 = vmul.f32 %v2422, 0.999995
  %v2675 = vmul.f32 %v2424, 0.999995
  %v2676 = vmul.f32 %v1849, 0.999995
  %v2677 = vmul.f32 %v1851, 0.999995
  %v2678 = vmul.f32 %v2042, 0.999995
  %v2679 = vmul.f32 %v2044, 0.999995
  %v2680 = vmul.f32 %v2235, 0.999995
  %v2681 = vmul.f32 %v2237, 0.999995
  %v2682 = vmul.f32 %v2428, 0.999995
  %v2683 = vmul.f32 %v2430, 0.999995
  %v2684 = vmul.f32 %v1853, 0.999995
  %v2685 = vmul.f32 %v1855, 0.999995
  %v2686 = vmul.f32 %v2046, 0.999995
  %v2687 = vmul.f32 %v2048, 0.999995
  %v2688 = vmul.f32 %v2239, 0.999995
  %v2689 = vmul.f32 %v2241, 0.999995
  %v2690 = vmul.f32 %v2432, 0.999995
  %v2691 = vmul.f32 %v2434, 0.999995
  %v2692 = vmax.f32 %v2436, 0.0
  %v2693 = vmax.f32 %v2437, 0.0
  %v2694 = vmax.f32 %v2438, 0.0
  %v2695 = vmax.f32 %v2439, 0.0
  %v2696 = vmax.f32 %v2440, 0.0
  %v2697 = vmax.f32 %v2441, 0.0
  %v2698 = vmax.f32 %v2442, 0.0
  %v2699 = vmax.f32 %v2443, 0.0
  %v2700 = vmax.f32 %v2444, 0.0
  %v2701 = vmax.f32 %v2445, 0.0
  %v2702 = vmax.f32 %v2446, 0.0
  %v2703 = vmax.f32 %v2447, 0.0
  %v2704 = vmax.f32 %v2448, 0.0
  %v2705 = vmax.f32 %v2449, 0.0
  %v2706 = vmax.f32 %v2450, 0.0
  %v2707 = vmax.f32 %v2451, 0.0
  %v2708 = vmax.f32 %v2452, 0.0
  %v2709 = vmax.f32 %v2453, 0.0
  %v2710 = vmax.f32 %v2454, 0.0
  %v2711 = vmax.f32 %v2455, 0.0
  %v2712 = vmax.f32 %v2456, 0.0
  %v2713 = vmax.f32 %v2457, 0.0
  %v2714 = vmax.f32 %v2458, 0.0
  %v2715 = vmax.f32 %v2459, 0.0
  %v2716 = vmax.f32 %v2460, 0.0
  %v2717 = vmax.f32 %v2461, 0.0
  %v2718 = vmax.f32 %v2462, 0.0
  %v2719 = vmax.f32 %v2463, 0.0
  %v2720 = vmax.f32 %v2464, 0.0
  %v2721 = vmax.f32 %v2465, 0.0
  %v2722 = vmax.f32 %v2466, 0.0
  %v2723 = vmax.f32 %v2467, 0.0
  %v2724 = vmax.f32 %v2468, 0.0
  %v2725 = vmax.f32 %v2469, 0.0
  %v2726 = vmax.f32 %v2470, 0.0
  %v2727 = vmax.f32 %v2471, 0.0
  %v2728 = vmax.f32 %v2472, 0.0
  %v2729 = vmax.f32 %v2473, 0.0
  %v2730 = vmax.f32 %v2474, 0.0
  %v2731 = vmax.f32 %v2475, 0.0
  %v2732 = vmax.f32 %v2476, 0.0
  %v2733 = vmax.f32 %v2477, 0.0
  %v2734 = vmax.f32 %v2478, 0.0
  %v2735 = vmax.f32 %v2479, 0.0
  %v2736 = vmax.f32 %v2480, 0.0
  %v2737 = vmax.f32 %v2481, 0.0
  %v2738 = vmax.f32 %v2482, 0.0
  %v2739 = vmax.f32 %v2483, 0.0
  %v2740 = vmax.f32 %v2484, 0.0
  %v2741 = vmax.f32 %v2485, 0.0
  %v2742 = vmax.f32 %v2486, 0.0
  %v2743 = vmax.f32 %v2487, 0.0
  %v2744 = vmax.f32 %v2488, 0.0
  %v2745 = vmax.f32 %v2489, 0.0
  %v2746 = vmax.f32 %v2490, 0.0
  %v2747 = vmax.f32 %v2491, 0.0
  %v2748 = vmax.f32 %v2492, 0.0
  %v2749 = vmax.f32 %v2493, 0.0
  %v2750 = vmax.f32 %v2494, 0.0
  %v2751 = vmax.f32 %v2495, 0.0
  %v2752 = vmax.f32 %v2496, 0.0
  %v2753 = vmax.f32 %v2497, 0.0
  %v2754 = vmax.f32 %v2498, 0.0
  %v2755 = vmax.f32 %v2499, 0.0
  %v2756 = vmax.f32 %v2500, 0.0
  %v2757 = vmax.f32 %v2501, 0.0
  %v2758 = vmax.f32 %v2502, 0.0
  %v2759 = vmax.f32 %v2503, 0.0
  %v2760 = vmax.f32 %v2504, 0.0
  %v2761 = vmax.f32 %v2505, 0.0
  %v2762 = vmax.f32 %v2506, 0.0
  %v2763 = vmax.f32 %v2507, 0.0
  %v2764 = vmax.f32 %v2508, 0.0
  %v2765 = vmax.f32 %v2509, 0.0
  %v2766 = vmax.f32 %v2510, 0.0
  %v2767 = vmax.f32 %v2511, 0.0
  %v2768 = vmax.f32 %v2512, 0.0
  %v2769 = vmax.f32 %v2513, 0.0
  %v2770 = vmax.f32 %v2514, 0.0
  %v2771 = vmax.f32 %v2515, 0.0
  %v2772 = vmax.f32 %v2516, 0.0
  %v2773 = vmax.f32 %v2517, 0.0
  %v2774 = vmax.f32 %v2518, 0.0
  %v2775 = vmax.f32 %v2519, 0.0
  %v2776 = vmax.f32 %v2520, 0.0
  %v2777 = vmax.f32 %v2521, 0.0
  %v2778 = vmax.f32 %v2522, 0.0
  %v2779 = vmax.f32 %v2523, 0.0
  %v2780 = vmax.f32 %v2524, 0.0
  %v2781 = vmax.f32 %v2525, 0.0
  %v2782 = vmax.f32 %v2526, 0.0
  %v2783 = vmax.f32 %v2527, 0.0
  %v2784 = vmax.f32 %v2528, 0.0
  %v2785 = vmax.f32 %v2529, 0.0
  %v2786 = vmax.f32 %v2530, 0.0
  %v2787 = vmax.f32 %v2531, 0.0
  %v2788 = vmax.f32 %v2532, 0.0
  %v2789 = vmax.f32 %v2533, 0.0
  %v2790 = vmax.f32 %v2534, 0.0
  %v2791 = vmax.f32 %v2535, 0.0
  %v2792 = vmax.f32 %v2536, 0.0
  %v2793 = vmax.f32 %v2537, 0.0
  %v2794 = vmax.f32 %v2538, 0.0
  %v2795 = vmax.f32 %v2539, 0.0
  %v2796 = vmax.f32 %v2540, 0.0
  %v2797 = vmax.f32 %v2541, 0.0
  %v2798 = vmax.f32 %v2542, 0.0
  %v2799 = vmax.f32 %v2543, 0.0
  %v2800 = vmax.f32 %v2544, 0.0
  %v2801 = vmax.f32 %v2545, 0.0
  %v2802 = vmax.f32 %v2546, 0.0
  %v2803 = vmax.f32 %v2547, 0.0
  %v2804 = vmax.f32 %v2548, 0.0
  %v2805 = vmax.f32 %v2549, 0.0
  %v2806 = vmax.f32 %v2550, 0.0
  %v2807 = vmax.f32 %v2551, 0.0
  %v2808 = vmax.f32 %v2552, 0.0
  %v2809 = vmax.f32 %v2553, 0.0
  %v2810 = vmax.f32 %v2554, 0.0
  %v2811 = vmax.f32 %v2555, 0.0
  %v2812 = vmax.f32 %v2556, 0.0
  %v2813 = vmax.f32 %v2557, 0.0
  %v2814 = vmax.f32 %v2558, 0.0
  %v2815 = vmax.f32 %v2559, 0.0
  %v2816 = vmax.f32 %v2560, 0.0
  %v2817 = vmax.f32 %v2561, 0.0
  %v2818 = vmax.f32 %v2562, 0.0
  %v2819 = vmax.f32 %v2563, 0.0
  %v2820 = vmax.f32 %v2564, 0.0
  %v2821 = vmax.f32 %v2565, 0.0
  %v2822 = vmax.f32 %v2566, 0.0
  %v2823 = vmax.f32 %v2567, 0.0
  %v2824 = vmax.f32 %v2568, 0.0
  %v2825 = vmax.f32 %v2569, 0.0
  %v2826 = vmax.f32 %v2570, 0.0
  %v2827 = vmax.f32 %v2571, 0.0
  %v2828 = vmax.f32 %v2572, 0.0
  %v2829 = vmax.f32 %v2573, 0.0
  %v2830 = vmax.f32 %v2574, 0.0
  %v2831 = vmax.f32 %v2575, 0.0
  %v2832 = vmax.f32 %v2576, 0.0
  %v2833 = vmax.f32 %v2577, 0.0
  %v2834 = vmax.f32 %v2578, 0.0
  %v2835 = vmax.f32 %v2579, 0.0
  %v2836 = vmax.f32 %v2580, 0.0
  %v2837 = vmax.f32 %v2581, 0.0
  %v2838 = vmax.f32 %v2582, 0.0
  %v2839 = vmax.f32 %v2583, 0.0
  %v2840 = vmax.f32 %v2584, 0.0
  %v2841 = vmax.f32 %v2585, 0.0
  %v2842 = vmax.f32 %v2586, 0.0
  %v2843 = vmax.f32 %v2587, 0.0
  %v2844 = vmax.f32 %v2588, 0.0
  %v2845 = vmax.f32 %v2589, 0.0
  %v2846 = vmax.f32 %v2590, 0.0
  %v2847 = vmax.f32 %v2591, 0.0
  %v2848 = vmax.f32 %v2592, 0.0
  %v2849 = vmax.f32 %v2593, 0.0
  %v2850 = vmax.f32 %v2594, 0.0
  %v2851 = vmax.f32 %v2595, 0.0
  %v2852 = vmax.f32 %v2596, 0.0
  %v2853 = vmax.f32 %v2597, 0.0
  %v2854 = vmax.f32 %v2598, 0.0
  %v2855 = vmax.f32 %v2599, 0.0
  %v2856 = vmax.f32 %v2600, 0.0
  %v2857 = vmax.f32 %v2601, 0.0
  %v2858 = vmax.f32 %v2602, 0.0
  %v2859 = vmax.f32 %v2603, 0.0
  %v2860 = vmax.f32 %v2604, 0.0
  %v2861 = vmax.f32 %v2605, 0.0
  %v2862 = vmax.f32 %v2606, 0.0
  %v2863 = vmax.f32 %v2607, 0.0
  %v2864 = vmax.f32 %v2608, 0.0
  %v2865 = vmax.f32 %v2609, 0.0
  %v2866 = vmax.f32 %v2610, 0.0
  %v2867 = vmax.f32 %v2611, 0.0
  %v2868 = vmax.f32 %v2612, 0.0
  %v2869 = vmax.f32 %v2613, 0.0
  %v2870 = vmax.f32 %v2614, 0.0
  %v2871 = vmax.f32 %v2615, 0.0
  %v2872 = vmax.f32 %v2616, 0.0
  %v2873 = vmax.f32 %v2617, 0.0
  %v2874 = vmax.f32 %v2618, 0.0
  %v2875 = vmax.f32 %v2619, 0.0
  %v2876 = vmax.f32 %v2620, 0.0
  %v2877 = vmax.f32 %v2621, 0.0
  %v2878 = vmax.f32 %v2622, 0.0
  %v2879 = vmax.f32 %v2623, 0.0
  %v2880 = vmax.f32 %v2624, 0.0
  %v2881 = vmax.f32 %v2625, 0.0
  %v2882 = vmax.f32 %v2626, 0.0
  %v2883 = vmax.f32 %v2627, 0.0
  %v2884 = vmax.f32 %v2628, 0.0
  %v2885 = vmax.f32 %v2629, 0.0
  %v2886 = vmax.f32 %v2630, 0.0
  %v2887 = vmax.f32 %v2631, 0.0
  %v2888 = vmax.f32 %v2632, 0.0
  %v2889 = vmax.f32 %v2633, 0.0
  %v2890 = vmax.f32 %v2634, 0.0
  %v2891 = vmax.f32 %v2635, 0.0
  %v2892 = vmax.f32 %v2636, 0.0
  %v2893 = vmax.f32 %v2637, 0.0
  %v2894 = vmax.f32 %v2638, 0.0
  %v2895 = vmax.f32 %v2639, 0.0
  %v2896 = vmax.f32 %v2640, 0.0
  %v2897 = vmax.f32 %v2641, 0.0
  %v2898 = vmax.f32 %v2642, 0.0
  %v2899 = vmax.f32 %v2643, 0.0
  %v2900 = vmax.f32 %v2644, 0.0
  %v2901 = vmax.f32 %v2645, 0.0
  %v2902 = vmax.f32 %v2646, 0.0
  %v2903 = vmax.f32 %v2647, 0.0
  %v2904 = vmax.f32 %v2648, 0.0
  %v2905 = vmax.f32 %v2649, 0.0
  %v2906 = vmax.f32 %v2650, 0.0
  %v2907 = vmax.f32 %v2651, 0.0
  %v2908 = vmax.f32 %v2652, 0.0
  %v2909 = vmax.f32 %v2653, 0.0
  %v2910 = vmax.f32 %v2654, 0.0
  %v2911 = vmax.f32 %v2655, 0.0
  %v2912 = vmax.f32 %v2656, 0.0
  %v2913 = vmax.f32 %v2657, 0.0
  %v2914 = vmax.f32 %v2658, 0.0
  %v2915 = vmax.f32 %v2659, 0.0
  %v2916 = vmax.f32 %v2660, 0.0
  %v2917 = vmax.f32 %v2661, 0.0
  %v2918 = vmax.f32 %v2662, 0.0
  %v2919 = vmax.f32 %v2663, 0.0
  %v2920 = vmax.f32 %v2664, 0.0
  %v2921 = vmax.f32 %v2665, 0.0
  %v2922 = vmax.f32 %v2666, 0.0
  %v2923 = vmax.f32 %v2667, 0.0
  %v2924 = vmax.f32 %v2668, 0.0
  %v2925 = vmax.f32 %v2669, 0.0
  %v2926 = vmax.f32 %v2670, 0.0
  %v2927 = vmax.f32 %v2671, 0.0
  %v2928 = vmax.f32 %v2672, 0.0
  %v2929 = vmax.f32 %v2673, 0.0
  %v2930 = vmax.f32 %v2674, 0.0
  %v2931 = vmax.f32 %v2675, 0.0
  %v2932 = vmax.f32 %v2676, 0.0
  %v2933 = vmax.f32 %v2677, 0.0
  %v2934 = vmax.f32 %v2678, 0.0
  %v2935 = vmax.f32 %v2679, 0.0
  %v2936 = vmax.f32 %v2680, 0.0
  %v2937 = vmax.f32 %v2681, 0.0
  %v2938 = vmax.f32 %v2682, 0.0
  %v2939 = vmax.f32 %v2683, 0.0
  %v2940 = vmax.f32 %v2684, 0.0
  %v2941 = vmax.f32 %v2685, 0.0
  %v2942 = vmax.f32 %v2686, 0.0
  %v2943 = vmax.f32 %v2687, 0.0
  %v2944 = vmax.f32 %v2688, 0.0
  %v2945 = vmax.f32 %v2689, 0.0
  %v2946 = vmax.f32 %v2690, 0.0
  %v2947 = vmax.f32 %v2691, 0.0
  %2948 = vst [vmem:[%s4] sm:$0xff] %v2692
  %2949 = vst [vmem:[%s4 + $0x8] sm:$0xff] %v2693
  %2950 = vst [vmem:[%s4 + $0x10] sm:$0xff] %v2694
  %2951 = vst [vmem:[%s4 + $0x18] sm:$0xff] %v2695
  %2952 = vst [vmem:[%s4 + $0x20] sm:$0xff] %v2696
  %2953 = vst [vmem:[%s4 + $0x28] sm:$0xff] %v2697
  %2954 = vst [vmem:[%s4 + $0x30] sm:$0xff] %v2698
  %2955 = vst [vmem:[%s4 + $0x38] sm:$0xff] %v2699
  %2956 = vst [vmem:[%s4 + $0x40] sm:$0xff] %v2700
  %2957 = vst [vmem:[%s4 + $0x48] sm:$0xff] %v2701
  %2958 = vst [vmem:[%s4 + $0x50] sm:$0xff] %v2702
  %2959 = vst [vmem:[%s4 + $0x58] sm:$0xff] %v2703
  %2960 = vst [vmem:[%s4 + $0x60] sm:$0xff] %v2704
  %2961 = vst [vmem:[%s4 + $0x68] sm:$0xff] %v2705
  %2962 = vst [vmem:[%s4 + $0x70] sm:$0xff] %v2706
  %2963 = vst [vmem:[%s4 + $0x78] sm:$0xff] %v2707
  %2964 = vst [vmem:[%s4 + $0x80] sm:$0xff] %v2708
  %2965 = vst [vmem:[%s4 + $0x88] sm:$0xff] %v2709
  %2966 = vst [vmem:[%s4 + $0x90] sm:$0xff] %v2710
  %2967 = vst [vmem:[%s4 + $0x98] sm:$0xff] %v2711
  %2968 = vst [vmem:[%s4 + $0xa0] sm:$0xff] %v2712
  %2969 = vst [vmem:[%s4 + $0xa8] sm:$0xff] %v2713
  %2970 = vst [vmem:[%s4 + $0xb0] sm:$0xff] %v2714
  %2971 = vst [vmem:[%s4 + $0xb8] sm:$0xff] %v2715
  %2972 = vst [vmem:[%s4 + $0xc0] sm:$0xff] %v2716
  %2973 = vst [vmem:[%s4 + $0xc8] sm:$0xff] %v2717
  %2974 = vst [vmem:[%s4 + $0xd0] sm:$0xff] %v2718
  %2975 = vst [vmem:[%s4 + $0xd8] sm:$0xff] %v2719
  %2976 = vst [vmem:[%s4 + $0xe0] sm:$0xff] %v2720
  %2977 = vst [vmem:[%s4 + $0xe8] sm:$0xff] %v2721
  %2978 = vst [vmem:[%s4 + $0xf0] sm:$0xff] %v2722
  %2979 = vst [vmem:[%s4 + $0xf8] sm:$0xff] %v2723
  %2980 = vst [vmem:[%s4 + $0x100] sm:$0xff] %v2724
  %2981 = vst [vmem:[%s4 + $0x108] sm:$0xff] %v2725
  %2982 = vst [vmem:[%s4 + $0x110] sm:$0xff] %v2726
  %2983 = vst [vmem:[%s4 + $0x118] sm:$0xff] %v2727
  %2984 = vst [vmem:[%s4 + $0x120] sm:$0xff] %v2728
  %2985 = vst [vmem:[%s4 + $0x128] sm:$0xff] %v2729
  %2986 = vst [vmem:[%s4 + $0x130] sm:$0xff] %v2730
  %2987 = vst [vmem:[%s4 + $0x138] sm:$0xff] %v2731
  %2988 = vst [vmem:[%s4 + $0x140] sm:$0xff] %v2732
  %2989 = vst [vmem:[%s4 + $0x148] sm:$0xff] %v2733
  %2990 = vst [vmem:[%s4 + $0x150] sm:$0xff] %v2734
  %2991 = vst [vmem:[%s4 + $0x158] sm:$0xff] %v2735
  %2992 = vst [vmem:[%s4 + $0x160] sm:$0xff] %v2736
  %2993 = vst [vmem:[%s4 + $0x168] sm:$0xff] %v2737
  %2994 = vst [vmem:[%s4 + $0x170] sm:$0xff] %v2738
  %2995 = vst [vmem:[%s4 + $0x178] sm:$0xff] %v2739
  %2996 = vst [vmem:[%s4 + $0x180] sm:$0xff] %v2740
  %2997 = vst [vmem:[%s4 + $0x188] sm:$0xff] %v2741
  %2998 = vst [vmem:[%s4 + $0x190] sm:$0xff] %v2742
  %2999 = vst [vmem:[%s4 + $0x198] sm:$0xff] %v2743
  %3000 = vst [vmem:[%s4 + $0x1a0] sm:$0xff] %v2744
  %3001 = vst [vmem:[%s4 + $0x1a8] sm:$0xff] %v2745
  %3002 = vst [vmem:[%s4 + $0x1b0] sm:$0xff] %v2746
  %3003 = vst [vmem:[%s4 + $0x1b8] sm:$0xff] %v2747
  %3004 = vst [vmem:[%s4 + $0x1c0] sm:$0xff] %v2748
  %3005 = vst [vmem:[%s4 + $0x1c8] sm:$0xff] %v2749
  %3006 = vst [vmem:[%s4 + $0x1d0] sm:$0xff] %v2750
  %3007 = vst [vmem:[%s4 + $0x1d8] sm:$0xff] %v2751
  %3008 = vst [vmem:[%s4 + $0x1e0] sm:$0xff] %v2752
  %3009 = vst [vmem:[%s4 + $0x1e8] sm:$0xff] %v2753
  %3010 = vst [vmem:[%s4 + $0x1f0] sm:$0xff] %v2754
  %3011 = vst [vmem:[%s4 + $0x1f8] sm:$0xff] %v2755
  %3012 = vst [vmem:[%s4 + $0x200] sm:$0xff] %v2756
  %3013 = vst [vmem:[%s4 + $0x208] sm:$0xff] %v2757
  %3014 = vst [vmem:[%s4 + $0x210] sm:$0xff] %v2758
  %3015 = vst [vmem:[%s4 + $0x218] sm:$0xff] %v2759
  %3016 = vst [vmem:[%s4 + $0x220] sm:$0xff] %v2760
  %3017 = vst [vmem:[%s4 + $0x228] sm:$0xff] %v2761
  %3018 = vst [vmem:[%s4 + $0x230] sm:$0xff] %v2762
  %3019 = vst [vmem:[%s4 + $0x238] sm:$0xff] %v2763
  %3020 = vst [vmem:[%s4 + $0x240] sm:$0xff] %v2764
  %3021 = vst [vmem:[%s4 + $0x248] sm:$0xff] %v2765
  %3022 = vst [vmem:[%s4 + $0x250] sm:$0xff] %v2766
  %3023 = vst [vmem:[%s4 + $0x258] sm:$0xff] %v2767
  %3024 = vst [vmem:[%s4 + $0x260] sm:$0xff] %v2768
  %3025 = vst [vmem:[%s4 + $0x268] sm:$0xff] %v2769
  %3026 = vst [vmem:[%s4 + $0x270] sm:$0xff] %v2770
  %3027 = vst [vmem:[%s4 + $0x278] sm:$0xff] %v2771
  %3028 = vst [vmem:[%s4 + $0x280] sm:$0xff] %v2772
  %3029 = vst [vmem:[%s4 + $0x288] sm:$0xff] %v2773
  %3030 = vst [vmem:[%s4 + $0x290] sm:$0xff] %v2774
  %3031 = vst [vmem:[%s4 + $0x298] sm:$0xff] %v2775
  %3032 = vst [vmem:[%s4 + $0x2a0] sm:$0xff] %v2776
  %3033 = vst [vmem:[%s4 + $0x2a8] sm:$0xff] %v2777
  %3034 = vst [vmem:[%s4 + $0x2b0] sm:$0xff] %v2778
  %3035 = vst [vmem:[%s4 + $0x2b8] sm:$0xff] %v2779
  %3036 = vst [vmem:[%s4 + $0x2c0] sm:$0xff] %v2780
  %3037 = vst [vmem:[%s4 + $0x2c8] sm:$0xff] %v2781
  %3038 = vst [vmem:[%s4 + $0x2d0] sm:$0xff] %v2782
  %3039 = vst [vmem:[%s4 + $0x2d8] sm:$0xff] %v2783
  %3040 = vst [vmem:[%s4 + $0x2e0] sm:$0xff] %v2784
  %3041 = vst [vmem:[%s4 + $0x2e8] sm:$0xff] %v2785
  %3042 = vst [vmem:[%s4 + $0x2f0] sm:$0xff] %v2786
  %3043 = vst [vmem:[%s4 + $0x2f8] sm:$0xff] %v2787
  %3044 = vst [vmem:[%s4 + $0x300] sm:$0xff] %v2788
  %3045 = vst [vmem:[%s4 + $0x308] sm:$0xff] %v2789
  %3046 = vst [vmem:[%s4 + $0x310] sm:$0xff] %v2790
  %3047 = vst [vmem:[%s4 + $0x318] sm:$0xff] %v2791
  %3048 = vst [vmem:[%s4 + $0x320] sm:$0xff] %v2792
  %3049 = vst [vmem:[%s4 + $0x328] sm:$0xff] %v2793
  %3050 = vst [vmem:[%s4 + $0x330] sm:$0xff] %v2794
  %3051 = vst [vmem:[%s4 + $0x338] sm:$0xff] %v2795
  %3052 = vst [vmem:[%s4 + $0x340] sm:$0xff] %v2796
  %3053 = vst [vmem:[%s4 + $0x348] sm:$0xff] %v2797
  %3054 = vst [vmem:[%s4 + $0x350] sm:$0xff] %v2798
  %3055 = vst [vmem:[%s4 + $0x358] sm:$0xff] %v2799
  %3056 = vst [vmem:[%s4 + $0x360] sm:$0xff] %v2800
  %3057 = vst [vmem:[%s4 + $0x368] sm:$0xff] %v2801
  %3058 = vst [vmem:[%s4 + $0x370] sm:$0xff] %v2802
  %3059 = vst [vmem:[%s4 + $0x378] sm:$0xff] %v2803
  %3060 = vst [vmem:[%s4 + $0x380] sm:$0xff] %v2804
  %3061 = vst [vmem:[%s4 + $0x388] sm:$0xff] %v2805
  %3062 = vst [vmem:[%s4 + $0x390] sm:$0xff] %v2806
  %3063 = vst [vmem:[%s4 + $0x398] sm:$0xff] %v2807
  %3064 = vst [vmem:[%s4 + $0x3a0] sm:$0xff] %v2808
  %3065 = vst [vmem:[%s4 + $0x3a8] sm:$0xff] %v2809
  %3066 = vst [vmem:[%s4 + $0x3b0] sm:$0xff] %v2810
  %3067 = vst [vmem:[%s4 + $0x3b8] sm:$0xff] %v2811
  %3068 = vst [vmem:[%s4 + $0x3c0] sm:$0xff] %v2812
  %3069 = vst [vmem:[%s4 + $0x3c8] sm:$0xff] %v2813
  %3070 = vst [vmem:[%s4 + $0x3d0] sm:$0xff] %v2814
  %3071 = vst [vmem:[%s4 + $0x3d8] sm:$0xff] %v2815
  %3072 = vst [vmem:[%s4 + $0x3e0] sm:$0xff] %v2816
  %3073 = vst [vmem:[%s4 + $0x3e8] sm:$0xff] %v2817
  %3074 = vst [vmem:[%s4 + $0x3f0] sm:$0xff] %v2818
  %3075 = vst [vmem:[%s4 + $0x3f8] sm:$0xff] %v2819
  %3076 = vst [vmem:[%s4 + $0x400] sm:$0xff] %v2820
  %3077 = vst [vmem:[%s4 + $0x408] sm:$0xff] %v2821
  %3078 = vst [vmem:[%s4 + $0x410] sm:$0xff] %v2822
  %3079 = vst [vmem:[%s4 + $0x418] sm:$0xff] %v2823
  %3080 = vst [vmem:[%s4 + $0x420] sm:$0xff] %v2824
  %3081 = vst [vmem:[%s4 + $0x428] sm:$0xff] %v2825
  %3082 = vst [vmem:[%s4 + $0x430] sm:$0xff] %v2826
  %3083 = vst [vmem:[%s4 + $0x438] sm:$0xff] %v2827
  %3084 = vst [vmem:[%s4 + $0x440] sm:$0xff] %v2828
  %3085 = vst [vmem:[%s4 + $0x448] sm:$0xff] %v2829
  %3086 = vst [vmem:[%s4 + $0x450] sm:$0xff] %v2830
  %3087 = vst [vmem:[%s4 + $0x458] sm:$0xff] %v2831
  %3088 = vst [vmem:[%s4 + $0x460] sm:$0xff] %v2832
  %3089 = vst [vmem:[%s4 + $0x468] sm:$0xff] %v2833
  %3090 = vst [vmem:[%s4 + $0x470] sm:$0xff] %v2834
  %3091 = vst [vmem:[%s4 + $0x478] sm:$0xff] %v2835
  %3092 = vst [vmem:[%s4 + $0x480] sm:$0xff] %v2836
  %3093 = vst [vmem:[%s4 + $0x488] sm:$0xff] %v2837
  %3094 = vst [vmem:[%s4 + $0x490] sm:$0xff] %v2838
  %3095 = vst [vmem:[%s4 + $0x498] sm:$0xff] %v2839
  %3096 = vst [vmem:[%s4 + $0x4a0] sm:$0xff] %v2840
  %3097 = vst [vmem:[%s4 + $0x4a8] sm:$0xff] %v2841
  %3098 = vst [vmem:[%s4 + $0x4b0] sm:$0xff] %v2842
  %3099 = vst [vmem:[%s4 + $0x4b8] sm:$0xff] %v2843
  %3100 = vst [vmem:[%s4 + $0x4c0] sm:$0xff] %v2844
  %3101 = vst [vmem:[%s4 + $0x4c8] sm:$0xff] %v2845
  %3102 = vst [vmem:[%s4 + $0x4d0] sm:$0xff] %v2846
  %3103 = vst [vmem:[%s4 + $0x4d8] sm:$0xff] %v2847
  %3104 = vst [vmem:[%s4 + $0x4e0] sm:$0xff] %v2848
  %3105 = vst [vmem:[%s4 + $0x4e8] sm:$0xff] %v2849
  %3106 = vst [vmem:[%s4 + $0x4f0] sm:$0xff] %v2850
  %3107 = vst [vmem:[%s4 + $0x4f8] sm:$0xff] %v2851
  %3108 = vst [vmem:[%s4 + $0x500] sm:$0xff] %v2852
  %3109 = vst [vmem:[%s4 + $0x508] sm:$0xff] %v2853
  %3110 = vst [vmem:[%s4 + $0x510] sm:$0xff] %v2854
  %3111 = vst [vmem:[%s4 + $0x518] sm:$0xff] %v2855
  %3112 = vst [vmem:[%s4 + $0x520] sm:$0xff] %v2856
  %3113 = vst [vmem:[%s4 + $0x528] sm:$0xff] %v2857
  %3114 = vst [vmem:[%s4 + $0x530] sm:$0xff] %v2858
  %3115 = vst [vmem:[%s4 + $0x538] sm:$0xff] %v2859
  %3116 = vst [vmem:[%s4 + $0x540] sm:$0xff] %v2860
  %3117 = vst [vmem:[%s4 + $0x548] sm:$0xff] %v2861
  %3118 = vst [vmem:[%s4 + $0x550] sm:$0xff] %v2862
  %3119 = vst [vmem:[%s4 + $0x558] sm:$0xff] %v2863
  %3120 = vst [vmem:[%s4 + $0x560] sm:$0xff] %v2864
  %3121 = vst [vmem:[%s4 + $0x568] sm:$0xff] %v2865
  %3122 = vst [vmem:[%s4 + $0x570] sm:$0xff] %v2866
  %3123 = vst [vmem:[%s4 + $0x578] sm:$0xff] %v2867
  %3124 = vst [vmem:[%s4 + $0x580] sm:$0xff] %v2868
  %3125 = vst [vmem:[%s4 + $0x588] sm:$0xff] %v2869
  %3126 = vst [vmem:[%s4 + $0x590] sm:$0xff] %v2870
  %3127 = vst [vmem:[%s4 + $0x598] sm:$0xff] %v2871
  %3128 = vst [vmem:[%s4 + $0x5a0] sm:$0xff] %v2872
  %3129 = vst [vmem:[%s4 + $0x5a8] sm:$0xff] %v2873
  %3130 = vst [vmem:[%s4 + $0x5b0] sm:$0xff] %v2874
  %3131 = vst [vmem:[%s4 + $0x5b8] sm:$0xff] %v2875
  %3132 = vst [vmem:[%s4 + $0x5c0] sm:$0xff] %v2876
  %3133 = vst [vmem:[%s4 + $0x5c8] sm:$0xff] %v2877
  %3134 = vst [vmem:[%s4 + $0x5d0] sm:$0xff] %v2878
  %3135 = vst [vmem:[%s4 + $0x5d8] sm:$0xff] %v2879
  %3136 = vst [vmem:[%s4 + $0x5e0] sm:$0xff] %v2880
  %3137 = vst [vmem:[%s4 + $0x5e8] sm:$0xff] %v2881
  %3138 = vst [vmem:[%s4 + $0x5f0] sm:$0xff] %v2882
  %3139 = vst [vmem:[%s4 + $0x5f8] sm:$0xff] %v2883
  %3140 = vst [vmem:[%s4 + $0x600] sm:$0xff] %v2884
  %3141 = vst [vmem:[%s4 + $0x608] sm:$0xff] %v2885
  %3142 = vst [vmem:[%s4 + $0x610] sm:$0xff] %v2886
  %3143 = vst [vmem:[%s4 + $0x618] sm:$0xff] %v2887
  %3144 = vst [vmem:[%s4 + $0x620] sm:$0xff] %v2888
  %3145 = vst [vmem:[%s4 + $0x628] sm:$0xff] %v2889
  %3146 = vst [vmem:[%s4 + $0x630] sm:$0xff] %v2890
  %3147 = vst [vmem:[%s4 + $0x638] sm:$0xff] %v2891
  %3148 = vst [vmem:[%s4 + $0x640] sm:$0xff] %v2892
  %3149 = vst [vmem:[%s4 + $0x648] sm:$0xff] %v2893
  %3150 = vst [vmem:[%s4 + $0x650] sm:$0xff] %v2894
  %3151 = vst [vmem:[%s4 + $0x658] sm:$0xff] %v2895
  %3152 = vst [vmem:[%s4 + $0x660] sm:$0xff] %v2896
  %3153 = vst [vmem:[%s4 + $0x668] sm:$0xff] %v2897
  %3154 = vst [vmem:[%s4 + $0x670] sm:$0xff] %v2898
  %3155 = vst [vmem:[%s4 + $0x678] sm:$0xff] %v2899
  %3156 = vst [vmem:[%s4 + $0x680] sm:$0xff] %v2900
  %3157 = vst [vmem:[%s4 + $0x688] sm:$0xff] %v2901
  %3158 = vst [vmem:[%s4 + $0x690] sm:$0xff] %v2902
  %3159 = vst [vmem:[%s4 + $0x698] sm:$0xff] %v2903
  %3160 = vst [vmem:[%s4 + $0x6a0] sm:$0xff] %v2904
  %3161 = vst [vmem:[%s4 + $0x6a8] sm:$0xff] %v2905
  %3162 = vst [vmem:[%s4 + $0x6b0] sm:$0xff] %v2906
  %3163 = vst [vmem:[%s4 + $0x6b8] sm:$0xff] %v2907
  %3164 = vst [vmem:[%s4 + $0x6c0] sm:$0xff] %v2908
  %3165 = vst [vmem:[%s4 + $0x6c8] sm:$0xff] %v2909
  %3166 = vst [vmem:[%s4 + $0x6d0] sm:$0xff] %v2910
  %3167 = vst [vmem:[%s4 + $0x6d8] sm:$0xff] %v2911
  %3168 = vst [vmem:[%s4 + $0x6e0] sm:$0xff] %v2912
  %3169 = vst [vmem:[%s4 + $0x6e8] sm:$0xff] %v2913
  %3170 = vst [vmem:[%s4 + $0x6f0] sm:$0xff] %v2914
  %3171 = vst [vmem:[%s4 + $0x6f8] sm:$0xff] %v2915
  %3172 = vst [vmem:[%s4 + $0x700] sm:$0xff] %v2916
  %3173 = vst [vmem:[%s4 + $0x708] sm:$0xff] %v2917
  %3174 = vst [vmem:[%s4 + $0x710] sm:$0xff] %v2918
  %3175 = vst [vmem:[%s4 + $0x718] sm:$0xff] %v2919
  %3176 = vst [vmem:[%s4 + $0x720] sm:$0xff] %v2920
  %3177 = vst [vmem:[%s4 + $0x728] sm:$0xff] %v2921
  %3178 = vst [vmem:[%s4 + $0x730] sm:$0xff] %v2922
  %3179 = vst [vmem:[%s4 + $0x738] sm:$0xff] %v2923
  %3180 = vst [vmem:[%s4 + $0x740] sm:$0xff] %v2924
  %3181 = vst [vmem:[%s4 + $0x748] sm:$0xff] %v2925
  %3182 = vst [vmem:[%s4 + $0x750] sm:$0xff] %v2926
  %3183 = vst [vmem:[%s4 + $0x758] sm:$0xff] %v2927
  %3184 = vst [vmem:[%s4 + $0x760] sm:$0xff] %v2928
  %3185 = vst [vmem:[%s4 + $0x768] sm:$0xff] %v2929
  %3186 = vst [vmem:[%s4 + $0x770] sm:$0xff] %v2930
  %3187 = vst [vmem:[%s4 + $0x778] sm:$0xff] %v2931
  %3188 = vst [vmem:[%s4 + $0x780] sm:$0xff] %v2932
  %3189 = vst [vmem:[%s4 + $0x788] sm:$0xff] %v2933
  %3190 = vst [vmem:[%s4 + $0x790] sm:$0xff] %v2934
  %3191 = vst [vmem:[%s4 + $0x798] sm:$0xff] %v2935
  %3192 = vst [vmem:[%s4 + $0x7a0] sm:$0xff] %v2936
  %3193 = vst [vmem:[%s4 + $0x7a8] sm:$0xff] %v2937
  %3194 = vst [vmem:[%s4 + $0x7b0] sm:$0xff] %v2938
  %3195 = vst [vmem:[%s4 + $0x7b8] sm:$0xff] %v2939
  %3196 = vst [vmem:[%s4 + $0x7c0] sm:$0xff] %v2940
  %3197 = vst [vmem:[%s4 + $0x7c8] sm:$0xff] %v2941
  %3198 = vst [vmem:[%s4 + $0x7d0] sm:$0xff] %v2942
  %3199 = vst [vmem:[%s4 + $0x7d8] sm:$0xff] %v2943
  %3200 = vst [vmem:[%s4 + $0x7e0] sm:$0xff] %v2944
  %3201 = vst [vmem:[%s4 + $0x7e8] sm:$0xff] %v2945
  %3202 = vst [vmem:[%s4 + $0x7f0] sm:$0xff] %v2946
  %3203 = vst [vmem:[%s4 + $0x7f8] sm:$0xff] %v2947
  // Predicated region
  $region18: #{proto_igcn_forward.11} parent=0 // pred_check
    _
  $region19: #{proto_igcn_forward.11} parent=0 // pred_check_branch
    %3205 = sbr.rel (0) target = $region21
  $region20: #{proto_igcn_forward.11} parent=0 // pred_region
    _
  $region21: #{proto_igcn_forward.11} parent=0 // pred_fallthru
    _
  // Predicated region
  $region22: #{proto_igcn_forward.11} parent=0 // pred_check
    _
  $region23: #{proto_igcn_forward.11} parent=0 // pred_check_branch
    %3207 = sbr.rel (0) target = $region25
  $region24: #{proto_igcn_forward.11} parent=0 // pred_region
    _
  $region25: #{proto_igcn_forward.11} parent=0 // pred_fallthru
    _

</llo_original>
